<compile_context>
chip_gen: v6e
topology: v6e:2x2x1
jax: 0.10.0
libtpu: 0.0.40
codegen_flags: <defaults>
</compile_context>

<pallas_src>
import functools

import jax
import jax.numpy as jnp
from jax.experimental import pallas as pl
from jax.experimental.pallas import tpu as pltpu


# ----------------------------- pooling plan ---------------------------------

def _pool_plan(kernel_sizes):
    """Express the SPP pools as a cascade of small stride-1 'same' max pools.

    pool_a followed by pool_b (stride 1, pad k//2, -inf padding) == pool_{a+b-1},
    so (5, 9, 13) == apply k=5 three times cumulatively (SPPF identity).
    Returns (plan, cascade). If cascade, plan[i] is applied to the previous stage's
    output; otherwise plan[i] == kernel_sizes[i] is applied directly to y.
    """
    plan = []
    prev = 1
    for k in kernel_sizes:
        ka = k - prev + 1
        if ka < 1 or ka % 2 == 0:
            return list(kernel_sizes), False
        plan.append(ka)
        prev = k
    return plan, True


# ------------------------------ fused kernel --------------------------------

def _make_spp_kernel(H, W, cin, mid, cout, plan, cascade, pmax):
    Hp, Wp = H + 2 * pmax, W + 2 * pmax

    def kernel(x_ref, w1_ref, b1_ref, w2_ref, b2_ref, o_ref, pad_ref):
        # ---- conv1: 1x1 conv as matmul over the pixels of this image --------
        x2d = x_ref[0].reshape(H * W, cin)                    # (H*W, Cin)
        y2d = (
            jnp.dot(x2d, w1_ref[...], preferred_element_type=jnp.float32)
            + b1_ref[...]
        )                                                     # (H*W, mid)

        # ---- conv2 partial sum: identity (un-pooled) branch -----------------
        acc = jnp.dot(y2d, w2_ref[0], preferred_element_type=jnp.float32)

        # -inf halo for 'same' max pooling. Only the border strips need filling:
        # the interior is stored before every read. Refilled each grid step so the
        # kernel is correct under megacore grid sharding (per-core scratch copies).
        if pmax > 0:
            neg = jnp.float32(-jnp.inf)
            pad_ref[0:pmax, :, :] = jnp.full((pmax, Wp, mid), neg, jnp.float32)
            pad_ref[pmax + H:Hp, :, :] = jnp.full((pmax, Wp, mid), neg, jnp.float32)
            pad_ref[:, 0:pmax, :] = jnp.full((Hp, pmax, mid), neg, jnp.float32)
            pad_ref[:, pmax + W:Wp, :] = jnp.full((Hp, pmax, mid), neg, jnp.float32)

        y3d = y2d.reshape(H, W, mid)
        cur = y3d
        for i, k in enumerate(plan):
            p = k // 2
            src = cur if cascade else y3d
            pad_ref[pmax:pmax + H, pmax:pmax + W, :] = src

            # Separable k x k max: row pass from ref-offset slices (leading-dim
            # addressing, no data shuffles), column pass with <= p sublane shifts.
            rowm = pad_ref[pmax - p:pmax - p + H, :, :]
            for dy in range(pmax - p + 1, pmax + p + 1):
                rowm = jnp.maximum(rowm, pad_ref[dy:dy + H, :, :])

            pooled = rowm[:, pmax - p:pmax - p + W, :]
            for dx in range(pmax - p + 1, pmax + p + 1):
                pooled = jnp.maximum(pooled, rowm[:, dx:dx + W, :])

            # conv2 partial sum for this pyramid level (no concat ever built).
            acc = acc + jnp.dot(
                pooled.reshape(H * W, mid),
                w2_ref[i + 1],
                preferred_element_type=jnp.float32,
            )
            cur = pooled

        out = acc + b2_ref[...]                               # (H*W, Cout)
        o_ref[0] = out.reshape(H, W, cout)

    return kernel


# ------------------------------ SPP forward ---------------------------------

def init_spp_params(key, in_channels, out_channels, num_pools=3):
    mid = in_channels // 2
    k1, k2, k3, k4 = jax.random.split(key, 4)
    # conv1 weight as (Cin, mid); conv2 weight stored as stacked per-branch slabs
    # (num_pools+1, mid, Cout) == the channel-blocks of the PyTorch (Cout, 4*mid) kernel.
    return {
        "w1": jax.random.normal(k1, (in_channels, mid), jnp.float32) * 0.1,
        "b1": jax.random.normal(k2, (mid,), jnp.float32) * 0.1,
        "w2": jax.random.normal(k3, (num_pools + 1, mid, out_channels), jnp.float32) * 0.1,
        "b2": jax.random.normal(k4, (out_channels,), jnp.float32) * 0.1,
    }


@functools.partial(jax.jit, static_argnames=("kernel_sizes",))
def spp_forward(x_nchw, params, kernel_sizes=(5, 9, 13)):
    assert all(k % 2 == 1 for k in kernel_sizes), "SPP expects odd kernel sizes"
    N, cin, H, W = x_nchw.shape
    mid = params["w1"].shape[1]
    cout = params["w2"].shape[2]

    plan, cascade = _pool_plan(kernel_sizes)
    pmax = max(plan) // 2
    n_branch = len(plan) + 1

    # NCHW -> NHWC so channels sit on the lane axis inside the kernel.
    x = jnp.transpose(x_nchw, (0, 2, 3, 1)).astype(jnp.float32)

    kernel = _make_spp_kernel(H, W, cin, mid, cout, tuple(plan), cascade, pmax)

    grid_spec = pltpu.PrefetchScalarGridSpec(
        num_scalar_prefetch=0,
        grid=(N,),
        in_specs=[
            pl.BlockSpec((1, H, W, cin), lambda b: (b, 0, 0, 0)),        # x tile
            pl.BlockSpec((cin, mid), lambda b: (0, 0)),                  # w1 (resident)
            pl.BlockSpec((1, mid), lambda b: (0, 0)),                    # b1
            pl.BlockSpec((n_branch, mid, cout), lambda b: (0, 0, 0)),    # w2 slabs
            pl.BlockSpec((1, cout), lambda b: (0, 0)),                   # b2
        ],
        out_specs=pl.BlockSpec((1, H, W, cout), lambda b: (b, 0, 0, 0)),
        scratch_shapes=[
            pltpu.VMEM((H + 2 * pmax, W + 2 * pmax, mid), jnp.float32),  # -inf-haloed tile
        ],
    )

    out_nhwc = pl.pallas_call(
        kernel,
        out_shape=jax.ShapeDtypeStruct((N, H, W, cout), jnp.float32),
        grid_spec=grid_spec,
        compiler_params=pltpu.CompilerParams(
            dimension_semantics=("parallel",),          # batch split across TCs (v7x)
            vmem_limit_bytes=32 * 1024 * 1024,          # safe on v5e/v6e/v7x
        ),
    )(x, params["w1"], params["b1"].reshape(1, mid),
      params["w2"], params["b2"].reshape(1, cout))

    return jnp.transpose(out_nhwc, (0, 3, 1, 2))        # back to NCHW
    # TODO(synk): for very large H*W (SPP normally runs at small stride-32 maps) the
    # per-image tile could additionally be split over rows with a (k-1)//2 halo.


# ---------------------------- pure-JAX reference -----------------------------

def spp_reference(x_nchw, params, kernel_sizes=(5, 9, 13)):
    x = jnp.transpose(x_nchw, (0, 2, 3, 1)).astype(jnp.float32)
    y = jnp.einsum("nhwc,cm->nhwm", x, params["w1"]) + params["b1"]
    feats = [y]
    for k in kernel_sizes:
        p = k // 2
        yp = jnp.pad(y, ((0, 0), (p, p), (p, p), (0, 0)), constant_values=-jnp.inf)
        pooled = jax.lax.reduce_window(
            yp, -jnp.inf, jax.lax.max, (1, k, k, 1), (1, 1, 1, 1), "VALID"
        )
        feats.append(pooled)
    acc = sum(
        jnp.einsum("nhwm,mo->nhwo", f, params["w2"][i]) for i, f in enumerate(feats)
    )
    out = acc + params["b2"]
    return jnp.transpose(out, (0, 3, 1, 2))


# --------------------------------- main --------------------------------------

if __name__ == "__main__":
    key = jax.random.PRNGKey(0)
    kx, kp = jax.random.split(key)

    N, C_in, H, W = 2, 4, 16, 16
    C_out = 8

    x = jax.random.normal(kx, (N, C_in, H, W), jnp.float32)
    params = init_spp_params(kp, C_in, C_out)

    out = spp_forward(x, params)
    out = jax.block_until_ready(out)

    assert out.shape == (N, C_out, H, W), out.shape
    assert bool(jnp.all(jnp.isfinite(out))), "non-finite output"

    ref = jax.block_until_ready(spp_reference(x, params))
    assert bool(jnp.allclose(out, ref, atol=2e-3, rtol=2e-3)), (
        float(jnp.max(jnp.abs(out - ref)))
    )

    print("KERNEL_OK")
</pallas_src>

<mosaic_0001>
module attributes {stable_mosaic.version = 11 : i64} {
  func.func @kernel(%arg0: i32, %arg1: memref<1x16x16x4xf32, #tpu.memory_space<vmem>>, %arg2: memref<4x2xf32, #tpu.memory_space<vmem>>, %arg3: memref<1x2xf32, #tpu.memory_space<vmem>>, %arg4: memref<4x2x8xf32, #tpu.memory_space<vmem>>, %arg5: memref<1x8xf32, #tpu.memory_space<vmem>>, %arg6: memref<1x16x16x8xf32, #tpu.memory_space<vmem>>, %arg7: memref<20x20x2xf32, #tpu.memory_space<vmem>>) attributes {dimension_semantics = [#tpu.dimension_semantics<parallel>], iteration_bounds = array<i64: 2>, scalar_prefetch = 0 : i64, scratch_operands = 1 : i64, tpu.core_type = #tpu.core_type<tc>, window_params = [{transform_indices = @transform_0, window_bounds = array<i64: 1, 16, 16, 4>}, {pipeline_mode = #tpu.pipeline_mode<synchronous>, transform_indices = @transform_1, window_bounds = array<i64: 4, 2>}, {pipeline_mode = #tpu.pipeline_mode<synchronous>, transform_indices = @transform_2, window_bounds = array<i64: 1, 2>}, {pipeline_mode = #tpu.pipeline_mode<synchronous>, transform_indices = @transform_3, window_bounds = array<i64: 4, 2, 8>}, {pipeline_mode = #tpu.pipeline_mode<synchronous>, transform_indices = @transform_4, window_bounds = array<i64: 1, 8>}, {transform_indices = @transform_5, window_bounds = array<i64: 1, 16, 16, 8>}]} {
    %c0 = arith.constant 0 : index
    %c0_0 = arith.constant 0 : index
    %c0_1 = arith.constant 0 : index
    %c0_2 = arith.constant 0 : index
    %0 = vector.load %arg1[%c0, %c0_0, %c0_1, %c0_2] : memref<1x16x16x4xf32, #tpu.memory_space<vmem>>, vector<1x16x16x4xf32>
    %1 = vector.shape_cast %0 : vector<1x16x16x4xf32> to vector<16x16x4xf32>
    %2 = vector.shape_cast %1 : vector<16x16x4xf32> to vector<256x4xf32>
    %c0_3 = arith.constant 0 : index
    %c0_4 = arith.constant 0 : index
    %3 = vector.load %arg2[%c0_3, %c0_4] : memref<4x2xf32, #tpu.memory_space<vmem>>, vector<4x2xf32>
    %cst = arith.constant dense<0.000000e+00> : vector<256x2xf32>
    %4 = tpu.matmul %2, %3, %cst {dimension_numbers = #tpu.dot_dimension_numbers<[1], [0], [0], [1], [0, 0, 1, 1], [], []>} : vector<256x4xf32>, vector<4x2xf32>, vector<256x2xf32> -> vector<256x2xf32>
    %c0_5 = arith.constant 0 : index
    %c0_6 = arith.constant 0 : index
    %5 = vector.load %arg3[%c0_5, %c0_6] : memref<1x2xf32, #tpu.memory_space<vmem>>, vector<1x2xf32>
    %6 = vector.broadcast %5 : vector<1x2xf32> to vector<256x2xf32>
    %7 = arith.addf %4, %6 : vector<256x2xf32>
    %c0_7 = arith.constant 0 : index
    %c0_8 = arith.constant 0 : index
    %c0_9 = arith.constant 0 : index
    %8 = vector.load %arg4[%c0_7, %c0_8, %c0_9] : memref<4x2x8xf32, #tpu.memory_space<vmem>>, vector<1x2x8xf32>
    %9 = vector.shape_cast %8 : vector<1x2x8xf32> to vector<2x8xf32>
    %cst_10 = arith.constant dense<0.000000e+00> : vector<256x8xf32>
    %10 = tpu.matmul %7, %9, %cst_10 {dimension_numbers = #tpu.dot_dimension_numbers<[1], [0], [0], [1], [0, 0, 1, 1], [], []>} : vector<256x2xf32>, vector<2x8xf32>, vector<256x8xf32> -> vector<256x8xf32>
    %cst_11 = arith.constant 0xFF800000 : f32
    %11 = vector.broadcast %cst_11 : f32 to vector<2x20x2xf32>
    %c0_12 = arith.constant 0 : index
    %c0_13 = arith.constant 0 : index
    %c0_14 = arith.constant 0 : index
    %12 = vector.load %arg7[%c0_12, %c0_13, %c0_14] : memref<20x20x2xf32, #tpu.memory_space<vmem>>, vector<2x20x2xf32>
    tpu.vector_store %arg7[%c0_12, %c0_13, %c0_14], %11 {strides = array<i32>} : memref<20x20x2xf32, #tpu.memory_space<vmem>>, vector<2x20x2xf32>,
    %cst_15 = arith.constant 0xFF800000 : f32
    %13 = vector.broadcast %cst_15 : f32 to vector<2x20x2xf32>
    %c18 = arith.constant 18 : index
    %c0_16 = arith.constant 0 : index
    %c0_17 = arith.constant 0 : index
    %14 = vector.load %arg7[%c18, %c0_16, %c0_17] : memref<20x20x2xf32, #tpu.memory_space<vmem>>, vector<2x20x2xf32>
    tpu.vector_store %arg7[%c18, %c0_16, %c0_17], %13 {strides = array<i32>} : memref<20x20x2xf32, #tpu.memory_space<vmem>>, vector<2x20x2xf32>,
    %cst_18 = arith.constant 0xFF800000 : f32
    %15 = vector.broadcast %cst_18 : f32 to vector<20x2x2xf32>
    %c0_19 = arith.constant 0 : index
    %c0_20 = arith.constant 0 : index
    %c0_21 = arith.constant 0 : index
    %16 = vector.load %arg7[%c0_19, %c0_20, %c0_21] : memref<20x20x2xf32, #tpu.memory_space<vmem>>, vector<20x2x2xf32>
    tpu.vector_store %arg7[%c0_19, %c0_20, %c0_21], %15 {strides = array<i32>} : memref<20x20x2xf32, #tpu.memory_space<vmem>>, vector<20x2x2xf32>,
    %cst_22 = arith.constant 0xFF800000 : f32
    %17 = vector.broadcast %cst_22 : f32 to vector<20x2x2xf32>
    %c0_23 = arith.constant 0 : index
    %c18_24 = arith.constant 18 : index
    %c0_25 = arith.constant 0 : index
    %18 = vector.load %arg7[%c0_23, %c18_24, %c0_25] : memref<20x20x2xf32, #tpu.memory_space<vmem>>, vector<20x2x2xf32>
    tpu.vector_store %arg7[%c0_23, %c18_24, %c0_25], %17 {strides = array<i32>} : memref<20x20x2xf32, #tpu.memory_space<vmem>>, vector<20x2x2xf32>,
    %19 = vector.shape_cast %7 : vector<256x2xf32> to vector<16x16x2xf32>
    %c2 = arith.constant 2 : index
    %c2_26 = arith.constant 2 : index
    %c0_27 = arith.constant 0 : index
    %20 = vector.load %arg7[%c2, %c2_26, %c0_27] : memref<20x20x2xf32, #tpu.memory_space<vmem>>, vector<16x16x2xf32>
    tpu.vector_store %arg7[%c2, %c2_26, %c0_27], %19 {strides = array<i32>} : memref<20x20x2xf32, #tpu.memory_space<vmem>>, vector<16x16x2xf32>,
    %c0_28 = arith.constant 0 : index
    %c0_29 = arith.constant 0 : index
    %c0_30 = arith.constant 0 : index
    %21 = vector.load %arg7[%c0_28, %c0_29, %c0_30] : memref<20x20x2xf32, #tpu.memory_space<vmem>>, vector<16x20x2xf32>
    %c1 = arith.constant 1 : index
    %c0_31 = arith.constant 0 : index
    %c0_32 = arith.constant 0 : index
    %22 = vector.load %arg7[%c1, %c0_31, %c0_32] : memref<20x20x2xf32, #tpu.memory_space<vmem>>, vector<16x20x2xf32>
    %23 = arith.maximumf %21, %22 : vector<16x20x2xf32>
    %c2_33 = arith.constant 2 : index
    %c0_34 = arith.constant 0 : index
    %c0_35 = arith.constant 0 : index
    %24 = vector.load %arg7[%c2_33, %c0_34, %c0_35] : memref<20x20x2xf32, #tpu.memory_space<vmem>>, vector<16x20x2xf32>
    %25 = arith.maximumf %23, %24 : vector<16x20x2xf32>
    %c3 = arith.constant 3 : index
    %c0_36 = arith.constant 0 : index
    %c0_37 = arith.constant 0 : index
    %26 = vector.load %arg7[%c3, %c0_36, %c0_37] : memref<20x20x2xf32, #tpu.memory_space<vmem>>, vector<16x20x2xf32>
    %27 = arith.maximumf %25, %26 : vector<16x20x2xf32>
    %c4 = arith.constant 4 : index
    %c0_38 = arith.constant 0 : index
    %c0_39 = arith.constant 0 : index
    %28 = vector.load %arg7[%c4, %c0_38, %c0_39] : memref<20x20x2xf32, #tpu.memory_space<vmem>>, vector<16x20x2xf32>
    %29 = arith.maximumf %27, %28 : vector<16x20x2xf32>
    %30 = vector.extract_strided_slice %29 {offsets = [0, 0, 0], sizes = [16, 16, 2], strides = [1, 1, 1]} : vector<16x20x2xf32> to vector<16x16x2xf32>
    %31 = vector.extract_strided_slice %29 {offsets = [0, 1, 0], sizes = [16, 16, 2], strides = [1, 1, 1]} : vector<16x20x2xf32> to vector<16x16x2xf32>
    %32 = arith.maximumf %30, %31 : vector<16x16x2xf32>
    %33 = vector.extract_strided_slice %29 {offsets = [0, 2, 0], sizes = [16, 16, 2], strides = [1, 1, 1]} : vector<16x20x2xf32> to vector<16x16x2xf32>
    %34 = arith.maximumf %32, %33 : vector<16x16x2xf32>
    %35 = vector.extract_strided_slice %29 {offsets = [0, 3, 0], sizes = [16, 16, 2], strides = [1, 1, 1]} : vector<16x20x2xf32> to vector<16x16x2xf32>
    %36 = arith.maximumf %34, %35 : vector<16x16x2xf32>
    %37 = vector.extract_strided_slice %29 {offsets = [0, 4, 0], sizes = [16, 16, 2], strides = [1, 1, 1]} : vector<16x20x2xf32> to vector<16x16x2xf32>
    %38 = arith.maximumf %36, %37 : vector<16x16x2xf32>
    %39 = vector.shape_cast %38 : vector<16x16x2xf32> to vector<256x2xf32>
    %c1_40 = arith.constant 1 : index
    %c0_41 = arith.constant 0 : index
    %c0_42 = arith.constant 0 : index
    %40 = vector.load %arg4[%c1_40, %c0_41, %c0_42] : memref<4x2x8xf32, #tpu.memory_space<vmem>>, vector<1x2x8xf32>
    %41 = vector.shape_cast %40 : vector<1x2x8xf32> to vector<2x8xf32>
    %cst_43 = arith.constant dense<0.000000e+00> : vector<256x8xf32>
    %42 = tpu.matmul %39, %41, %cst_43 {dimension_numbers = #tpu.dot_dimension_numbers<[1], [0], [0], [1], [0, 0, 1, 1], [], []>} : vector<256x2xf32>, vector<2x8xf32>, vector<256x8xf32> -> vector<256x8xf32>
    %43 = arith.addf %10, %42 : vector<256x8xf32>
    %c2_44 = arith.constant 2 : index
    %c2_45 = arith.constant 2 : index
    %c0_46 = arith.constant 0 : index
    %44 = vector.load %arg7[%c2_44, %c2_45, %c0_46] : memref<20x20x2xf32, #tpu.memory_space<vmem>>, vector<16x16x2xf32>
    tpu.vector_store %arg7[%c2_44, %c2_45, %c0_46], %38 {strides = array<i32>} : memref<20x20x2xf32, #tpu.memory_space<vmem>>, vector<16x16x2xf32>,
    %c0_47 = arith.constant 0 : index
    %c0_48 = arith.constant 0 : index
    %c0_49 = arith.constant 0 : index
    %45 = vector.load %arg7[%c0_47, %c0_48, %c0_49] : memref<20x20x2xf32, #tpu.memory_space<vmem>>, vector<16x20x2xf32>
    %c1_50 = arith.constant 1 : index
    %c0_51 = arith.constant 0 : index
    %c0_52 = arith.constant 0 : index
    %46 = vector.load %arg7[%c1_50, %c0_51, %c0_52] : memref<20x20x2xf32, #tpu.memory_space<vmem>>, vector<16x20x2xf32>
    %47 = arith.maximumf %45, %46 : vector<16x20x2xf32>
    %c2_53 = arith.constant 2 : index
    %c0_54 = arith.constant 0 : index
    %c0_55 = arith.constant 0 : index
    %48 = vector.load %arg7[%c2_53, %c0_54, %c0_55] : memref<20x20x2xf32, #tpu.memory_space<vmem>>, vector<16x20x2xf32>
    %49 = arith.maximumf %47, %48 : vector<16x20x2xf32>
    %c3_56 = arith.constant 3 : index
    %c0_57 = arith.constant 0 : index
    %c0_58 = arith.constant 0 : index
    %50 = vector.load %arg7[%c3_56, %c0_57, %c0_58] : memref<20x20x2xf32, #tpu.memory_space<vmem>>, vector<16x20x2xf32>
    %51 = arith.maximumf %49, %50 : vector<16x20x2xf32>
    %c4_59 = arith.constant 4 : index
    %c0_60 = arith.constant 0 : index
    %c0_61 = arith.constant 0 : index
    %52 = vector.load %arg7[%c4_59, %c0_60, %c0_61] : memref<20x20x2xf32, #tpu.memory_space<vmem>>, vector<16x20x2xf32>
    %53 = arith.maximumf %51, %52 : vector<16x20x2xf32>
    %54 = vector.extract_strided_slice %53 {offsets = [0, 0, 0], sizes = [16, 16, 2], strides = [1, 1, 1]} : vector<16x20x2xf32> to vector<16x16x2xf32>
    %55 = vector.extract_strided_slice %53 {offsets = [0, 1, 0], sizes = [16, 16, 2], strides = [1, 1, 1]} : vector<16x20x2xf32> to vector<16x16x2xf32>
    %56 = arith.maximumf %54, %55 : vector<16x16x2xf32>
    %57 = vector.extract_strided_slice %53 {offsets = [0, 2, 0], sizes = [16, 16, 2], strides = [1, 1, 1]} : vector<16x20x2xf32> to vector<16x16x2xf32>
    %58 = arith.maximumf %56, %57 : vector<16x16x2xf32>
    %59 = vector.extract_strided_slice %53 {offsets = [0, 3, 0], sizes = [16, 16, 2], strides = [1, 1, 1]} : vector<16x20x2xf32> to vector<16x16x2xf32>
    %60 = arith.maximumf %58, %59 : vector<16x16x2xf32>
    %61 = vector.extract_strided_slice %53 {offsets = [0, 4, 0], sizes = [16, 16, 2], strides = [1, 1, 1]} : vector<16x20x2xf32> to vector<16x16x2xf32>
    %62 = arith.maximumf %60, %61 : vector<16x16x2xf32>
    %63 = vector.shape_cast %62 : vector<16x16x2xf32> to vector<256x2xf32>
    %c2_62 = arith.constant 2 : index
    %c0_63 = arith.constant 0 : index
    %c0_64 = arith.constant 0 : index
    %64 = vector.load %arg4[%c2_62, %c0_63, %c0_64] : memref<4x2x8xf32, #tpu.memory_space<vmem>>, vector<1x2x8xf32>
    %65 = vector.shape_cast %64 : vector<1x2x8xf32> to vector<2x8xf32>
    %cst_65 = arith.constant dense<0.000000e+00> : vector<256x8xf32>
    %66 = tpu.matmul %63, %65, %cst_65 {dimension_numbers = #tpu.dot_dimension_numbers<[1], [0], [0], [1], [0, 0, 1, 1], [], []>} : vector<256x2xf32>, vector<2x8xf32>, vector<256x8xf32> -> vector<256x8xf32>
    %67 = arith.addf %43, %66 : vector<256x8xf32>
    %c2_66 = arith.constant 2 : index
    %c2_67 = arith.constant 2 : index
    %c0_68 = arith.constant 0 : index
    %68 = vector.load %arg7[%c2_66, %c2_67, %c0_68] : memref<20x20x2xf32, #tpu.memory_space<vmem>>, vector<16x16x2xf32>
    tpu.vector_store %arg7[%c2_66, %c2_67, %c0_68], %62 {strides = array<i32>} : memref<20x20x2xf32, #tpu.memory_space<vmem>>, vector<16x16x2xf32>,
    %c0_69 = arith.constant 0 : index
    %c0_70 = arith.constant 0 : index
    %c0_71 = arith.constant 0 : index
    %69 = vector.load %arg7[%c0_69, %c0_70, %c0_71] : memref<20x20x2xf32, #tpu.memory_space<vmem>>, vector<16x20x2xf32>
    %c1_72 = arith.constant 1 : index
    %c0_73 = arith.constant 0 : index
    %c0_74 = arith.constant 0 : index
    %70 = vector.load %arg7[%c1_72, %c0_73, %c0_74] : memref<20x20x2xf32, #tpu.memory_space<vmem>>, vector<16x20x2xf32>
    %71 = arith.maximumf %69, %70 : vector<16x20x2xf32>
    %c2_75 = arith.constant 2 : index
    %c0_76 = arith.constant 0 : index
    %c0_77 = arith.constant 0 : index
    %72 = vector.load %arg7[%c2_75, %c0_76, %c0_77] : memref<20x20x2xf32, #tpu.memory_space<vmem>>, vector<16x20x2xf32>
    %73 = arith.maximumf %71, %72 : vector<16x20x2xf32>
    %c3_78 = arith.constant 3 : index
    %c0_79 = arith.constant 0 : index
    %c0_80 = arith.constant 0 : index
    %74 = vector.load %arg7[%c3_78, %c0_79, %c0_80] : memref<20x20x2xf32, #tpu.memory_space<vmem>>, vector<16x20x2xf32>
    %75 = arith.maximumf %73, %74 : vector<16x20x2xf32>
    %c4_81 = arith.constant 4 : index
    %c0_82 = arith.constant 0 : index
    %c0_83 = arith.constant 0 : index
    %76 = vector.load %arg7[%c4_81, %c0_82, %c0_83] : memref<20x20x2xf32, #tpu.memory_space<vmem>>, vector<16x20x2xf32>
    %77 = arith.maximumf %75, %76 : vector<16x20x2xf32>
    %78 = vector.extract_strided_slice %77 {offsets = [0, 0, 0], sizes = [16, 16, 2], strides = [1, 1, 1]} : vector<16x20x2xf32> to vector<16x16x2xf32>
    %79 = vector.extract_strided_slice %77 {offsets = [0, 1, 0], sizes = [16, 16, 2], strides = [1, 1, 1]} : vector<16x20x2xf32> to vector<16x16x2xf32>
    %80 = arith.maximumf %78, %79 : vector<16x16x2xf32>
    %81 = vector.extract_strided_slice %77 {offsets = [0, 2, 0], sizes = [16, 16, 2], strides = [1, 1, 1]} : vector<16x20x2xf32> to vector<16x16x2xf32>
    %82 = arith.maximumf %80, %81 : vector<16x16x2xf32>
    %83 = vector.extract_strided_slice %77 {offsets = [0, 3, 0], sizes = [16, 16, 2], strides = [1, 1, 1]} : vector<16x20x2xf32> to vector<16x16x2xf32>
    %84 = arith.maximumf %82, %83 : vector<16x16x2xf32>
    %85 = vector.extract_strided_slice %77 {offsets = [0, 4, 0], sizes = [16, 16, 2], strides = [1, 1, 1]} : vector<16x20x2xf32> to vector<16x16x2xf32>
    %86 = arith.maximumf %84, %85 : vector<16x16x2xf32>
    %87 = vector.shape_cast %86 : vector<16x16x2xf32> to vector<256x2xf32>
    %c3_84 = arith.constant 3 : index
    %c0_85 = arith.constant 0 : index
    %c0_86 = arith.constant 0 : index
    %88 = vector.load %arg4[%c3_84, %c0_85, %c0_86] : memref<4x2x8xf32, #tpu.memory_space<vmem>>, vector<1x2x8xf32>
    %89 = vector.shape_cast %88 : vector<1x2x8xf32> to vector<2x8xf32>
    %cst_87 = arith.constant dense<0.000000e+00> : vector<256x8xf32>
    %90 = tpu.matmul %87, %89, %cst_87 {dimension_numbers = #tpu.dot_dimension_numbers<[1], [0], [0], [1], [0, 0, 1, 1], [], []>} : vector<256x2xf32>, vector<2x8xf32>, vector<256x8xf32> -> vector<256x8xf32>
    %91 = arith.addf %67, %90 : vector<256x8xf32>
    %c0_88 = arith.constant 0 : index
    %c0_89 = arith.constant 0 : index
    %92 = vector.load %arg5[%c0_88, %c0_89] : memref<1x8xf32, #tpu.memory_space<vmem>>, vector<1x8xf32>
    %93 = vector.broadcast %92 : vector<1x8xf32> to vector<256x8xf32>
    %94 = arith.addf %91, %93 : vector<256x8xf32>
    %95 = vector.shape_cast %94 : vector<256x8xf32> to vector<16x16x8xf32>
    %c0_90 = arith.constant 0 : index
    %c0_91 = arith.constant 0 : index
    %c0_92 = arith.constant 0 : index
    %c0_93 = arith.constant 0 : index
    %96 = vector.load %arg6[%c0_90, %c0_91, %c0_92, %c0_93] : memref<1x16x16x8xf32, #tpu.memory_space<vmem>>, vector<1x16x16x8xf32>
    %97 = vector.shape_cast %96 : vector<1x16x16x8xf32> to vector<16x16x8xf32>
    %98 = vector.shape_cast %95 : vector<16x16x8xf32> to vector<1x16x16x8xf32>
    tpu.vector_store %arg6[%c0_90, %c0_91, %c0_92, %c0_93], %98 {strides = array<i32>} : memref<1x16x16x8xf32, #tpu.memory_space<vmem>>, vector<1x16x16x8xf32>,
    return
  }
  func.func @transform_0(%arg0: i32) -> (i32, i32, i32, i32) {
    %c0_i32 = arith.constant 0 : i32
    %c0_i32_0 = arith.constant 0 : i32
    %c0_i32_1 = arith.constant 0 : i32
    %c0_i32_2 = arith.constant 0 : i32
    return %arg0, %c0_i32, %c0_i32_0, %c0_i32_1 : i32, i32, i32, i32
  }
  func.func @transform_1(%arg0: i32) -> (i32, i32) {
    %c0_i32 = arith.constant 0 : i32
    %c0_i32_0 = arith.constant 0 : i32
    %c0_i32_1 = arith.constant 0 : i32
    return %c0_i32, %c0_i32_0 : i32, i32
  }
  func.func @transform_2(%arg0: i32) -> (i32, i32) {
    %c0_i32 = arith.constant 0 : i32
    %c0_i32_0 = arith.constant 0 : i32
    %c0_i32_1 = arith.constant 0 : i32
    return %c0_i32, %c0_i32_0 : i32, i32
  }
  func.func @transform_3(%arg0: i32) -> (i32, i32, i32) {
    %c0_i32 = arith.constant 0 : i32
    %c0_i32_0 = arith.constant 0 : i32
    %c0_i32_1 = arith.constant 0 : i32
    %c0_i32_2 = arith.constant 0 : i32
    return %c0_i32, %c0_i32_0, %c0_i32_1 : i32, i32, i32
  }
  func.func @transform_4(%arg0: i32) -> (i32, i32) {
    %c0_i32 = arith.constant 0 : i32
    %c0_i32_0 = arith.constant 0 : i32
    %c0_i32_1 = arith.constant 0 : i32
    return %c0_i32, %c0_i32_0 : i32, i32
  }
  func.func @transform_5(%arg0: i32) -> (i32, i32, i32, i32) {
    %c0_i32 = arith.constant 0 : i32
    %c0_i32_0 = arith.constant 0 : i32
    %c0_i32_1 = arith.constant 0 : i32
    %c0_i32_2 = arith.constant 0 : i32
    return %arg0, %c0_i32, %c0_i32_0, %c0_i32_1 : i32, i32, i32, i32
  }
}

</mosaic_0001>

<llo_original>
// kernel: spp_forward.1
$region0: #{spp_forward.1}
  #allocation0 [shape = 'u32[]', space=smem, size = 0x4, offset = 0x4, fixed_abs, tag = 'smem constant byte address 0x4 - core index']
  #allocation1 [shape = 'u32[144,128]{1,0:T(1,128)}', space=vmem, size = 0x12000, scoped, tag = 'internal scratch']
  #allocation2 [shape = 'f32[20,20,2]{2,1,0:T(8,128)}', space=vmem, size = 0x3c000, scoped, tag = 'scratch operand']
  %s0 = inlined_call_operand.vmem [shape: f32[2,16,16,4], index: 0, kind: input, shape index: {}]
  %s1 = inlined_call_operand.vmem [shape: f32[4,2], index: 1, kind: input, shape index: {}]
  %s2 = inlined_call_operand.vmem [shape: f32[1,2], index: 2, kind: input, shape index: {}]
  %s3 = inlined_call_operand.vmem [shape: f32[4,2,8], index: 3, kind: input, shape index: {}]
  %s4 = inlined_call_operand.vmem [shape: f32[1,8], index: 4, kind: input, shape index: {}]
  %s5 = inlined_call_operand.vmem [shape: f32[2,16,16,8], index: 5, kind: output, shape index: {}]
  %s6 = sld [smem:[#allocation0]]
  $region53: #{spp_forward.1} parent=0
    _
  %s8 = ssub.s32 1, %s6
  %s9 = scalar_select 0, %s8, %s6
  loop: start=0, step=1, limit=4
  $region2: #{spp_forward.1} parent=0 // loop_pre_header
    _
  $region3: #{spp_forward.1} parent=0 // loop_header
    %s11 = sphi 0, %s15
    %p12 = scmp.ge.s32.totalorder %s11, 4
    %s21 = sphi 0, %s23
    %s24 = sphi 0, %s21
    %s25 = sphi 0, %s24
    %s41 = sphi 0, %s25
    %s45 = sphi 0, %s45
    %s47 = sphi 0, %s45
    %s48 = sphi 0, %s47
    %s62 = sphi 0, %s48
    %s66 = sphi 0, %s66
    %s68 = sphi 0, %s66
    %s69 = sphi 0, %s68
    %s83 = sphi 0, %s69
    %s87 = sphi 0, %s87
    %s89 = sphi 0, %s87
    %s90 = sphi 0, %s89
    %s104 = sphi 0, %s90
    %s108 = sphi 0, %s108
    %s110 = sphi 0, %s108
    %s111 = sphi 0, %s110
    %s125 = sphi 0, %s111
    %s131 = sphi 0, %s133
    %s134 = sphi 0, %s131
    %s135 = sphi 0, %s134
    %s151 = sphi 0, %s135
  $region4: #{spp_forward.1} parent=0 // loop_header_branch
    %14 = sbr.rel (%p12) target = $region8
  $region5: #{spp_forward.1} parent=0 // loop_body
    %s16 = ssub.s32 %s11, 1
    %s17 = ssub.s32 %s11, 2
    %s18 = sadd.s32 %s11, 1
    %s19 = ssub.s32 %s11, %s18
    %p20 = scmp.eq.s32.totalorder %s19, 0
    %s22 = sadd.s32 %s21, 1
    %s23 = scalar_select %p20, %s21, %s22
    %p26 = pneg %p20
    %p27 = scmp.eq.s32.totalorder %s11, 1
    %p28 = por %p26, %p27
    %p29 = scmp.ne.s32.totalorder %s21, %s24
    %p30 = scmp.eq.s32.totalorder %s11, 0
    %p31 = por %p29, %p30
    %p32 = scmp.ne.s32.totalorder %s21, %s24
    %p33 = scmp.eq.s32.totalorder %s16, 1
    %p34 = por %p32, %p33
    %p35 = scmp.ne.s32.totalorder %s24, %s25
    %p36 = scmp.eq.s32.totalorder %s16, 0
    %p37 = por %p35, %p36
    %p38 = scmp.ne.s32.totalorder %s24, %s25
    %p39 = scmp.eq.s32.totalorder %s17, 1
    %p40 = por %p38, %p39
    %p42 = scmp.ne.s32.totalorder %s25, %s41
    %p43 = scmp.eq.s32.totalorder %s17, 0
    %p44 = por %p42, %p43
    %s46 = sadd.s32 %s45, 1
    %p49 = scmp.eq.s32.totalorder %s11, 1
    %p50 = scmp.ne.s32.totalorder %s45, %s47
    %p51 = scmp.eq.s32.totalorder %s11, 0
    %p52 = por %p50, %p51
    %p53 = scmp.ne.s32.totalorder %s45, %s47
    %p54 = scmp.eq.s32.totalorder %s16, 1
    %p55 = por %p53, %p54
    %p56 = scmp.ne.s32.totalorder %s47, %s48
    %p57 = scmp.eq.s32.totalorder %s16, 0
    %p58 = por %p56, %p57
    %p59 = scmp.ne.s32.totalorder %s47, %s48
    %p60 = scmp.eq.s32.totalorder %s17, 1
    %p61 = por %p59, %p60
    %p63 = scmp.ne.s32.totalorder %s48, %s62
    %p64 = scmp.eq.s32.totalorder %s17, 0
    %p65 = por %p63, %p64
    %s67 = sadd.s32 %s66, 1
    %p70 = scmp.eq.s32.totalorder %s11, 1
    %p71 = scmp.ne.s32.totalorder %s66, %s68
    %p72 = scmp.eq.s32.totalorder %s11, 0
    %p73 = por %p71, %p72
    %p74 = scmp.ne.s32.totalorder %s66, %s68
    %p75 = scmp.eq.s32.totalorder %s16, 1
    %p76 = por %p74, %p75
    %p77 = scmp.ne.s32.totalorder %s68, %s69
    %p78 = scmp.eq.s32.totalorder %s16, 0
    %p79 = por %p77, %p78
    %p80 = scmp.ne.s32.totalorder %s68, %s69
    %p81 = scmp.eq.s32.totalorder %s17, 1
    %p82 = por %p80, %p81
    %p84 = scmp.ne.s32.totalorder %s69, %s83
    %p85 = scmp.eq.s32.totalorder %s17, 0
    %p86 = por %p84, %p85
    %s88 = sadd.s32 %s87, 1
    %p91 = scmp.eq.s32.totalorder %s11, 1
    %p92 = scmp.ne.s32.totalorder %s87, %s89
    %p93 = scmp.eq.s32.totalorder %s11, 0
    %p94 = por %p92, %p93
    %p95 = scmp.ne.s32.totalorder %s87, %s89
    %p96 = scmp.eq.s32.totalorder %s16, 1
    %p97 = por %p95, %p96
    %p98 = scmp.ne.s32.totalorder %s89, %s90
    %p99 = scmp.eq.s32.totalorder %s16, 0
    %p100 = por %p98, %p99
    %p101 = scmp.ne.s32.totalorder %s89, %s90
    %p102 = scmp.eq.s32.totalorder %s17, 1
    %p103 = por %p101, %p102
    %p105 = scmp.ne.s32.totalorder %s90, %s104
    %p106 = scmp.eq.s32.totalorder %s17, 0
    %p107 = por %p105, %p106
    %s109 = sadd.s32 %s108, 1
    %p112 = scmp.eq.s32.totalorder %s11, 1
    %p113 = scmp.ne.s32.totalorder %s108, %s110
    %p114 = scmp.eq.s32.totalorder %s11, 0
    %p115 = por %p113, %p114
    %p116 = scmp.ne.s32.totalorder %s108, %s110
    %p117 = scmp.eq.s32.totalorder %s16, 1
    %p118 = por %p116, %p117
    %p119 = scmp.ne.s32.totalorder %s110, %s111
    %p120 = scmp.eq.s32.totalorder %s16, 0
    %p121 = por %p119, %p120
    %p122 = scmp.ne.s32.totalorder %s110, %s111
    %p123 = scmp.eq.s32.totalorder %s17, 1
    %p124 = por %p122, %p123
    %p126 = scmp.ne.s32.totalorder %s111, %s125
    %p127 = scmp.eq.s32.totalorder %s17, 0
    %p128 = por %p126, %p127
    %s129 = ssub.s32 %s11, %s18
    %p130 = scmp.eq.s32.totalorder %s129, 0
    %s132 = sadd.s32 %s131, 1
    %s133 = scalar_select %p130, %s131, %s132
    %p136 = pneg %p130
    %p137 = scmp.eq.s32.totalorder %s11, 1
    %p138 = por %p136, %p137
    %p139 = scmp.ne.s32.totalorder %s131, %s134
    %p140 = scmp.eq.s32.totalorder %s11, 0
    %p141 = por %p139, %p140
    %p142 = scmp.ne.s32.totalorder %s131, %s134
    %p143 = scmp.eq.s32.totalorder %s16, 1
    %p144 = por %p142, %p143
    %p145 = scmp.ne.s32.totalorder %s134, %s135
    %p146 = scmp.eq.s32.totalorder %s16, 0
    %p147 = por %p145, %p146
    %p148 = scmp.ne.s32.totalorder %s134, %s135
    %p149 = scmp.eq.s32.totalorder %s17, 1
    %p150 = por %p148, %p149
    %p152 = scmp.ne.s32.totalorder %s135, %s151
    %p153 = scmp.eq.s32.totalorder %s17, 0
    %p154 = por %p152, %p153
    %p155 = scmp.le.s32.totalorder 1, %s11
    %p156 = scmp.lt.s32.totalorder %s11, 3
    %p157 = pnand %p155, %p156
    %p158 = pneg %p157
    // Predicated region
    $region9: #{spp_forward.1} parent=5 // pred_check
      _
    $region10: #{spp_forward.1} parent=5 // pred_check_branch
      %160 = sbr.rel (%p157) target = $region12
    $region11: #{spp_forward.1} parent=5 // pred_region
      %s161 = ssub.s32 %s11, 1
      // Predicated region
      $region13: #{spp_forward.1} parent=11 // pred_check
        %p162 = pneg %p58
      $region14: #{spp_forward.1} parent=11 // pred_check_branch
        %164 = sbr.rel (%p162) target = $region16
      $region15: #{spp_forward.1} parent=11 // pred_region
        _
      $region16: #{spp_forward.1} parent=11 // pred_fallthru
        _
      // Predicated region
      $region17: #{spp_forward.1} parent=11 // pred_check
        %p165 = pneg %p79
      $region18: #{spp_forward.1} parent=11 // pred_check_branch
        %167 = sbr.rel (%p165) target = $region20
      $region19: #{spp_forward.1} parent=11 // pred_region
        _
      $region20: #{spp_forward.1} parent=11 // pred_fallthru
        _
      // Predicated region
      $region21: #{spp_forward.1} parent=11 // pred_check
        %p168 = pneg %p100
      $region22: #{spp_forward.1} parent=11 // pred_check_branch
        %170 = sbr.rel (%p168) target = $region24
      $region23: #{spp_forward.1} parent=11 // pred_region
        _
      $region24: #{spp_forward.1} parent=11 // pred_fallthru
        _
      // Predicated region
      $region25: #{spp_forward.1} parent=11 // pred_check
        %p171 = pneg %p121
      $region26: #{spp_forward.1} parent=11 // pred_check_branch
        %173 = sbr.rel (%p171) target = $region28
      $region27: #{spp_forward.1} parent=11 // pred_region
        _
      $region28: #{spp_forward.1} parent=11 // pred_fallthru
        _
    $region12: #{spp_forward.1} parent=5 // pred_fallthru
      _
    %p174 = scmp.lt.s32.totalorder %s11, 2
    // Predicated region
    $region29: #{spp_forward.1} parent=5 // pred_check
      %p175 = pneg %p174
    $region30: #{spp_forward.1} parent=5 // pred_check_branch
      %177 = sbr.rel (%p175) target = $region32
    $region31: #{spp_forward.1} parent=5 // pred_region
      // Predicated region
      $region33: #{spp_forward.1} parent=31 // pred_check
        %p178 = pneg %p31
      $region34: #{spp_forward.1} parent=31 // pred_check_branch
        %180 = sbr.rel (%p178) target = $region36
      $region35: #{spp_forward.1} parent=31 // pred_region
        %p181 = scmp.lt.s32.totalorder %s11, 1
        %s182 = scalar_select %p181, %s11, 1
        %s183 = smul.addr %s182, 32
        %s184 = smul.addr %s183, 8
        %s185 = scalar_lea.vmem %s0, %s184
      $region36: #{spp_forward.1} parent=31 // pred_fallthru
        _
    $region32: #{spp_forward.1} parent=5 // pred_fallthru
      _
    %p186 = scmp.le.s32.totalorder 1, %s11
    %p187 = scmp.lt.s32.totalorder %s11, 3
    %p188 = pnand %p186, %p187
    %p189 = pneg %p188
    // Predicated region
    $region37: #{spp_forward.1} parent=5 // pred_check
      _
    $region38: #{spp_forward.1} parent=5 // pred_check_branch
      %191 = sbr.rel (%p188) target = $region40
    $region39: #{spp_forward.1} parent=5 // pred_region
      %s192 = ssub.s32 %s11, 1
      %p193 = scmp.lt.s32.totalorder %s16, 1
      %s194 = scalar_select %p193, %s16, 1
      %s195 = smul.addr %s194, 32
      %s196 = smul.addr %s195, 8
      %s197 = scalar_lea.vmem %s0, %s196
      %p198 = pneg %p37
      %p199 = pneg %p34
      %p200 = pneg %p58
      %p201 = pneg %p55
      %p202 = pneg %p79
      %p203 = pneg %p76
      %p204 = pneg %p100
      %p205 = pneg %p97
      %p206 = pneg %p121
      %p207 = pneg %p118
      %p208 = pneg %p147
      %p209 = pneg %p144
      %p210 = scmp.lt.s32.totalorder %s16, 1
      %s211 = scalar_select %p210, %s16, 1
      %s212 = smul.addr %s211, 32
      %s213 = smul.addr %s212, 8
      %s214 = scalar_lea.vmem %s5, %s213
      %p215 = scmp.lt.s32.totalorder %s16, 1
      %s216 = scalar_select %p215, %s16, 1
      %s217 = smul.addr %s216, 32
      %s218 = smul.addr %s217, 8
      %s219 = scalar_lea.vmem %s0, %s218
      %p220 = scmp.lt.s32.totalorder %s16, 1
      %s221 = scalar_select %p220, %s16, 1
      %s222 = smul.addr %s221, 32
      %s223 = smul.addr %s222, 8
      %s224 = scalar_lea.vmem %s5, %s223
      %v225 = vld [vmem:[%s219] sm:$0xff]
      %v226 = vld [vmem:[%s219 + $0x8] sm:$0xff]
      %v227 = vld [vmem:[%s219 + $0x10] sm:$0xff]
      %v228 = vld [vmem:[%s219 + $0x18] sm:$0xff]
      %v229 = vld [vmem:[%s219 + $0x20] sm:$0xff]
      %v230 = vld [vmem:[%s219 + $0x28] sm:$0xff]
      %v231 = vld [vmem:[%s219 + $0x30] sm:$0xff]
      %v232 = vld [vmem:[%s219 + $0x38] sm:$0xff]
      %v233 = vld [vmem:[%s219 + $0x40] sm:$0xff]
      %v234 = vld [vmem:[%s219 + $0x48] sm:$0xff]
      %v235 = vld [vmem:[%s219 + $0x50] sm:$0xff]
      %v236 = vld [vmem:[%s219 + $0x58] sm:$0xff]
      %v237 = vld [vmem:[%s219 + $0x60] sm:$0xff]
      %v238 = vld [vmem:[%s219 + $0x68] sm:$0xff]
      %v239 = vld [vmem:[%s219 + $0x70] sm:$0xff]
      %v240 = vld [vmem:[%s219 + $0x78] sm:$0xff]
      %v241 = vld [vmem:[%s219 + $0x80] sm:$0xff]
      %v242 = vld [vmem:[%s219 + $0x88] sm:$0xff]
      %v243 = vld [vmem:[%s219 + $0x90] sm:$0xff]
      %v244 = vld [vmem:[%s219 + $0x98] sm:$0xff]
      %v245 = vld [vmem:[%s219 + $0xa0] sm:$0xff]
      %v246 = vld [vmem:[%s219 + $0xa8] sm:$0xff]
      %v247 = vld [vmem:[%s219 + $0xb0] sm:$0xff]
      %v248 = vld [vmem:[%s219 + $0xb8] sm:$0xff]
      %v249 = vld [vmem:[%s219 + $0xc0] sm:$0xff]
      %v250 = vld [vmem:[%s219 + $0xc8] sm:$0xff]
      %v251 = vld [vmem:[%s219 + $0xd0] sm:$0xff]
      %v252 = vld [vmem:[%s219 + $0xd8] sm:$0xff]
      %v253 = vld [vmem:[%s219 + $0xe0] sm:$0xff]
      %v254 = vld [vmem:[%s219 + $0xe8] sm:$0xff]
      %v255 = vld [vmem:[%s219 + $0xf0] sm:$0xff]
      %v256 = vld [vmem:[%s219 + $0xf8] sm:$0xff]
      %v257 = vld [vmem:[%s1] sm:$0xf]
      %v258 = vld [vmem:[%s2] sm:$0x1]
      %v260 = vlaneseq
      %v261 = vshrl.u32 %v260, 7
      %v262 = vsub.s32 0, %v261
      %v263 = vrot.slane %v258, %v262
      %vm265 = vcmask 31744
      %v267 = vsel %vm265, %v225, 0
      %v270 = vsel %vm265, %v226, 0
      %v273 = vsel %vm265, %v227, 0
      %v276 = vsel %vm265, %v228, 0
      %v279 = vsel %vm265, %v229, 0
      %v282 = vsel %vm265, %v230, 0
      %v285 = vsel %vm265, %v231, 0
      %v288 = vsel %vm265, %v232, 0
      %v291 = vsel %vm265, %v233, 0
      %v294 = vsel %vm265, %v234, 0
      %v297 = vsel %vm265, %v235, 0
      %v300 = vsel %vm265, %v236, 0
      %v303 = vsel %vm265, %v237, 0
      %v306 = vsel %vm265, %v238, 0
      %v309 = vsel %vm265, %v239, 0
      %v312 = vsel %vm265, %v240, 0
      %v315 = vsel %vm265, %v241, 0
      %v318 = vsel %vm265, %v242, 0
      %v321 = vsel %vm265, %v243, 0
      %v324 = vsel %vm265, %v244, 0
      %v327 = vsel %vm265, %v245, 0
      %v330 = vsel %vm265, %v246, 0
      %v333 = vsel %vm265, %v247, 0
      %v336 = vsel %vm265, %v248, 0
      %v339 = vsel %vm265, %v249, 0
      %v342 = vsel %vm265, %v250, 0
      %v345 = vsel %vm265, %v251, 0
      %v348 = vsel %vm265, %v252, 0
      %v351 = vsel %vm265, %v253, 0
      %v354 = vsel %vm265, %v254, 0
      %v357 = vsel %vm265, %v255, 0
      %v360 = vsel %vm265, %v256, 0
      %vm362 = vcmask 1043456
      %v364 = vsel %vm362, %v257, 0
      %366 = vmatprep.subr.mxu0 0.0
      %367 = vmatpush1.msra.mxu0 0.0
      %368 = vmatprep.subr.mxu0 0.0
      %369 = vmatpush1.msra.mxu0 0.0
      %370 = vmatprep.subr.mxu0 0.0
      %371 = vmatpush1.msra.mxu0 0.0
      %372 = vmatprep.subr.mxu0 0.0
      %373 = vmatpush1.msra.mxu0 0.0
      %374 = vmatprep.subr.mxu0 0.0
      %375 = vmatpush1.msra.mxu0 0.0
      %376 = vmatprep.subr.mxu0 0.0
      %377 = vmatpush1.msra.mxu0 0.0
      %378 = vmatprep.subr.mxu0 0.0
      %379 = vmatpush1.msra.mxu0 0.0
      %380 = vmatprep.subr.mxu0 0.0
      %381 = vmatpush1.msra.mxu0 0.0
      %382 = vmatprep.subr.mxu0 0.0
      %383 = vmatpush1.msra.mxu0 0.0
      %384 = vmatprep.subr.mxu0 0.0
      %385 = vmatpush1.msra.mxu0 0.0
      %386 = vmatprep.subr.mxu0 0.0
      %387 = vmatpush1.msra.mxu0 0.0
      %388 = vmatprep.subr.mxu0 0.0
      %389 = vmatpush1.msra.mxu0 0.0
      %390 = vmatprep.subr.mxu0 0.0
      %391 = vmatpush1.msra.mxu0 0.0
      %392 = vmatprep.subr.mxu0 0.0
      %393 = vmatpush1.msra.mxu0 0.0
      %394 = vmatprep.subr.mxu0 0.0
      %395 = vmatpush1.msra.mxu0 0.0
      %396 = vmatprep.subr.mxu0 0.0
      %397 = vmatpush1.msra.mxu0 %v364
      %398 = vmatprep.subr.mxu0 0.0
      %399 = vmatpush2.msra.mxu0 0.0
      %400 = vmatprep.subr.mxu0 0.0
      %401 = vmatpush2.msra.mxu0 0.0
      %402 = vmatprep.subr.mxu0 0.0
      %403 = vmatpush2.msra.mxu0 0.0
      %404 = vmatprep.subr.mxu0 0.0
      %405 = vmatpush2.msra.mxu0 0.0
      %406 = vmatprep.subr.mxu0 0.0
      %407 = vmatpush2.msra.mxu0 0.0
      %408 = vmatprep.subr.mxu0 0.0
      %409 = vmatpush2.msra.mxu0 0.0
      %410 = vmatprep.subr.mxu0 0.0
      %411 = vmatpush2.msra.mxu0 0.0
      %412 = vmatprep.subr.mxu0 0.0
      %413 = vmatpush2.msra.mxu0 0.0
      %414 = vmatprep.subr.mxu0 0.0
      %415 = vmatpush2.msra.mxu0 0.0
      %416 = vmatprep.subr.mxu0 0.0
      %417 = vmatpush2.msra.mxu0 0.0
      %418 = vmatprep.subr.mxu0 0.0
      %419 = vmatpush2.msra.mxu0 0.0
      %420 = vmatprep.subr.mxu0 0.0
      %421 = vmatpush2.msra.mxu0 0.0
      %422 = vmatprep.subr.mxu0 0.0
      %423 = vmatpush2.msra.mxu0 0.0
      %424 = vmatprep.subr.mxu0 0.0
      %425 = vmatpush2.msra.mxu0 0.0
      %426 = vmatprep.subr.mxu0 0.0
      %427 = vmatpush2.msra.mxu0 0.0
      %428 = vmatprep.subr.mxu0 0.0
      %429 = vmatpush2.msra.mxu0 0.0
      %430 = vmatprep.mubr.f32.mxu0 0.0
      %431 = vmatmul.mubr.f32.gmra.mxu0 %v267
      %v432 = vpop.f32.mrf.mxu0
      %v433 = vadd.f32 %v263, %v432
      %v434 = vpop.f32.mrf.mxu0
      %435 = vmatprep.mubr.f32.mxu0 0.0
      %436 = vmatmul.mubr.f32.gmra.mxu0 %v270
      %v437 = vpop.f32.mrf.mxu0
      %v438 = vadd.f32 %v263, %v437
      %v439 = vpop.f32.mrf.mxu0
      %440 = vmatprep.mubr.f32.mxu0 0.0
      %441 = vmatmul.mubr.f32.gmra.mxu0 %v273
      %v442 = vpop.f32.mrf.mxu0
      %v443 = vadd.f32 %v263, %v442
      %v444 = vpop.f32.mrf.mxu0
      %445 = vmatprep.mubr.f32.mxu0 0.0
      %446 = vmatmul.mubr.f32.gmra.mxu0 %v276
      %v447 = vpop.f32.mrf.mxu0
      %v448 = vadd.f32 %v263, %v447
      %v449 = vpop.f32.mrf.mxu0
      %450 = vmatprep.mubr.f32.mxu0 0.0
      %451 = vmatmul.mubr.f32.gmra.mxu0 %v279
      %v452 = vpop.f32.mrf.mxu0
      %v453 = vadd.f32 %v263, %v452
      %v454 = vpop.f32.mrf.mxu0
      %455 = vmatprep.mubr.f32.mxu0 0.0
      %456 = vmatmul.mubr.f32.gmra.mxu0 %v282
      %v457 = vpop.f32.mrf.mxu0
      %v458 = vadd.f32 %v263, %v457
      %v459 = vpop.f32.mrf.mxu0
      %460 = vmatprep.mubr.f32.mxu0 0.0
      %461 = vmatmul.mubr.f32.gmra.mxu0 %v285
      %v462 = vpop.f32.mrf.mxu0
      %v463 = vadd.f32 %v263, %v462
      %v464 = vpop.f32.mrf.mxu0
      %465 = vmatprep.mubr.f32.mxu0 0.0
      %466 = vmatmul.mubr.f32.gmra.mxu0 %v288
      %v467 = vpop.f32.mrf.mxu0
      %v468 = vadd.f32 %v263, %v467
      %v469 = vpop.f32.mrf.mxu0
      %470 = vmatprep.mubr.f32.mxu0 0.0
      %471 = vmatmul.mubr.f32.gmra.mxu0 %v291
      %v472 = vpop.f32.mrf.mxu0
      %v473 = vadd.f32 %v263, %v472
      %v474 = vpop.f32.mrf.mxu0
      %475 = vmatprep.mubr.f32.mxu0 0.0
      %476 = vmatmul.mubr.f32.gmra.mxu0 %v294
      %v477 = vpop.f32.mrf.mxu0
      %v478 = vadd.f32 %v263, %v477
      %v479 = vpop.f32.mrf.mxu0
      %480 = vmatprep.mubr.f32.mxu0 0.0
      %481 = vmatmul.mubr.f32.gmra.mxu0 %v297
      %v482 = vpop.f32.mrf.mxu0
      %v483 = vadd.f32 %v263, %v482
      %v484 = vpop.f32.mrf.mxu0
      %485 = vmatprep.mubr.f32.mxu0 0.0
      %486 = vmatmul.mubr.f32.gmra.mxu0 %v300
      %v487 = vpop.f32.mrf.mxu0
      %v488 = vadd.f32 %v263, %v487
      %v489 = vpop.f32.mrf.mxu0
      %490 = vmatprep.mubr.f32.mxu0 0.0
      %491 = vmatmul.mubr.f32.gmra.mxu0 %v303
      %v492 = vpop.f32.mrf.mxu0
      %v493 = vadd.f32 %v263, %v492
      %v494 = vpop.f32.mrf.mxu0
      %495 = vmatprep.mubr.f32.mxu0 0.0
      %496 = vmatmul.mubr.f32.gmra.mxu0 %v306
      %v497 = vpop.f32.mrf.mxu0
      %v498 = vadd.f32 %v263, %v497
      %v499 = vpop.f32.mrf.mxu0
      %500 = vmatprep.mubr.f32.mxu0 0.0
      %501 = vmatmul.mubr.f32.gmra.mxu0 %v309
      %v502 = vpop.f32.mrf.mxu0
      %v503 = vadd.f32 %v263, %v502
      %v504 = vpop.f32.mrf.mxu0
      %505 = vmatprep.mubr.f32.mxu0 0.0
      %506 = vmatmul.mubr.f32.gmra.mxu0 %v312
      %v507 = vpop.f32.mrf.mxu0
      %v508 = vadd.f32 %v263, %v507
      %v509 = vpop.f32.mrf.mxu0
      %510 = vmatprep.mubr.f32.mxu0 0.0
      %511 = vmatmul.mubr.f32.gmra.mxu0 %v315
      %v512 = vpop.f32.mrf.mxu0
      %v513 = vadd.f32 %v263, %v512
      %v514 = vpop.f32.mrf.mxu0
      %515 = vmatprep.mubr.f32.mxu0 0.0
      %516 = vmatmul.mubr.f32.gmra.mxu0 %v318
      %v517 = vpop.f32.mrf.mxu0
      %v518 = vadd.f32 %v263, %v517
      %v519 = vpop.f32.mrf.mxu0
      %520 = vmatprep.mubr.f32.mxu0 0.0
      %521 = vmatmul.mubr.f32.gmra.mxu0 %v321
      %v522 = vpop.f32.mrf.mxu0
      %v523 = vadd.f32 %v263, %v522
      %v524 = vpop.f32.mrf.mxu0
      %525 = vmatprep.mubr.f32.mxu0 0.0
      %526 = vmatmul.mubr.f32.gmra.mxu0 %v324
      %v527 = vpop.f32.mrf.mxu0
      %v528 = vadd.f32 %v263, %v527
      %v529 = vpop.f32.mrf.mxu0
      %530 = vmatprep.mubr.f32.mxu0 0.0
      %531 = vmatmul.mubr.f32.gmra.mxu0 %v327
      %v532 = vpop.f32.mrf.mxu0
      %v533 = vadd.f32 %v263, %v532
      %v534 = vpop.f32.mrf.mxu0
      %535 = vmatprep.mubr.f32.mxu0 0.0
      %536 = vmatmul.mubr.f32.gmra.mxu0 %v330
      %v537 = vpop.f32.mrf.mxu0
      %v538 = vadd.f32 %v263, %v537
      %v539 = vpop.f32.mrf.mxu0
      %540 = vmatprep.mubr.f32.mxu0 0.0
      %541 = vmatmul.mubr.f32.gmra.mxu0 %v333
      %v542 = vpop.f32.mrf.mxu0
      %v543 = vadd.f32 %v263, %v542
      %v544 = vpop.f32.mrf.mxu0
      %545 = vmatprep.mubr.f32.mxu0 0.0
      %546 = vmatmul.mubr.f32.gmra.mxu0 %v336
      %v547 = vpop.f32.mrf.mxu0
      %v548 = vadd.f32 %v263, %v547
      %v549 = vpop.f32.mrf.mxu0
      %550 = vmatprep.mubr.f32.mxu0 0.0
      %551 = vmatmul.mubr.f32.gmra.mxu0 %v339
      %v552 = vpop.f32.mrf.mxu0
      %v553 = vadd.f32 %v263, %v552
      %v554 = vpop.f32.mrf.mxu0
      %555 = vmatprep.mubr.f32.mxu0 0.0
      %556 = vmatmul.mubr.f32.gmra.mxu0 %v342
      %v557 = vpop.f32.mrf.mxu0
      %v558 = vadd.f32 %v263, %v557
      %v559 = vpop.f32.mrf.mxu0
      %560 = vmatprep.mubr.f32.mxu0 0.0
      %561 = vmatmul.mubr.f32.gmra.mxu0 %v345
      %v562 = vpop.f32.mrf.mxu0
      %v563 = vadd.f32 %v263, %v562
      %v564 = vpop.f32.mrf.mxu0
      %565 = vmatprep.mubr.f32.mxu0 0.0
      %566 = vmatmul.mubr.f32.gmra.mxu0 %v348
      %v567 = vpop.f32.mrf.mxu0
      %v568 = vadd.f32 %v263, %v567
      %v569 = vpop.f32.mrf.mxu0
      %570 = vmatprep.mubr.f32.mxu0 0.0
      %571 = vmatmul.mubr.f32.gmra.mxu0 %v351
      %v572 = vpop.f32.mrf.mxu0
      %v573 = vadd.f32 %v263, %v572
      %v574 = vpop.f32.mrf.mxu0
      %575 = vmatprep.mubr.f32.mxu0 0.0
      %576 = vmatmul.mubr.f32.gmra.mxu0 %v354
      %v577 = vpop.f32.mrf.mxu0
      %v578 = vadd.f32 %v263, %v577
      %v579 = vpop.f32.mrf.mxu0
      %580 = vmatprep.mubr.f32.mxu0 0.0
      %581 = vmatmul.mubr.f32.gmra.mxu0 %v357
      %v582 = vpop.f32.mrf.mxu0
      %v583 = vadd.f32 %v263, %v582
      %v584 = vpop.f32.mrf.mxu0
      %585 = vmatprep.mubr.f32.mxu0 0.0
      %586 = vmatmul.mubr.f32.gmra.mxu0 %v360
      %v587 = vpop.f32.mrf.mxu0
      %v588 = vadd.f32 %v263, %v587
      %v589 = vpop.f32.mrf.mxu0
      %590 = vdwg.mxu0
      %v591 = vld [vmem:[%s3] sm:$0x3]
      %vm592 = vcmask 15360
      %593 = vst.msk [vmem:[#allocation2] sm:$0xff] %vm592, -inf
      %594 = vst.msk [vmem:[#allocation2 + $0x8] sm:$0xff] %vm592, -inf
      %vm595 = vcmask 11264
      %596 = vst.msk [vmem:[#allocation2 + $0x10] sm:$0xf] %vm595, -inf
      %597 = vst.msk [vmem:[#allocation2 + $0x18] sm:$0xff] %vm592, -inf
      %598 = vst.msk [vmem:[#allocation2 + $0x20] sm:$0xff] %vm592, -inf
      %599 = vst.msk [vmem:[#allocation2 + $0x28] sm:$0xf] %vm595, -inf
      %s600 = scalar_lea.vmem [#allocation2], 432
      %601 = vst.msk [vmem:[%s600] sm:$0xff] %vm592, -inf
      %602 = vst.msk [vmem:[%s600 + $0x8] sm:$0xff] %vm592, -inf
      %603 = vst.msk [vmem:[%s600 + $0x10] sm:$0xf] %vm595, -inf
      %604 = vst.msk [vmem:[%s600 + $0x18] sm:$0xff] %vm592, -inf
      %605 = vst.msk [vmem:[%s600 + $0x20] sm:$0xff] %vm592, -inf
      %606 = vst.msk [vmem:[%s600 + $0x28] sm:$0xf] %vm595, -inf
      %vm607 = vcmask 9216
      %608 = vst.msk [vmem:[#allocation2] sm:$0x3] %vm607, -inf
      %609 = vst.msk [vmem:[#allocation2 + $0x18] sm:$0x3] %vm607, -inf
      %610 = vst.msk [vmem:[#allocation2 + $0x30] sm:$0x3] %vm607, -inf
      %611 = vst.msk [vmem:[#allocation2 + $0x48] sm:$0x3] %vm607, -inf
      %612 = vst.msk [vmem:[#allocation2 + $0x60] sm:$0x3] %vm607, -inf
      %613 = vst.msk [vmem:[#allocation2 + $0x78] sm:$0x3] %vm607, -inf
      %614 = vst.msk [vmem:[#allocation2 + $0x90] sm:$0x3] %vm607, -inf
      %615 = vst.msk [vmem:[#allocation2 + $0xa8] sm:$0x3] %vm607, -inf
      %616 = vst.msk [vmem:[#allocation2 + $0xc0] sm:$0x3] %vm607, -inf
      %617 = vst.msk [vmem:[#allocation2 + $0xd8] sm:$0x3] %vm607, -inf
      %618 = vst.msk [vmem:[#allocation2 + $0xf0] sm:$0x3] %vm607, -inf
      %619 = vst.msk [vmem:[#allocation2 + $0x108] sm:$0x3] %vm607, -inf
      %620 = vst.msk [vmem:[#allocation2 + $0x120] sm:$0x3] %vm607, -inf
      %621 = vst.msk [vmem:[#allocation2 + $0x138] sm:$0x3] %vm607, -inf
      %622 = vst.msk [vmem:[#allocation2 + $0x150] sm:$0x3] %vm607, -inf
      %623 = vst.msk [vmem:[#allocation2 + $0x168] sm:$0x3] %vm607, -inf
      %624 = vst.msk [vmem:[#allocation2 + $0x180] sm:$0x3] %vm607, -inf
      %625 = vst.msk [vmem:[#allocation2 + $0x198] sm:$0x3] %vm607, -inf
      %626 = vst.msk [vmem:[#allocation2 + $0x1b0] sm:$0x3] %vm607, -inf
      %627 = vst.msk [vmem:[#allocation2 + $0x1c8] sm:$0x3] %vm607, -inf
      %628 = vst.msk [vmem:[#allocation2 + $0x12] sm:$0x3] %vm607, -inf
      %629 = vst.msk [vmem:[#allocation2 + $0x2a] sm:$0x3] %vm607, -inf
      %630 = vst.msk [vmem:[#allocation2 + $0x42] sm:$0x3] %vm607, -inf
      %631 = vst.msk [vmem:[#allocation2 + $0x5a] sm:$0x3] %vm607, -inf
      %632 = vst.msk [vmem:[#allocation2 + $0x72] sm:$0x3] %vm607, -inf
      %633 = vst.msk [vmem:[#allocation2 + $0x8a] sm:$0x3] %vm607, -inf
      %634 = vst.msk [vmem:[#allocation2 + $0xa2] sm:$0x3] %vm607, -inf
      %635 = vst.msk [vmem:[#allocation2 + $0xba] sm:$0x3] %vm607, -inf
      %636 = vst.msk [vmem:[#allocation2 + $0xd2] sm:$0x3] %vm607, -inf
      %637 = vst.msk [vmem:[#allocation2 + $0xea] sm:$0x3] %vm607, -inf
      %638 = vst.msk [vmem:[#allocation2 + $0x102] sm:$0x3] %vm607, -inf
      %639 = vst.msk [vmem:[#allocation2 + $0x11a] sm:$0x3] %vm607, -inf
      %640 = vst.msk [vmem:[#allocation2 + $0x132] sm:$0x3] %vm607, -inf
      %641 = vst.msk [vmem:[#allocation2 + $0x14a] sm:$0x3] %vm607, -inf
      %642 = vst.msk [vmem:[#allocation2 + $0x162] sm:$0x3] %vm607, -inf
      %643 = vst.msk [vmem:[#allocation2 + $0x17a] sm:$0x3] %vm607, -inf
      %644 = vst.msk [vmem:[#allocation2 + $0x192] sm:$0x3] %vm607, -inf
      %645 = vst.msk [vmem:[#allocation2 + $0x1aa] sm:$0x3] %vm607, -inf
      %646 = vst.msk [vmem:[#allocation2 + $0x1c2] sm:$0x3] %vm607, -inf
      %647 = vst.msk [vmem:[#allocation2 + $0x1da] sm:$0x3] %vm607, -inf
      %s648 = scalar_lea.vmem [#allocation2], 48
      %649 = vst.msk [vmem:[%s648 + $0x2] sm:$0xff] %vm592, %v433
      %650 = vst.msk [vmem:[%s648 + $0xa] sm:$0xff] %vm592, %v438
      %651 = vst.msk [vmem:[%s648 + $0x1a] sm:$0xff] %vm592, %v443
      %652 = vst.msk [vmem:[%s648 + $0x22] sm:$0xff] %vm592, %v448
      %653 = vst.msk [vmem:[%s648 + $0x32] sm:$0xff] %vm592, %v453
      %654 = vst.msk [vmem:[%s648 + $0x3a] sm:$0xff] %vm592, %v458
      %655 = vst.msk [vmem:[%s648 + $0x4a] sm:$0xff] %vm592, %v463
      %656 = vst.msk [vmem:[%s648 + $0x52] sm:$0xff] %vm592, %v468
      %657 = vst.msk [vmem:[%s648 + $0x62] sm:$0xff] %vm592, %v473
      %658 = vst.msk [vmem:[%s648 + $0x6a] sm:$0xff] %vm592, %v478
      %659 = vst.msk [vmem:[%s648 + $0x7a] sm:$0xff] %vm592, %v483
      %660 = vst.msk [vmem:[%s648 + $0x82] sm:$0xff] %vm592, %v488
      %661 = vst.msk [vmem:[%s648 + $0x92] sm:$0xff] %vm592, %v493
      %662 = vst.msk [vmem:[%s648 + $0x9a] sm:$0xff] %vm592, %v498
      %663 = vst.msk [vmem:[%s648 + $0xaa] sm:$0xff] %vm592, %v503
      %664 = vst.msk [vmem:[%s648 + $0xb2] sm:$0xff] %vm592, %v508
      %665 = vst.msk [vmem:[%s648 + $0xc2] sm:$0xff] %vm592, %v513
      %666 = vst.msk [vmem:[%s648 + $0xca] sm:$0xff] %vm592, %v518
      %667 = vst.msk [vmem:[%s648 + $0xda] sm:$0xff] %vm592, %v523
      %668 = vst.msk [vmem:[%s648 + $0xe2] sm:$0xff] %vm592, %v528
      %669 = vst.msk [vmem:[%s648 + $0xf2] sm:$0xff] %vm592, %v533
      %670 = vst.msk [vmem:[%s648 + $0xfa] sm:$0xff] %vm592, %v538
      %671 = vst.msk [vmem:[%s648 + $0x10a] sm:$0xff] %vm592, %v543
      %672 = vst.msk [vmem:[%s648 + $0x112] sm:$0xff] %vm592, %v548
      %673 = vst.msk [vmem:[%s648 + $0x122] sm:$0xff] %vm592, %v553
      %674 = vst.msk [vmem:[%s648 + $0x12a] sm:$0xff] %vm592, %v558
      %675 = vst.msk [vmem:[%s648 + $0x13a] sm:$0xff] %vm592, %v563
      %676 = vst.msk [vmem:[%s648 + $0x142] sm:$0xff] %vm592, %v568
      %677 = vst.msk [vmem:[%s648 + $0x152] sm:$0xff] %vm592, %v573
      %678 = vst.msk [vmem:[%s648 + $0x15a] sm:$0xff] %vm592, %v578
      %679 = vst.msk [vmem:[%s648 + $0x16a] sm:$0xff] %vm592, %v583
      %680 = vst.msk [vmem:[%s648 + $0x172] sm:$0xff] %vm592, %v588
      %v681 = vld [vmem:[#allocation2] sm:$0xff]
      %v682 = vld [vmem:[#allocation2 + $0x8] sm:$0xff]
      %v683 = vld [vmem:[#allocation2 + $0x10] sm:$0xf]
      %v684 = vld [vmem:[#allocation2 + $0x18] sm:$0xff]
      %v685 = vld [vmem:[#allocation2 + $0x20] sm:$0xff]
      %v686 = vld [vmem:[#allocation2 + $0x28] sm:$0xf]
      %v687 = vld [vmem:[#allocation2 + $0x30] sm:$0xff]
      %v688 = vld [vmem:[#allocation2 + $0x38] sm:$0xff]
      %v689 = vld [vmem:[#allocation2 + $0x40] sm:$0xf]
      %v690 = vld [vmem:[#allocation2 + $0x48] sm:$0xff]
      %v691 = vld [vmem:[#allocation2 + $0x50] sm:$0xff]
      %v692 = vld [vmem:[#allocation2 + $0x58] sm:$0xf]
      %v693 = vld [vmem:[#allocation2 + $0x60] sm:$0xff]
      %v694 = vld [vmem:[#allocation2 + $0x68] sm:$0xff]
      %v695 = vld [vmem:[#allocation2 + $0x70] sm:$0xf]
      %v696 = vld [vmem:[#allocation2 + $0x78] sm:$0xff]
      %v697 = vld [vmem:[#allocation2 + $0x80] sm:$0xff]
      %v698 = vld [vmem:[#allocation2 + $0x88] sm:$0xf]
      %v699 = vld [vmem:[#allocation2 + $0x90] sm:$0xff]
      %v700 = vld [vmem:[#allocation2 + $0x98] sm:$0xff]
      %v701 = vld [vmem:[#allocation2 + $0xa0] sm:$0xf]
      %v702 = vld [vmem:[#allocation2 + $0xa8] sm:$0xff]
      %v703 = vld [vmem:[#allocation2 + $0xb0] sm:$0xff]
      %v704 = vld [vmem:[#allocation2 + $0xb8] sm:$0xf]
      %v705 = vld [vmem:[#allocation2 + $0xc0] sm:$0xff]
      %v706 = vld [vmem:[#allocation2 + $0xc8] sm:$0xff]
      %v707 = vld [vmem:[#allocation2 + $0xd0] sm:$0xf]
      %v708 = vld [vmem:[#allocation2 + $0xd8] sm:$0xff]
      %v709 = vld [vmem:[#allocation2 + $0xe0] sm:$0xff]
      %v710 = vld [vmem:[#allocation2 + $0xe8] sm:$0xf]
      %v711 = vld [vmem:[#allocation2 + $0xf0] sm:$0xff]
      %v712 = vld [vmem:[#allocation2 + $0xf8] sm:$0xff]
      %v713 = vld [vmem:[#allocation2 + $0x100] sm:$0xf]
      %v714 = vld [vmem:[#allocation2 + $0x108] sm:$0xff]
      %v715 = vld [vmem:[#allocation2 + $0x110] sm:$0xff]
      %v716 = vld [vmem:[#allocation2 + $0x118] sm:$0xf]
      %v717 = vld [vmem:[#allocation2 + $0x120] sm:$0xff]
      %v718 = vld [vmem:[#allocation2 + $0x128] sm:$0xff]
      %v719 = vld [vmem:[#allocation2 + $0x130] sm:$0xf]
      %v720 = vld [vmem:[#allocation2 + $0x138] sm:$0xff]
      %v721 = vld [vmem:[#allocation2 + $0x140] sm:$0xff]
      %v722 = vld [vmem:[#allocation2 + $0x148] sm:$0xf]
      %v723 = vld [vmem:[#allocation2 + $0x150] sm:$0xff]
      %v724 = vld [vmem:[#allocation2 + $0x158] sm:$0xff]
      %v725 = vld [vmem:[#allocation2 + $0x160] sm:$0xf]
      %v726 = vld [vmem:[#allocation2 + $0x168] sm:$0xff]
      %v727 = vld [vmem:[#allocation2 + $0x170] sm:$0xff]
      %v728 = vld [vmem:[#allocation2 + $0x178] sm:$0xf]
      %s729 = scalar_lea.vmem [#allocation2], 24
      %v730 = vld [vmem:[%s729] sm:$0xff]
      %v731 = vld [vmem:[%s729 + $0x8] sm:$0xff]
      %v732 = vld [vmem:[%s729 + $0x10] sm:$0xf]
      %v733 = vld [vmem:[%s729 + $0x18] sm:$0xff]
      %v734 = vld [vmem:[%s729 + $0x20] sm:$0xff]
      %v735 = vld [vmem:[%s729 + $0x28] sm:$0xf]
      %v736 = vld [vmem:[%s729 + $0x30] sm:$0xff]
      %v737 = vld [vmem:[%s729 + $0x38] sm:$0xff]
      %v738 = vld [vmem:[%s729 + $0x40] sm:$0xf]
      %v739 = vld [vmem:[%s729 + $0x48] sm:$0xff]
      %v740 = vld [vmem:[%s729 + $0x50] sm:$0xff]
      %v741 = vld [vmem:[%s729 + $0x58] sm:$0xf]
      %v742 = vld [vmem:[%s729 + $0x60] sm:$0xff]
      %v743 = vld [vmem:[%s729 + $0x68] sm:$0xff]
      %v744 = vld [vmem:[%s729 + $0x70] sm:$0xf]
      %v745 = vld [vmem:[%s729 + $0x78] sm:$0xff]
      %v746 = vld [vmem:[%s729 + $0x80] sm:$0xff]
      %v747 = vld [vmem:[%s729 + $0x88] sm:$0xf]
      %v748 = vld [vmem:[%s729 + $0x90] sm:$0xff]
      %v749 = vld [vmem:[%s729 + $0x98] sm:$0xff]
      %v750 = vld [vmem:[%s729 + $0xa0] sm:$0xf]
      %v751 = vld [vmem:[%s729 + $0xa8] sm:$0xff]
      %v752 = vld [vmem:[%s729 + $0xb0] sm:$0xff]
      %v753 = vld [vmem:[%s729 + $0xb8] sm:$0xf]
      %v754 = vld [vmem:[%s729 + $0xc0] sm:$0xff]
      %v755 = vld [vmem:[%s729 + $0xc8] sm:$0xff]
      %v756 = vld [vmem:[%s729 + $0xd0] sm:$0xf]
      %v757 = vld [vmem:[%s729 + $0xd8] sm:$0xff]
      %v758 = vld [vmem:[%s729 + $0xe0] sm:$0xff]
      %v759 = vld [vmem:[%s729 + $0xe8] sm:$0xf]
      %v760 = vld [vmem:[%s729 + $0xf0] sm:$0xff]
      %v761 = vld [vmem:[%s729 + $0xf8] sm:$0xff]
      %v762 = vld [vmem:[%s729 + $0x100] sm:$0xf]
      %v763 = vld [vmem:[%s729 + $0x108] sm:$0xff]
      %v764 = vld [vmem:[%s729 + $0x110] sm:$0xff]
      %v765 = vld [vmem:[%s729 + $0x118] sm:$0xf]
      %v766 = vld [vmem:[%s729 + $0x120] sm:$0xff]
      %v767 = vld [vmem:[%s729 + $0x128] sm:$0xff]
      %v768 = vld [vmem:[%s729 + $0x130] sm:$0xf]
      %v769 = vld [vmem:[%s729 + $0x138] sm:$0xff]
      %v770 = vld [vmem:[%s729 + $0x140] sm:$0xff]
      %v771 = vld [vmem:[%s729 + $0x148] sm:$0xf]
      %v772 = vld [vmem:[%s729 + $0x150] sm:$0xff]
      %v773 = vld [vmem:[%s729 + $0x158] sm:$0xff]
      %v774 = vld [vmem:[%s729 + $0x160] sm:$0xf]
      %v775 = vld [vmem:[%s729 + $0x168] sm:$0xff]
      %v776 = vld [vmem:[%s729 + $0x170] sm:$0xff]
      %v777 = vld [vmem:[%s729 + $0x178] sm:$0xf]
      %v778 = vmax.f32 %v681, %v730
      %v779 = vmax.f32 %v682, %v731
      %v780 = vmax.f32 %v683, %v732
      %v781 = vmax.f32 %v684, %v733
      %v782 = vmax.f32 %v685, %v734
      %v783 = vmax.f32 %v686, %v735
      %v784 = vmax.f32 %v687, %v736
      %v785 = vmax.f32 %v688, %v737
      %v786 = vmax.f32 %v689, %v738
      %v787 = vmax.f32 %v690, %v739
      %v788 = vmax.f32 %v691, %v740
      %v789 = vmax.f32 %v692, %v741
      %v790 = vmax.f32 %v693, %v742
      %v791 = vmax.f32 %v694, %v743
      %v792 = vmax.f32 %v695, %v744
      %v793 = vmax.f32 %v696, %v745
      %v794 = vmax.f32 %v697, %v746
      %v795 = vmax.f32 %v698, %v747
      %v796 = vmax.f32 %v699, %v748
      %v797 = vmax.f32 %v700, %v749
      %v798 = vmax.f32 %v701, %v750
      %v799 = vmax.f32 %v702, %v751
      %v800 = vmax.f32 %v703, %v752
      %v801 = vmax.f32 %v704, %v753
      %v802 = vmax.f32 %v705, %v754
      %v803 = vmax.f32 %v706, %v755
      %v804 = vmax.f32 %v707, %v756
      %v805 = vmax.f32 %v708, %v757
      %v806 = vmax.f32 %v709, %v758
      %v807 = vmax.f32 %v710, %v759
      %v808 = vmax.f32 %v711, %v760
      %v809 = vmax.f32 %v712, %v761
      %v810 = vmax.f32 %v713, %v762
      %v811 = vmax.f32 %v714, %v763
      %v812 = vmax.f32 %v715, %v764
      %v813 = vmax.f32 %v716, %v765
      %v814 = vmax.f32 %v717, %v766
      %v815 = vmax.f32 %v718, %v767
      %v816 = vmax.f32 %v719, %v768
      %v817 = vmax.f32 %v720, %v769
      %v818 = vmax.f32 %v721, %v770
      %v819 = vmax.f32 %v722, %v771
      %v820 = vmax.f32 %v723, %v772
      %v821 = vmax.f32 %v724, %v773
      %v822 = vmax.f32 %v725, %v774
      %v823 = vmax.f32 %v726, %v775
      %v824 = vmax.f32 %v727, %v776
      %v825 = vmax.f32 %v728, %v777
      %v826 = vld [vmem:[%s648] sm:$0xff]
      %v827 = vld [vmem:[%s648 + $0x8] sm:$0xff]
      %v828 = vld [vmem:[%s648 + $0x10] sm:$0xf]
      %v829 = vld [vmem:[%s648 + $0x18] sm:$0xff]
      %v830 = vld [vmem:[%s648 + $0x20] sm:$0xff]
      %v831 = vld [vmem:[%s648 + $0x28] sm:$0xf]
      %v832 = vld [vmem:[%s648 + $0x30] sm:$0xff]
      %v833 = vld [vmem:[%s648 + $0x38] sm:$0xff]
      %v834 = vld [vmem:[%s648 + $0x40] sm:$0xf]
      %v835 = vld [vmem:[%s648 + $0x48] sm:$0xff]
      %v836 = vld [vmem:[%s648 + $0x50] sm:$0xff]
      %v837 = vld [vmem:[%s648 + $0x58] sm:$0xf]
      %v838 = vld [vmem:[%s648 + $0x60] sm:$0xff]
      %v839 = vld [vmem:[%s648 + $0x68] sm:$0xff]
      %v840 = vld [vmem:[%s648 + $0x70] sm:$0xf]
      %v841 = vld [vmem:[%s648 + $0x78] sm:$0xff]
      %v842 = vld [vmem:[%s648 + $0x80] sm:$0xff]
      %v843 = vld [vmem:[%s648 + $0x88] sm:$0xf]
      %v844 = vld [vmem:[%s648 + $0x90] sm:$0xff]
      %v845 = vld [vmem:[%s648 + $0x98] sm:$0xff]
      %v846 = vld [vmem:[%s648 + $0xa0] sm:$0xf]
      %v847 = vld [vmem:[%s648 + $0xa8] sm:$0xff]
      %v848 = vld [vmem:[%s648 + $0xb0] sm:$0xff]
      %v849 = vld [vmem:[%s648 + $0xb8] sm:$0xf]
      %v850 = vld [vmem:[%s648 + $0xc0] sm:$0xff]
      %v851 = vld [vmem:[%s648 + $0xc8] sm:$0xff]
      %v852 = vld [vmem:[%s648 + $0xd0] sm:$0xf]
      %v853 = vld [vmem:[%s648 + $0xd8] sm:$0xff]
      %v854 = vld [vmem:[%s648 + $0xe0] sm:$0xff]
      %v855 = vld [vmem:[%s648 + $0xe8] sm:$0xf]
      %v856 = vld [vmem:[%s648 + $0xf0] sm:$0xff]
      %v857 = vld [vmem:[%s648 + $0xf8] sm:$0xff]
      %v858 = vld [vmem:[%s648 + $0x100] sm:$0xf]
      %v859 = vld [vmem:[%s648 + $0x108] sm:$0xff]
      %v860 = vld [vmem:[%s648 + $0x110] sm:$0xff]
      %v861 = vld [vmem:[%s648 + $0x118] sm:$0xf]
      %v862 = vld [vmem:[%s648 + $0x120] sm:$0xff]
      %v863 = vld [vmem:[%s648 + $0x128] sm:$0xff]
      %v864 = vld [vmem:[%s648 + $0x130] sm:$0xf]
      %v865 = vld [vmem:[%s648 + $0x138] sm:$0xff]
      %v866 = vld [vmem:[%s648 + $0x140] sm:$0xff]
      %v867 = vld [vmem:[%s648 + $0x148] sm:$0xf]
      %v868 = vld [vmem:[%s648 + $0x150] sm:$0xff]
      %v869 = vld [vmem:[%s648 + $0x158] sm:$0xff]
      %v870 = vld [vmem:[%s648 + $0x160] sm:$0xf]
      %v871 = vld [vmem:[%s648 + $0x168] sm:$0xff]
      %v872 = vld [vmem:[%s648 + $0x170] sm:$0xff]
      %v873 = vld [vmem:[%s648 + $0x178] sm:$0xf]
      %v874 = vmax.f32 %v778, %v826
      %v875 = vmax.f32 %v779, %v827
      %v876 = vmax.f32 %v780, %v828
      %v877 = vmax.f32 %v781, %v829
      %v878 = vmax.f32 %v782, %v830
      %v879 = vmax.f32 %v783, %v831
      %v880 = vmax.f32 %v784, %v832
      %v881 = vmax.f32 %v785, %v833
      %v882 = vmax.f32 %v786, %v834
      %v883 = vmax.f32 %v787, %v835
      %v884 = vmax.f32 %v788, %v836
      %v885 = vmax.f32 %v789, %v837
      %v886 = vmax.f32 %v790, %v838
      %v887 = vmax.f32 %v791, %v839
      %v888 = vmax.f32 %v792, %v840
      %v889 = vmax.f32 %v793, %v841
      %v890 = vmax.f32 %v794, %v842
      %v891 = vmax.f32 %v795, %v843
      %v892 = vmax.f32 %v796, %v844
      %v893 = vmax.f32 %v797, %v845
      %v894 = vmax.f32 %v798, %v846
      %v895 = vmax.f32 %v799, %v847
      %v896 = vmax.f32 %v800, %v848
      %v897 = vmax.f32 %v801, %v849
      %v898 = vmax.f32 %v802, %v850
      %v899 = vmax.f32 %v803, %v851
      %v900 = vmax.f32 %v804, %v852
      %v901 = vmax.f32 %v805, %v853
      %v902 = vmax.f32 %v806, %v854
      %v903 = vmax.f32 %v807, %v855
      %v904 = vmax.f32 %v808, %v856
      %v905 = vmax.f32 %v809, %v857
      %v906 = vmax.f32 %v810, %v858
      %v907 = vmax.f32 %v811, %v859
      %v908 = vmax.f32 %v812, %v860
      %v909 = vmax.f32 %v813, %v861
      %v910 = vmax.f32 %v814, %v862
      %v911 = vmax.f32 %v815, %v863
      %v912 = vmax.f32 %v816, %v864
      %v913 = vmax.f32 %v817, %v865
      %v914 = vmax.f32 %v818, %v866
      %v915 = vmax.f32 %v819, %v867
      %v916 = vmax.f32 %v820, %v868
      %v917 = vmax.f32 %v821, %v869
      %v918 = vmax.f32 %v822, %v870
      %v919 = vmax.f32 %v823, %v871
      %v920 = vmax.f32 %v824, %v872
      %v921 = vmax.f32 %v825, %v873
      %s922 = scalar_lea.vmem [#allocation2], 72
      %v923 = vld [vmem:[%s922] sm:$0xff]
      %v924 = vld [vmem:[%s922 + $0x8] sm:$0xff]
      %v925 = vld [vmem:[%s922 + $0x10] sm:$0xf]
      %v926 = vld [vmem:[%s922 + $0x18] sm:$0xff]
      %v927 = vld [vmem:[%s922 + $0x20] sm:$0xff]
      %v928 = vld [vmem:[%s922 + $0x28] sm:$0xf]
      %v929 = vld [vmem:[%s922 + $0x30] sm:$0xff]
      %v930 = vld [vmem:[%s922 + $0x38] sm:$0xff]
      %v931 = vld [vmem:[%s922 + $0x40] sm:$0xf]
      %v932 = vld [vmem:[%s922 + $0x48] sm:$0xff]
      %v933 = vld [vmem:[%s922 + $0x50] sm:$0xff]
      %v934 = vld [vmem:[%s922 + $0x58] sm:$0xf]
      %v935 = vld [vmem:[%s922 + $0x60] sm:$0xff]
      %v936 = vld [vmem:[%s922 + $0x68] sm:$0xff]
      %v937 = vld [vmem:[%s922 + $0x70] sm:$0xf]
      %v938 = vld [vmem:[%s922 + $0x78] sm:$0xff]
      %v939 = vld [vmem:[%s922 + $0x80] sm:$0xff]
      %v940 = vld [vmem:[%s922 + $0x88] sm:$0xf]
      %v941 = vld [vmem:[%s922 + $0x90] sm:$0xff]
      %v942 = vld [vmem:[%s922 + $0x98] sm:$0xff]
      %v943 = vld [vmem:[%s922 + $0xa0] sm:$0xf]
      %v944 = vld [vmem:[%s922 + $0xa8] sm:$0xff]
      %v945 = vld [vmem:[%s922 + $0xb0] sm:$0xff]
      %v946 = vld [vmem:[%s922 + $0xb8] sm:$0xf]
      %v947 = vld [vmem:[%s922 + $0xc0] sm:$0xff]
      %v948 = vld [vmem:[%s922 + $0xc8] sm:$0xff]
      %v949 = vld [vmem:[%s922 + $0xd0] sm:$0xf]
      %v950 = vld [vmem:[%s922 + $0xd8] sm:$0xff]
      %v951 = vld [vmem:[%s922 + $0xe0] sm:$0xff]
      %v952 = vld [vmem:[%s922 + $0xe8] sm:$0xf]
      %v953 = vld [vmem:[%s922 + $0xf0] sm:$0xff]
      %v954 = vld [vmem:[%s922 + $0xf8] sm:$0xff]
      %v955 = vld [vmem:[%s922 + $0x100] sm:$0xf]
      %v956 = vld [vmem:[%s922 + $0x108] sm:$0xff]
      %v957 = vld [vmem:[%s922 + $0x110] sm:$0xff]
      %v958 = vld [vmem:[%s922 + $0x118] sm:$0xf]
      %v959 = vld [vmem:[%s922 + $0x120] sm:$0xff]
      %v960 = vld [vmem:[%s922 + $0x128] sm:$0xff]
      %v961 = vld [vmem:[%s922 + $0x130] sm:$0xf]
      %v962 = vld [vmem:[%s922 + $0x138] sm:$0xff]
      %v963 = vld [vmem:[%s922 + $0x140] sm:$0xff]
      %v964 = vld [vmem:[%s922 + $0x148] sm:$0xf]
      %v965 = vld [vmem:[%s922 + $0x150] sm:$0xff]
      %v966 = vld [vmem:[%s922 + $0x158] sm:$0xff]
      %v967 = vld [vmem:[%s922 + $0x160] sm:$0xf]
      %v968 = vld [vmem:[%s922 + $0x168] sm:$0xff]
      %v969 = vld [vmem:[%s922 + $0x170] sm:$0xff]
      %v970 = vld [vmem:[%s922 + $0x178] sm:$0xf]
      %v971 = vmax.f32 %v874, %v923
      %v972 = vmax.f32 %v875, %v924
      %v973 = vmax.f32 %v876, %v925
      %v974 = vmax.f32 %v877, %v926
      %v975 = vmax.f32 %v878, %v927
      %v976 = vmax.f32 %v879, %v928
      %v977 = vmax.f32 %v880, %v929
      %v978 = vmax.f32 %v881, %v930
      %v979 = vmax.f32 %v882, %v931
      %v980 = vmax.f32 %v883, %v932
      %v981 = vmax.f32 %v884, %v933
      %v982 = vmax.f32 %v885, %v934
      %v983 = vmax.f32 %v886, %v935
      %v984 = vmax.f32 %v887, %v936
      %v985 = vmax.f32 %v888, %v937
      %v986 = vmax.f32 %v889, %v938
      %v987 = vmax.f32 %v890, %v939
      %v988 = vmax.f32 %v891, %v940
      %v989 = vmax.f32 %v892, %v941
      %v990 = vmax.f32 %v893, %v942
      %v991 = vmax.f32 %v894, %v943
      %v992 = vmax.f32 %v895, %v944
      %v993 = vmax.f32 %v896, %v945
      %v994 = vmax.f32 %v897, %v946
      %v995 = vmax.f32 %v898, %v947
      %v996 = vmax.f32 %v899, %v948
      %v997 = vmax.f32 %v900, %v949
      %v998 = vmax.f32 %v901, %v950
      %v999 = vmax.f32 %v902, %v951
      %v1000 = vmax.f32 %v903, %v952
      %v1001 = vmax.f32 %v904, %v953
      %v1002 = vmax.f32 %v905, %v954
      %v1003 = vmax.f32 %v906, %v955
      %v1004 = vmax.f32 %v907, %v956
      %v1005 = vmax.f32 %v908, %v957
      %v1006 = vmax.f32 %v909, %v958
      %v1007 = vmax.f32 %v910, %v959
      %v1008 = vmax.f32 %v911, %v960
      %v1009 = vmax.f32 %v912, %v961
      %v1010 = vmax.f32 %v913, %v962
      %v1011 = vmax.f32 %v914, %v963
      %v1012 = vmax.f32 %v915, %v964
      %v1013 = vmax.f32 %v916, %v965
      %v1014 = vmax.f32 %v917, %v966
      %v1015 = vmax.f32 %v918, %v967
      %v1016 = vmax.f32 %v919, %v968
      %v1017 = vmax.f32 %v920, %v969
      %v1018 = vmax.f32 %v921, %v970
      %s1019 = scalar_lea.vmem [#allocation2], 96
      %v1020 = vld [vmem:[%s1019] sm:$0xff]
      %v1021 = vld [vmem:[%s1019 + $0x8] sm:$0xff]
      %v1022 = vld [vmem:[%s1019 + $0x10] sm:$0xf]
      %v1023 = vld [vmem:[%s1019 + $0x18] sm:$0xff]
      %v1024 = vld [vmem:[%s1019 + $0x20] sm:$0xff]
      %v1025 = vld [vmem:[%s1019 + $0x28] sm:$0xf]
      %v1026 = vld [vmem:[%s1019 + $0x30] sm:$0xff]
      %v1027 = vld [vmem:[%s1019 + $0x38] sm:$0xff]
      %v1028 = vld [vmem:[%s1019 + $0x40] sm:$0xf]
      %v1029 = vld [vmem:[%s1019 + $0x48] sm:$0xff]
      %v1030 = vld [vmem:[%s1019 + $0x50] sm:$0xff]
      %v1031 = vld [vmem:[%s1019 + $0x58] sm:$0xf]
      %v1032 = vld [vmem:[%s1019 + $0x60] sm:$0xff]
      %v1033 = vld [vmem:[%s1019 + $0x68] sm:$0xff]
      %v1034 = vld [vmem:[%s1019 + $0x70] sm:$0xf]
      %v1035 = vld [vmem:[%s1019 + $0x78] sm:$0xff]
      %v1036 = vld [vmem:[%s1019 + $0x80] sm:$0xff]
      %v1037 = vld [vmem:[%s1019 + $0x88] sm:$0xf]
      %v1038 = vld [vmem:[%s1019 + $0x90] sm:$0xff]
      %v1039 = vld [vmem:[%s1019 + $0x98] sm:$0xff]
      %v1040 = vld [vmem:[%s1019 + $0xa0] sm:$0xf]
      %v1041 = vld [vmem:[%s1019 + $0xa8] sm:$0xff]
      %v1042 = vld [vmem:[%s1019 + $0xb0] sm:$0xff]
      %v1043 = vld [vmem:[%s1019 + $0xb8] sm:$0xf]
      %v1044 = vld [vmem:[%s1019 + $0xc0] sm:$0xff]
      %v1045 = vld [vmem:[%s1019 + $0xc8] sm:$0xff]
      %v1046 = vld [vmem:[%s1019 + $0xd0] sm:$0xf]
      %v1047 = vld [vmem:[%s1019 + $0xd8] sm:$0xff]
      %v1048 = vld [vmem:[%s1019 + $0xe0] sm:$0xff]
      %v1049 = vld [vmem:[%s1019 + $0xe8] sm:$0xf]
      %v1050 = vld [vmem:[%s1019 + $0xf0] sm:$0xff]
      %v1051 = vld [vmem:[%s1019 + $0xf8] sm:$0xff]
      %v1052 = vld [vmem:[%s1019 + $0x100] sm:$0xf]
      %v1053 = vld [vmem:[%s1019 + $0x108] sm:$0xff]
      %v1054 = vld [vmem:[%s1019 + $0x110] sm:$0xff]
      %v1055 = vld [vmem:[%s1019 + $0x118] sm:$0xf]
      %v1056 = vld [vmem:[%s1019 + $0x120] sm:$0xff]
      %v1057 = vld [vmem:[%s1019 + $0x128] sm:$0xff]
      %v1058 = vld [vmem:[%s1019 + $0x130] sm:$0xf]
      %v1059 = vld [vmem:[%s1019 + $0x138] sm:$0xff]
      %v1060 = vld [vmem:[%s1019 + $0x140] sm:$0xff]
      %v1061 = vld [vmem:[%s1019 + $0x148] sm:$0xf]
      %v1062 = vld [vmem:[%s1019 + $0x150] sm:$0xff]
      %v1063 = vld [vmem:[%s1019 + $0x158] sm:$0xff]
      %v1064 = vld [vmem:[%s1019 + $0x160] sm:$0xf]
      %v1065 = vld [vmem:[%s1019 + $0x168] sm:$0xff]
      %v1066 = vld [vmem:[%s1019 + $0x170] sm:$0xff]
      %v1067 = vld [vmem:[%s1019 + $0x178] sm:$0xf]
      %v1068 = vmax.f32 %v971, %v1020
      %v1069 = vmax.f32 %v972, %v1021
      %v1070 = vmax.f32 %v973, %v1022
      %v1071 = vmax.f32 %v974, %v1023
      %v1072 = vmax.f32 %v975, %v1024
      %v1073 = vmax.f32 %v976, %v1025
      %v1074 = vmax.f32 %v977, %v1026
      %v1075 = vmax.f32 %v978, %v1027
      %v1076 = vmax.f32 %v979, %v1028
      %v1077 = vmax.f32 %v980, %v1029
      %v1078 = vmax.f32 %v981, %v1030
      %v1079 = vmax.f32 %v982, %v1031
      %v1080 = vmax.f32 %v983, %v1032
      %v1081 = vmax.f32 %v984, %v1033
      %v1082 = vmax.f32 %v985, %v1034
      %v1083 = vmax.f32 %v986, %v1035
      %v1084 = vmax.f32 %v987, %v1036
      %v1085 = vmax.f32 %v988, %v1037
      %v1086 = vmax.f32 %v989, %v1038
      %v1087 = vmax.f32 %v990, %v1039
      %v1088 = vmax.f32 %v991, %v1040
      %v1089 = vmax.f32 %v992, %v1041
      %v1090 = vmax.f32 %v993, %v1042
      %v1091 = vmax.f32 %v994, %v1043
      %v1092 = vmax.f32 %v995, %v1044
      %v1093 = vmax.f32 %v996, %v1045
      %v1094 = vmax.f32 %v997, %v1046
      %v1095 = vmax.f32 %v998, %v1047
      %v1096 = vmax.f32 %v999, %v1048
      %v1097 = vmax.f32 %v1000, %v1049
      %v1098 = vmax.f32 %v1001, %v1050
      %v1099 = vmax.f32 %v1002, %v1051
      %v1100 = vmax.f32 %v1003, %v1052
      %v1101 = vmax.f32 %v1004, %v1053
      %v1102 = vmax.f32 %v1005, %v1054
      %v1103 = vmax.f32 %v1006, %v1055
      %v1104 = vmax.f32 %v1007, %v1056
      %v1105 = vmax.f32 %v1008, %v1057
      %v1106 = vmax.f32 %v1009, %v1058
      %v1107 = vmax.f32 %v1010, %v1059
      %v1108 = vmax.f32 %v1011, %v1060
      %v1109 = vmax.f32 %v1012, %v1061
      %v1110 = vmax.f32 %v1013, %v1062
      %v1111 = vmax.f32 %v1014, %v1063
      %v1112 = vmax.f32 %v1015, %v1064
      %v1113 = vmax.f32 %v1016, %v1065
      %v1114 = vmax.f32 %v1017, %v1066
      %v1115 = vmax.f32 %v1018, %v1067
      %vm1164 = vcmask 1046528
      %v1165 = vrot.slane %v1068, 1
      %v1166 = vrot.slane %v1069, 1
      %v1167 = vsel %vm1164, %v1165, %v1166
      %v1168 = vrot.slane %v1070, 1
      %v1169 = vsel %vm1164, %v1166, %v1168
      %v1170 = vrot.slane %v1071, 1
      %v1171 = vrot.slane %v1072, 1
      %v1172 = vsel %vm1164, %v1170, %v1171
      %v1173 = vrot.slane %v1073, 1
      %v1174 = vsel %vm1164, %v1171, %v1173
      %v1175 = vrot.slane %v1074, 1
      %v1176 = vrot.slane %v1075, 1
      %v1177 = vsel %vm1164, %v1175, %v1176
      %v1178 = vrot.slane %v1076, 1
      %v1179 = vsel %vm1164, %v1176, %v1178
      %v1180 = vrot.slane %v1077, 1
      %v1181 = vrot.slane %v1078, 1
      %v1182 = vsel %vm1164, %v1180, %v1181
      %v1183 = vrot.slane %v1079, 1
      %v1184 = vsel %vm1164, %v1181, %v1183
      %v1185 = vrot.slane %v1080, 1
      %v1186 = vrot.slane %v1081, 1
      %v1187 = vsel %vm1164, %v1185, %v1186
      %v1188 = vrot.slane %v1082, 1
      %v1189 = vsel %vm1164, %v1186, %v1188
      %v1190 = vrot.slane %v1083, 1
      %v1191 = vrot.slane %v1084, 1
      %v1192 = vsel %vm1164, %v1190, %v1191
      %v1193 = vrot.slane %v1085, 1
      %v1194 = vsel %vm1164, %v1191, %v1193
      %v1195 = vrot.slane %v1086, 1
      %v1196 = vrot.slane %v1087, 1
      %v1197 = vsel %vm1164, %v1195, %v1196
      %v1198 = vrot.slane %v1088, 1
      %v1199 = vsel %vm1164, %v1196, %v1198
      %v1200 = vrot.slane %v1089, 1
      %v1201 = vrot.slane %v1090, 1
      %v1202 = vsel %vm1164, %v1200, %v1201
      %v1203 = vrot.slane %v1091, 1
      %v1204 = vsel %vm1164, %v1201, %v1203
      %v1205 = vrot.slane %v1092, 1
      %v1206 = vrot.slane %v1093, 1
      %v1207 = vsel %vm1164, %v1205, %v1206
      %v1208 = vrot.slane %v1094, 1
      %v1209 = vsel %vm1164, %v1206, %v1208
      %v1210 = vrot.slane %v1095, 1
      %v1211 = vrot.slane %v1096, 1
      %v1212 = vsel %vm1164, %v1210, %v1211
      %v1213 = vrot.slane %v1097, 1
      %v1214 = vsel %vm1164, %v1211, %v1213
      %v1215 = vrot.slane %v1098, 1
      %v1216 = vrot.slane %v1099, 1
      %v1217 = vsel %vm1164, %v1215, %v1216
      %v1218 = vrot.slane %v1100, 1
      %v1219 = vsel %vm1164, %v1216, %v1218
      %v1220 = vrot.slane %v1101, 1
      %v1221 = vrot.slane %v1102, 1
      %v1222 = vsel %vm1164, %v1220, %v1221
      %v1223 = vrot.slane %v1103, 1
      %v1224 = vsel %vm1164, %v1221, %v1223
      %v1225 = vrot.slane %v1104, 1
      %v1226 = vrot.slane %v1105, 1
      %v1227 = vsel %vm1164, %v1225, %v1226
      %v1228 = vrot.slane %v1106, 1
      %v1229 = vsel %vm1164, %v1226, %v1228
      %v1230 = vrot.slane %v1107, 1
      %v1231 = vrot.slane %v1108, 1
      %v1232 = vsel %vm1164, %v1230, %v1231
      %v1233 = vrot.slane %v1109, 1
      %v1234 = vsel %vm1164, %v1231, %v1233
      %v1235 = vrot.slane %v1110, 1
      %v1236 = vrot.slane %v1111, 1
      %v1237 = vsel %vm1164, %v1235, %v1236
      %v1238 = vrot.slane %v1112, 1
      %v1239 = vsel %vm1164, %v1236, %v1238
      %v1240 = vrot.slane %v1113, 1
      %v1241 = vrot.slane %v1114, 1
      %v1242 = vsel %vm1164, %v1240, %v1241
      %v1243 = vrot.slane %v1115, 1
      %v1244 = vsel %vm1164, %v1241, %v1243
      %v1277 = vmax.f32 %v1068, %v1167
      %v1278 = vmax.f32 %v1069, %v1169
      %v1279 = vmax.f32 %v1071, %v1172
      %v1280 = vmax.f32 %v1072, %v1174
      %v1281 = vmax.f32 %v1074, %v1177
      %v1282 = vmax.f32 %v1075, %v1179
      %v1283 = vmax.f32 %v1077, %v1182
      %v1284 = vmax.f32 %v1078, %v1184
      %v1285 = vmax.f32 %v1080, %v1187
      %v1286 = vmax.f32 %v1081, %v1189
      %v1287 = vmax.f32 %v1083, %v1192
      %v1288 = vmax.f32 %v1084, %v1194
      %v1289 = vmax.f32 %v1086, %v1197
      %v1290 = vmax.f32 %v1087, %v1199
      %v1291 = vmax.f32 %v1089, %v1202
      %v1292 = vmax.f32 %v1090, %v1204
      %v1293 = vmax.f32 %v1092, %v1207
      %v1294 = vmax.f32 %v1093, %v1209
      %v1295 = vmax.f32 %v1095, %v1212
      %v1296 = vmax.f32 %v1096, %v1214
      %v1297 = vmax.f32 %v1098, %v1217
      %v1298 = vmax.f32 %v1099, %v1219
      %v1299 = vmax.f32 %v1101, %v1222
      %v1300 = vmax.f32 %v1102, %v1224
      %v1301 = vmax.f32 %v1104, %v1227
      %v1302 = vmax.f32 %v1105, %v1229
      %v1303 = vmax.f32 %v1107, %v1232
      %v1304 = vmax.f32 %v1108, %v1234
      %v1305 = vmax.f32 %v1110, %v1237
      %v1306 = vmax.f32 %v1111, %v1239
      %v1307 = vmax.f32 %v1113, %v1242
      %v1308 = vmax.f32 %v1114, %v1244
      %vm1309 = vcmask 1045504
      %v1310 = vrot.slane %v1068, 2
      %v1311 = vrot.slane %v1069, 2
      %v1312 = vsel %vm1309, %v1310, %v1311
      %v1313 = vrot.slane %v1070, 2
      %v1314 = vsel %vm1309, %v1311, %v1313
      %v1315 = vrot.slane %v1071, 2
      %v1316 = vrot.slane %v1072, 2
      %v1317 = vsel %vm1309, %v1315, %v1316
      %v1318 = vrot.slane %v1073, 2
      %v1319 = vsel %vm1309, %v1316, %v1318
      %v1320 = vrot.slane %v1074, 2
      %v1321 = vrot.slane %v1075, 2
      %v1322 = vsel %vm1309, %v1320, %v1321
      %v1323 = vrot.slane %v1076, 2
      %v1324 = vsel %vm1309, %v1321, %v1323
      %v1325 = vrot.slane %v1077, 2
      %v1326 = vrot.slane %v1078, 2
      %v1327 = vsel %vm1309, %v1325, %v1326
      %v1328 = vrot.slane %v1079, 2
      %v1329 = vsel %vm1309, %v1326, %v1328
      %v1330 = vrot.slane %v1080, 2
      %v1331 = vrot.slane %v1081, 2
      %v1332 = vsel %vm1309, %v1330, %v1331
      %v1333 = vrot.slane %v1082, 2
      %v1334 = vsel %vm1309, %v1331, %v1333
      %v1335 = vrot.slane %v1083, 2
      %v1336 = vrot.slane %v1084, 2
      %v1337 = vsel %vm1309, %v1335, %v1336
      %v1338 = vrot.slane %v1085, 2
      %v1339 = vsel %vm1309, %v1336, %v1338
      %v1340 = vrot.slane %v1086, 2
      %v1341 = vrot.slane %v1087, 2
      %v1342 = vsel %vm1309, %v1340, %v1341
      %v1343 = vrot.slane %v1088, 2
      %v1344 = vsel %vm1309, %v1341, %v1343
      %v1345 = vrot.slane %v1089, 2
      %v1346 = vrot.slane %v1090, 2
      %v1347 = vsel %vm1309, %v1345, %v1346
      %v1348 = vrot.slane %v1091, 2
      %v1349 = vsel %vm1309, %v1346, %v1348
      %v1350 = vrot.slane %v1092, 2
      %v1351 = vrot.slane %v1093, 2
      %v1352 = vsel %vm1309, %v1350, %v1351
      %v1353 = vrot.slane %v1094, 2
      %v1354 = vsel %vm1309, %v1351, %v1353
      %v1355 = vrot.slane %v1095, 2
      %v1356 = vrot.slane %v1096, 2
      %v1357 = vsel %vm1309, %v1355, %v1356
      %v1358 = vrot.slane %v1097, 2
      %v1359 = vsel %vm1309, %v1356, %v1358
      %v1360 = vrot.slane %v1098, 2
      %v1361 = vrot.slane %v1099, 2
      %v1362 = vsel %vm1309, %v1360, %v1361
      %v1363 = vrot.slane %v1100, 2
      %v1364 = vsel %vm1309, %v1361, %v1363
      %v1365 = vrot.slane %v1101, 2
      %v1366 = vrot.slane %v1102, 2
      %v1367 = vsel %vm1309, %v1365, %v1366
      %v1368 = vrot.slane %v1103, 2
      %v1369 = vsel %vm1309, %v1366, %v1368
      %v1370 = vrot.slane %v1104, 2
      %v1371 = vrot.slane %v1105, 2
      %v1372 = vsel %vm1309, %v1370, %v1371
      %v1373 = vrot.slane %v1106, 2
      %v1374 = vsel %vm1309, %v1371, %v1373
      %v1375 = vrot.slane %v1107, 2
      %v1376 = vrot.slane %v1108, 2
      %v1377 = vsel %vm1309, %v1375, %v1376
      %v1378 = vrot.slane %v1109, 2
      %v1379 = vsel %vm1309, %v1376, %v1378
      %v1380 = vrot.slane %v1110, 2
      %v1381 = vrot.slane %v1111, 2
      %v1382 = vsel %vm1309, %v1380, %v1381
      %v1383 = vrot.slane %v1112, 2
      %v1384 = vsel %vm1309, %v1381, %v1383
      %v1385 = vrot.slane %v1113, 2
      %v1386 = vrot.slane %v1114, 2
      %v1387 = vsel %vm1309, %v1385, %v1386
      %v1388 = vrot.slane %v1115, 2
      %v1389 = vsel %vm1309, %v1386, %v1388
      %v1422 = vmax.f32 %v1277, %v1312
      %v1423 = vmax.f32 %v1278, %v1314
      %v1424 = vmax.f32 %v1279, %v1317
      %v1425 = vmax.f32 %v1280, %v1319
      %v1426 = vmax.f32 %v1281, %v1322
      %v1427 = vmax.f32 %v1282, %v1324
      %v1428 = vmax.f32 %v1283, %v1327
      %v1429 = vmax.f32 %v1284, %v1329
      %v1430 = vmax.f32 %v1285, %v1332
      %v1431 = vmax.f32 %v1286, %v1334
      %v1432 = vmax.f32 %v1287, %v1337
      %v1433 = vmax.f32 %v1288, %v1339
      %v1434 = vmax.f32 %v1289, %v1342
      %v1435 = vmax.f32 %v1290, %v1344
      %v1436 = vmax.f32 %v1291, %v1347
      %v1437 = vmax.f32 %v1292, %v1349
      %v1438 = vmax.f32 %v1293, %v1352
      %v1439 = vmax.f32 %v1294, %v1354
      %v1440 = vmax.f32 %v1295, %v1357
      %v1441 = vmax.f32 %v1296, %v1359
      %v1442 = vmax.f32 %v1297, %v1362
      %v1443 = vmax.f32 %v1298, %v1364
      %v1444 = vmax.f32 %v1299, %v1367
      %v1445 = vmax.f32 %v1300, %v1369
      %v1446 = vmax.f32 %v1301, %v1372
      %v1447 = vmax.f32 %v1302, %v1374
      %v1448 = vmax.f32 %v1303, %v1377
      %v1449 = vmax.f32 %v1304, %v1379
      %v1450 = vmax.f32 %v1305, %v1382
      %v1451 = vmax.f32 %v1306, %v1384
      %v1452 = vmax.f32 %v1307, %v1387
      %v1453 = vmax.f32 %v1308, %v1389
      %vm1454 = vcmask 1044480
      %v1455 = vrot.slane %v1068, 3
      %v1456 = vrot.slane %v1069, 3
      %v1457 = vsel %vm1454, %v1455, %v1456
      %v1458 = vrot.slane %v1070, 3
      %v1459 = vsel %vm1454, %v1456, %v1458
      %v1460 = vrot.slane %v1071, 3
      %v1461 = vrot.slane %v1072, 3
      %v1462 = vsel %vm1454, %v1460, %v1461
      %v1463 = vrot.slane %v1073, 3
      %v1464 = vsel %vm1454, %v1461, %v1463
      %v1465 = vrot.slane %v1074, 3
      %v1466 = vrot.slane %v1075, 3
      %v1467 = vsel %vm1454, %v1465, %v1466
      %v1468 = vrot.slane %v1076, 3
      %v1469 = vsel %vm1454, %v1466, %v1468
      %v1470 = vrot.slane %v1077, 3
      %v1471 = vrot.slane %v1078, 3
      %v1472 = vsel %vm1454, %v1470, %v1471
      %v1473 = vrot.slane %v1079, 3
      %v1474 = vsel %vm1454, %v1471, %v1473
      %v1475 = vrot.slane %v1080, 3
      %v1476 = vrot.slane %v1081, 3
      %v1477 = vsel %vm1454, %v1475, %v1476
      %v1478 = vrot.slane %v1082, 3
      %v1479 = vsel %vm1454, %v1476, %v1478
      %v1480 = vrot.slane %v1083, 3
      %v1481 = vrot.slane %v1084, 3
      %v1482 = vsel %vm1454, %v1480, %v1481
      %v1483 = vrot.slane %v1085, 3
      %v1484 = vsel %vm1454, %v1481, %v1483
      %v1485 = vrot.slane %v1086, 3
      %v1486 = vrot.slane %v1087, 3
      %v1487 = vsel %vm1454, %v1485, %v1486
      %v1488 = vrot.slane %v1088, 3
      %v1489 = vsel %vm1454, %v1486, %v1488
      %v1490 = vrot.slane %v1089, 3
      %v1491 = vrot.slane %v1090, 3
      %v1492 = vsel %vm1454, %v1490, %v1491
      %v1493 = vrot.slane %v1091, 3
      %v1494 = vsel %vm1454, %v1491, %v1493
      %v1495 = vrot.slane %v1092, 3
      %v1496 = vrot.slane %v1093, 3
      %v1497 = vsel %vm1454, %v1495, %v1496
      %v1498 = vrot.slane %v1094, 3
      %v1499 = vsel %vm1454, %v1496, %v1498
      %v1500 = vrot.slane %v1095, 3
      %v1501 = vrot.slane %v1096, 3
      %v1502 = vsel %vm1454, %v1500, %v1501
      %v1503 = vrot.slane %v1097, 3
      %v1504 = vsel %vm1454, %v1501, %v1503
      %v1505 = vrot.slane %v1098, 3
      %v1506 = vrot.slane %v1099, 3
      %v1507 = vsel %vm1454, %v1505, %v1506
      %v1508 = vrot.slane %v1100, 3
      %v1509 = vsel %vm1454, %v1506, %v1508
      %v1510 = vrot.slane %v1101, 3
      %v1511 = vrot.slane %v1102, 3
      %v1512 = vsel %vm1454, %v1510, %v1511
      %v1513 = vrot.slane %v1103, 3
      %v1514 = vsel %vm1454, %v1511, %v1513
      %v1515 = vrot.slane %v1104, 3
      %v1516 = vrot.slane %v1105, 3
      %v1517 = vsel %vm1454, %v1515, %v1516
      %v1518 = vrot.slane %v1106, 3
      %v1519 = vsel %vm1454, %v1516, %v1518
      %v1520 = vrot.slane %v1107, 3
      %v1521 = vrot.slane %v1108, 3
      %v1522 = vsel %vm1454, %v1520, %v1521
      %v1523 = vrot.slane %v1109, 3
      %v1524 = vsel %vm1454, %v1521, %v1523
      %v1525 = vrot.slane %v1110, 3
      %v1526 = vrot.slane %v1111, 3
      %v1527 = vsel %vm1454, %v1525, %v1526
      %v1528 = vrot.slane %v1112, 3
      %v1529 = vsel %vm1454, %v1526, %v1528
      %v1530 = vrot.slane %v1113, 3
      %v1531 = vrot.slane %v1114, 3
      %v1532 = vsel %vm1454, %v1530, %v1531
      %v1533 = vrot.slane %v1115, 3
      %v1534 = vsel %vm1454, %v1531, %v1533
      %v1567 = vmax.f32 %v1422, %v1457
      %v1568 = vmax.f32 %v1423, %v1459
      %v1569 = vmax.f32 %v1424, %v1462
      %v1570 = vmax.f32 %v1425, %v1464
      %v1571 = vmax.f32 %v1426, %v1467
      %v1572 = vmax.f32 %v1427, %v1469
      %v1573 = vmax.f32 %v1428, %v1472
      %v1574 = vmax.f32 %v1429, %v1474
      %v1575 = vmax.f32 %v1430, %v1477
      %v1576 = vmax.f32 %v1431, %v1479
      %v1577 = vmax.f32 %v1432, %v1482
      %v1578 = vmax.f32 %v1433, %v1484
      %v1579 = vmax.f32 %v1434, %v1487
      %v1580 = vmax.f32 %v1435, %v1489
      %v1581 = vmax.f32 %v1436, %v1492
      %v1582 = vmax.f32 %v1437, %v1494
      %v1583 = vmax.f32 %v1438, %v1497
      %v1584 = vmax.f32 %v1439, %v1499
      %v1585 = vmax.f32 %v1440, %v1502
      %v1586 = vmax.f32 %v1441, %v1504
      %v1587 = vmax.f32 %v1442, %v1507
      %v1588 = vmax.f32 %v1443, %v1509
      %v1589 = vmax.f32 %v1444, %v1512
      %v1590 = vmax.f32 %v1445, %v1514
      %v1591 = vmax.f32 %v1446, %v1517
      %v1592 = vmax.f32 %v1447, %v1519
      %v1593 = vmax.f32 %v1448, %v1522
      %v1594 = vmax.f32 %v1449, %v1524
      %v1595 = vmax.f32 %v1450, %v1527
      %v1596 = vmax.f32 %v1451, %v1529
      %v1597 = vmax.f32 %v1452, %v1532
      %v1598 = vmax.f32 %v1453, %v1534
      %v1599 = vrot.slane %v1068, 4
      %v1600 = vrot.slane %v1069, 4
      %v1601 = vsel %vm362, %v1599, %v1600
      %v1602 = vrot.slane %v1070, 4
      %v1603 = vsel %vm362, %v1600, %v1602
      %v1604 = vrot.slane %v1071, 4
      %v1605 = vrot.slane %v1072, 4
      %v1606 = vsel %vm362, %v1604, %v1605
      %v1607 = vrot.slane %v1073, 4
      %v1608 = vsel %vm362, %v1605, %v1607
      %v1609 = vrot.slane %v1074, 4
      %v1610 = vrot.slane %v1075, 4
      %v1611 = vsel %vm362, %v1609, %v1610
      %v1612 = vrot.slane %v1076, 4
      %v1613 = vsel %vm362, %v1610, %v1612
      %v1614 = vrot.slane %v1077, 4
      %v1615 = vrot.slane %v1078, 4
      %v1616 = vsel %vm362, %v1614, %v1615
      %v1617 = vrot.slane %v1079, 4
      %v1618 = vsel %vm362, %v1615, %v1617
      %v1619 = vrot.slane %v1080, 4
      %v1620 = vrot.slane %v1081, 4
      %v1621 = vsel %vm362, %v1619, %v1620
      %v1622 = vrot.slane %v1082, 4
      %v1623 = vsel %vm362, %v1620, %v1622
      %v1624 = vrot.slane %v1083, 4
      %v1625 = vrot.slane %v1084, 4
      %v1626 = vsel %vm362, %v1624, %v1625
      %v1627 = vrot.slane %v1085, 4
      %v1628 = vsel %vm362, %v1625, %v1627
      %v1629 = vrot.slane %v1086, 4
      %v1630 = vrot.slane %v1087, 4
      %v1631 = vsel %vm362, %v1629, %v1630
      %v1632 = vrot.slane %v1088, 4
      %v1633 = vsel %vm362, %v1630, %v1632
      %v1634 = vrot.slane %v1089, 4
      %v1635 = vrot.slane %v1090, 4
      %v1636 = vsel %vm362, %v1634, %v1635
      %v1637 = vrot.slane %v1091, 4
      %v1638 = vsel %vm362, %v1635, %v1637
      %v1639 = vrot.slane %v1092, 4
      %v1640 = vrot.slane %v1093, 4
      %v1641 = vsel %vm362, %v1639, %v1640
      %v1642 = vrot.slane %v1094, 4
      %v1643 = vsel %vm362, %v1640, %v1642
      %v1644 = vrot.slane %v1095, 4
      %v1645 = vrot.slane %v1096, 4
      %v1646 = vsel %vm362, %v1644, %v1645
      %v1647 = vrot.slane %v1097, 4
      %v1648 = vsel %vm362, %v1645, %v1647
      %v1649 = vrot.slane %v1098, 4
      %v1650 = vrot.slane %v1099, 4
      %v1651 = vsel %vm362, %v1649, %v1650
      %v1652 = vrot.slane %v1100, 4
      %v1653 = vsel %vm362, %v1650, %v1652
      %v1654 = vrot.slane %v1101, 4
      %v1655 = vrot.slane %v1102, 4
      %v1656 = vsel %vm362, %v1654, %v1655
      %v1657 = vrot.slane %v1103, 4
      %v1658 = vsel %vm362, %v1655, %v1657
      %v1659 = vrot.slane %v1104, 4
      %v1660 = vrot.slane %v1105, 4
      %v1661 = vsel %vm362, %v1659, %v1660
      %v1662 = vrot.slane %v1106, 4
      %v1663 = vsel %vm362, %v1660, %v1662
      %v1664 = vrot.slane %v1107, 4
      %v1665 = vrot.slane %v1108, 4
      %v1666 = vsel %vm362, %v1664, %v1665
      %v1667 = vrot.slane %v1109, 4
      %v1668 = vsel %vm362, %v1665, %v1667
      %v1669 = vrot.slane %v1110, 4
      %v1670 = vrot.slane %v1111, 4
      %v1671 = vsel %vm362, %v1669, %v1670
      %v1672 = vrot.slane %v1112, 4
      %v1673 = vsel %vm362, %v1670, %v1672
      %v1674 = vrot.slane %v1113, 4
      %v1675 = vrot.slane %v1114, 4
      %v1676 = vsel %vm362, %v1674, %v1675
      %v1677 = vrot.slane %v1115, 4
      %v1678 = vsel %vm362, %v1675, %v1677
      %v1711 = vmax.f32 %v1567, %v1601
      %v1712 = vmax.f32 %v1568, %v1603
      %v1713 = vmax.f32 %v1569, %v1606
      %v1714 = vmax.f32 %v1570, %v1608
      %v1715 = vmax.f32 %v1571, %v1611
      %v1716 = vmax.f32 %v1572, %v1613
      %v1717 = vmax.f32 %v1573, %v1616
      %v1718 = vmax.f32 %v1574, %v1618
      %v1719 = vmax.f32 %v1575, %v1621
      %v1720 = vmax.f32 %v1576, %v1623
      %v1721 = vmax.f32 %v1577, %v1626
      %v1722 = vmax.f32 %v1578, %v1628
      %v1723 = vmax.f32 %v1579, %v1631
      %v1724 = vmax.f32 %v1580, %v1633
      %v1725 = vmax.f32 %v1581, %v1636
      %v1726 = vmax.f32 %v1582, %v1638
      %v1727 = vmax.f32 %v1583, %v1641
      %v1728 = vmax.f32 %v1584, %v1643
      %v1729 = vmax.f32 %v1585, %v1646
      %v1730 = vmax.f32 %v1586, %v1648
      %v1731 = vmax.f32 %v1587, %v1651
      %v1732 = vmax.f32 %v1588, %v1653
      %v1733 = vmax.f32 %v1589, %v1656
      %v1734 = vmax.f32 %v1590, %v1658
      %v1735 = vmax.f32 %v1591, %v1661
      %v1736 = vmax.f32 %v1592, %v1663
      %v1737 = vmax.f32 %v1593, %v1666
      %v1738 = vmax.f32 %v1594, %v1668
      %v1739 = vmax.f32 %v1595, %v1671
      %v1740 = vmax.f32 %v1596, %v1673
      %v1741 = vmax.f32 %v1597, %v1676
      %v1742 = vmax.f32 %v1598, %v1678
      %s1743 = scalar_lea.vmem %s3, 2
      %v1744 = vld [vmem:[%s1743] sm:$0x3]
      %v1746 = vsel %vm592, %v1711, 0
      %v1749 = vsel %vm592, %v1712, 0
      %v1752 = vsel %vm592, %v1713, 0
      %v1755 = vsel %vm592, %v1714, 0
      %v1758 = vsel %vm592, %v1715, 0
      %v1761 = vsel %vm592, %v1716, 0
      %v1764 = vsel %vm592, %v1717, 0
      %v1767 = vsel %vm592, %v1718, 0
      %v1770 = vsel %vm592, %v1719, 0
      %v1773 = vsel %vm592, %v1720, 0
      %v1776 = vsel %vm592, %v1721, 0
      %v1779 = vsel %vm592, %v1722, 0
      %v1782 = vsel %vm592, %v1723, 0
      %v1785 = vsel %vm592, %v1724, 0
      %v1788 = vsel %vm592, %v1725, 0
      %v1791 = vsel %vm592, %v1726, 0
      %v1794 = vsel %vm592, %v1727, 0
      %v1797 = vsel %vm592, %v1728, 0
      %v1800 = vsel %vm592, %v1729, 0
      %v1803 = vsel %vm592, %v1730, 0
      %v1806 = vsel %vm592, %v1731, 0
      %v1809 = vsel %vm592, %v1732, 0
      %v1812 = vsel %vm592, %v1733, 0
      %v1815 = vsel %vm592, %v1734, 0
      %v1818 = vsel %vm592, %v1735, 0
      %v1821 = vsel %vm592, %v1736, 0
      %v1824 = vsel %vm592, %v1737, 0
      %v1827 = vsel %vm592, %v1738, 0
      %v1830 = vsel %vm592, %v1739, 0
      %v1833 = vsel %vm592, %v1740, 0
      %v1836 = vsel %vm592, %v1741, 0
      %v1839 = vsel %vm592, %v1742, 0
      %vm1841 = vcmask 1041408
      %v1843 = vsel %vm1841, %v1744, 0
      %1845 = vmatprep.subr.mxu0 0.0
      %1846 = vmatpush1.msra.mxu0 0.0
      %1847 = vmatprep.subr.mxu0 0.0
      %1848 = vmatpush1.msra.mxu0 0.0
      %1849 = vmatprep.subr.mxu0 0.0
      %1850 = vmatpush1.msra.mxu0 0.0
      %1851 = vmatprep.subr.mxu0 0.0
      %1852 = vmatpush1.msra.mxu0 0.0
      %1853 = vmatprep.subr.mxu0 0.0
      %1854 = vmatpush1.msra.mxu0 0.0
      %1855 = vmatprep.subr.mxu0 0.0
      %1856 = vmatpush1.msra.mxu0 0.0
      %1857 = vmatprep.subr.mxu0 0.0
      %1858 = vmatpush1.msra.mxu0 0.0
      %1859 = vmatprep.subr.mxu0 0.0
      %1860 = vmatpush1.msra.mxu0 0.0
      %1861 = vmatprep.subr.mxu0 0.0
      %1862 = vmatpush1.msra.mxu0 0.0
      %1863 = vmatprep.subr.mxu0 0.0
      %1864 = vmatpush1.msra.mxu0 0.0
      %1865 = vmatprep.subr.mxu0 0.0
      %1866 = vmatpush1.msra.mxu0 0.0
      %1867 = vmatprep.subr.mxu0 0.0
      %1868 = vmatpush1.msra.mxu0 0.0
      %1869 = vmatprep.subr.mxu0 0.0
      %1870 = vmatpush1.msra.mxu0 0.0
      %1871 = vmatprep.subr.mxu0 0.0
      %1872 = vmatpush1.msra.mxu0 0.0
      %1873 = vmatprep.subr.mxu0 0.0
      %1874 = vmatpush1.msra.mxu0 0.0
      %1875 = vmatprep.subr.mxu0 0.0
      %1876 = vmatpush1.msra.mxu0 %v1843
      %1877 = vmatprep.subr.mxu0 0.0
      %1878 = vmatpush2.msra.mxu0 0.0
      %1879 = vmatprep.subr.mxu0 0.0
      %1880 = vmatpush2.msra.mxu0 0.0
      %1881 = vmatprep.subr.mxu0 0.0
      %1882 = vmatpush2.msra.mxu0 0.0
      %1883 = vmatprep.subr.mxu0 0.0
      %1884 = vmatpush2.msra.mxu0 0.0
      %1885 = vmatprep.subr.mxu0 0.0
      %1886 = vmatpush2.msra.mxu0 0.0
      %1887 = vmatprep.subr.mxu0 0.0
      %1888 = vmatpush2.msra.mxu0 0.0
      %1889 = vmatprep.subr.mxu0 0.0
      %1890 = vmatpush2.msra.mxu0 0.0
      %1891 = vmatprep.subr.mxu0 0.0
      %1892 = vmatpush2.msra.mxu0 0.0
      %1893 = vmatprep.subr.mxu0 0.0
      %1894 = vmatpush2.msra.mxu0 0.0
      %1895 = vmatprep.subr.mxu0 0.0
      %1896 = vmatpush2.msra.mxu0 0.0
      %1897 = vmatprep.subr.mxu0 0.0
      %1898 = vmatpush2.msra.mxu0 0.0
      %1899 = vmatprep.subr.mxu0 0.0
      %1900 = vmatpush2.msra.mxu0 0.0
      %1901 = vmatprep.subr.mxu0 0.0
      %1902 = vmatpush2.msra.mxu0 0.0
      %1903 = vmatprep.subr.mxu0 0.0
      %1904 = vmatpush2.msra.mxu0 0.0
      %1905 = vmatprep.subr.mxu0 0.0
      %1906 = vmatpush2.msra.mxu0 0.0
      %1907 = vmatprep.subr.mxu0 0.0
      %1908 = vmatpush2.msra.mxu0 0.0
      %1909 = vmatprep.mubr.f32.mxu0 0.0
      %1910 = vmatmul.mubr.f32.gmra.mxu0 %v1746
      %v1911 = vpop.f32.mrf.mxu0
      %v1912 = vadd.f32 0.0, %v1911
      %v1913 = vpop.f32.mrf.mxu0
      %1914 = vmatprep.mubr.f32.mxu0 0.0
      %1915 = vmatmul.mubr.f32.gmra.mxu0 %v1749
      %v1916 = vpop.f32.mrf.mxu0
      %v1917 = vadd.f32 0.0, %v1916
      %v1918 = vpop.f32.mrf.mxu0
      %1919 = vmatprep.mubr.f32.mxu0 0.0
      %1920 = vmatmul.mubr.f32.gmra.mxu0 %v1752
      %v1921 = vpop.f32.mrf.mxu0
      %v1922 = vadd.f32 0.0, %v1921
      %v1923 = vpop.f32.mrf.mxu0
      %1924 = vmatprep.mubr.f32.mxu0 0.0
      %1925 = vmatmul.mubr.f32.gmra.mxu0 %v1755
      %v1926 = vpop.f32.mrf.mxu0
      %v1927 = vadd.f32 0.0, %v1926
      %v1928 = vpop.f32.mrf.mxu0
      %1929 = vmatprep.mubr.f32.mxu0 0.0
      %1930 = vmatmul.mubr.f32.gmra.mxu0 %v1758
      %v1931 = vpop.f32.mrf.mxu0
      %v1932 = vadd.f32 0.0, %v1931
      %v1933 = vpop.f32.mrf.mxu0
      %1934 = vmatprep.mubr.f32.mxu0 0.0
      %1935 = vmatmul.mubr.f32.gmra.mxu0 %v1761
      %v1936 = vpop.f32.mrf.mxu0
      %v1937 = vadd.f32 0.0, %v1936
      %v1938 = vpop.f32.mrf.mxu0
      %1939 = vmatprep.mubr.f32.mxu0 0.0
      %1940 = vmatmul.mubr.f32.gmra.mxu0 %v1764
      %v1941 = vpop.f32.mrf.mxu0
      %v1942 = vadd.f32 0.0, %v1941
      %v1943 = vpop.f32.mrf.mxu0
      %1944 = vmatprep.mubr.f32.mxu0 0.0
      %1945 = vmatmul.mubr.f32.gmra.mxu0 %v1767
      %v1946 = vpop.f32.mrf.mxu0
      %v1947 = vadd.f32 0.0, %v1946
      %v1948 = vpop.f32.mrf.mxu0
      %1949 = vmatprep.mubr.f32.mxu0 0.0
      %1950 = vmatmul.mubr.f32.gmra.mxu0 %v1770
      %v1951 = vpop.f32.mrf.mxu0
      %v1952 = vadd.f32 0.0, %v1951
      %v1953 = vpop.f32.mrf.mxu0
      %1954 = vmatprep.mubr.f32.mxu0 0.0
      %1955 = vmatmul.mubr.f32.gmra.mxu0 %v1773
      %v1956 = vpop.f32.mrf.mxu0
      %v1957 = vadd.f32 0.0, %v1956
      %v1958 = vpop.f32.mrf.mxu0
      %1959 = vmatprep.mubr.f32.mxu0 0.0
      %1960 = vmatmul.mubr.f32.gmra.mxu0 %v1776
      %v1961 = vpop.f32.mrf.mxu0
      %v1962 = vadd.f32 0.0, %v1961
      %v1963 = vpop.f32.mrf.mxu0
      %1964 = vmatprep.mubr.f32.mxu0 0.0
      %1965 = vmatmul.mubr.f32.gmra.mxu0 %v1779
      %v1966 = vpop.f32.mrf.mxu0
      %v1967 = vadd.f32 0.0, %v1966
      %v1968 = vpop.f32.mrf.mxu0
      %1969 = vmatprep.mubr.f32.mxu0 0.0
      %1970 = vmatmul.mubr.f32.gmra.mxu0 %v1782
      %v1971 = vpop.f32.mrf.mxu0
      %v1972 = vadd.f32 0.0, %v1971
      %v1973 = vpop.f32.mrf.mxu0
      %1974 = vmatprep.mubr.f32.mxu0 0.0
      %1975 = vmatmul.mubr.f32.gmra.mxu0 %v1785
      %v1976 = vpop.f32.mrf.mxu0
      %v1977 = vadd.f32 0.0, %v1976
      %v1978 = vpop.f32.mrf.mxu0
      %1979 = vmatprep.mubr.f32.mxu0 0.0
      %1980 = vmatmul.mubr.f32.gmra.mxu0 %v1788
      %v1981 = vpop.f32.mrf.mxu0
      %v1982 = vadd.f32 0.0, %v1981
      %v1983 = vpop.f32.mrf.mxu0
      %1984 = vmatprep.mubr.f32.mxu0 0.0
      %1985 = vmatmul.mubr.f32.gmra.mxu0 %v1791
      %v1986 = vpop.f32.mrf.mxu0
      %v1987 = vadd.f32 0.0, %v1986
      %v1988 = vpop.f32.mrf.mxu0
      %1989 = vmatprep.mubr.f32.mxu0 0.0
      %1990 = vmatmul.mubr.f32.gmra.mxu0 %v1794
      %v1991 = vpop.f32.mrf.mxu0
      %v1992 = vadd.f32 0.0, %v1991
      %v1993 = vpop.f32.mrf.mxu0
      %1994 = vmatprep.mubr.f32.mxu0 0.0
      %1995 = vmatmul.mubr.f32.gmra.mxu0 %v1797
      %v1996 = vpop.f32.mrf.mxu0
      %v1997 = vadd.f32 0.0, %v1996
      %v1998 = vpop.f32.mrf.mxu0
      %1999 = vmatprep.mubr.f32.mxu0 0.0
      %2000 = vmatmul.mubr.f32.gmra.mxu0 %v1800
      %v2001 = vpop.f32.mrf.mxu0
      %v2002 = vadd.f32 0.0, %v2001
      %v2003 = vpop.f32.mrf.mxu0
      %2004 = vmatprep.mubr.f32.mxu0 0.0
      %2005 = vmatmul.mubr.f32.gmra.mxu0 %v1803
      %v2006 = vpop.f32.mrf.mxu0
      %v2007 = vadd.f32 0.0, %v2006
      %v2008 = vpop.f32.mrf.mxu0
      %2009 = vmatprep.mubr.f32.mxu0 0.0
      %2010 = vmatmul.mubr.f32.gmra.mxu0 %v1806
      %v2011 = vpop.f32.mrf.mxu0
      %v2012 = vadd.f32 0.0, %v2011
      %v2013 = vpop.f32.mrf.mxu0
      %2014 = vmatprep.mubr.f32.mxu0 0.0
      %2015 = vmatmul.mubr.f32.gmra.mxu0 %v1809
      %v2016 = vpop.f32.mrf.mxu0
      %v2017 = vadd.f32 0.0, %v2016
      %v2018 = vpop.f32.mrf.mxu0
      %2019 = vmatprep.mubr.f32.mxu0 0.0
      %2020 = vmatmul.mubr.f32.gmra.mxu0 %v1812
      %v2021 = vpop.f32.mrf.mxu0
      %v2022 = vadd.f32 0.0, %v2021
      %v2023 = vpop.f32.mrf.mxu0
      %2024 = vmatprep.mubr.f32.mxu0 0.0
      %2025 = vmatmul.mubr.f32.gmra.mxu0 %v1815
      %v2026 = vpop.f32.mrf.mxu0
      %v2027 = vadd.f32 0.0, %v2026
      %v2028 = vpop.f32.mrf.mxu0
      %2029 = vmatprep.mubr.f32.mxu0 0.0
      %2030 = vmatmul.mubr.f32.gmra.mxu0 %v1818
      %v2031 = vpop.f32.mrf.mxu0
      %v2032 = vadd.f32 0.0, %v2031
      %v2033 = vpop.f32.mrf.mxu0
      %2034 = vmatprep.mubr.f32.mxu0 0.0
      %2035 = vmatmul.mubr.f32.gmra.mxu0 %v1821
      %v2036 = vpop.f32.mrf.mxu0
      %v2037 = vadd.f32 0.0, %v2036
      %v2038 = vpop.f32.mrf.mxu0
      %2039 = vmatprep.mubr.f32.mxu0 0.0
      %2040 = vmatmul.mubr.f32.gmra.mxu0 %v1824
      %v2041 = vpop.f32.mrf.mxu0
      %v2042 = vadd.f32 0.0, %v2041
      %v2043 = vpop.f32.mrf.mxu0
      %2044 = vmatprep.mubr.f32.mxu0 0.0
      %2045 = vmatmul.mubr.f32.gmra.mxu0 %v1827
      %v2046 = vpop.f32.mrf.mxu0
      %v2047 = vadd.f32 0.0, %v2046
      %v2048 = vpop.f32.mrf.mxu0
      %2049 = vmatprep.mubr.f32.mxu0 0.0
      %2050 = vmatmul.mubr.f32.gmra.mxu0 %v1830
      %v2051 = vpop.f32.mrf.mxu0
      %v2052 = vadd.f32 0.0, %v2051
      %v2053 = vpop.f32.mrf.mxu0
      %2054 = vmatprep.mubr.f32.mxu0 0.0
      %2055 = vmatmul.mubr.f32.gmra.mxu0 %v1833
      %v2056 = vpop.f32.mrf.mxu0
      %v2057 = vadd.f32 0.0, %v2056
      %v2058 = vpop.f32.mrf.mxu0
      %2059 = vmatprep.mubr.f32.mxu0 0.0
      %2060 = vmatmul.mubr.f32.gmra.mxu0 %v1836
      %v2061 = vpop.f32.mrf.mxu0
      %v2062 = vadd.f32 0.0, %v2061
      %v2063 = vpop.f32.mrf.mxu0
      %2064 = vmatprep.mubr.f32.mxu0 0.0
      %2065 = vmatmul.mubr.f32.gmra.mxu0 %v1839
      %v2066 = vpop.f32.mrf.mxu0
      %v2067 = vadd.f32 0.0, %v2066
      %v2068 = vpop.f32.mrf.mxu0
      %2069 = vdwg.mxu0
      %v2071 = vsel %vm592, %v433, 0
      %v2074 = vsel %vm592, %v438, 0
      %v2077 = vsel %vm592, %v443, 0
      %v2080 = vsel %vm592, %v448, 0
      %v2083 = vsel %vm592, %v453, 0
      %v2086 = vsel %vm592, %v458, 0
      %v2089 = vsel %vm592, %v463, 0
      %v2092 = vsel %vm592, %v468, 0
      %v2095 = vsel %vm592, %v473, 0
      %v2098 = vsel %vm592, %v478, 0
      %v2101 = vsel %vm592, %v483, 0
      %v2104 = vsel %vm592, %v488, 0
      %v2107 = vsel %vm592, %v493, 0
      %v2110 = vsel %vm592, %v498, 0
      %v2113 = vsel %vm592, %v503, 0
      %v2116 = vsel %vm592, %v508, 0
      %v2119 = vsel %vm592, %v513, 0
      %v2122 = vsel %vm592, %v518, 0
      %v2125 = vsel %vm592, %v523, 0
      %v2128 = vsel %vm592, %v528, 0
      %v2131 = vsel %vm592, %v533, 0
      %v2134 = vsel %vm592, %v538, 0
      %v2137 = vsel %vm592, %v543, 0
      %v2140 = vsel %vm592, %v548, 0
      %v2143 = vsel %vm592, %v553, 0
      %v2146 = vsel %vm592, %v558, 0
      %v2149 = vsel %vm592, %v563, 0
      %v2152 = vsel %vm592, %v568, 0
      %v2155 = vsel %vm592, %v573, 0
      %v2158 = vsel %vm592, %v578, 0
      %v2161 = vsel %vm592, %v583, 0
      %v2164 = vsel %vm592, %v588, 0
      %v2167 = vsel %vm1841, %v591, 0
      %2169 = vmatprep.subr.mxu0 0.0
      %2170 = vmatpush1.msra.mxu0 0.0
      %2171 = vmatprep.subr.mxu0 0.0
      %2172 = vmatpush1.msra.mxu0 0.0
      %2173 = vmatprep.subr.mxu0 0.0
      %2174 = vmatpush1.msra.mxu0 0.0
      %2175 = vmatprep.subr.mxu0 0.0
      %2176 = vmatpush1.msra.mxu0 0.0
      %2177 = vmatprep.subr.mxu0 0.0
      %2178 = vmatpush1.msra.mxu0 0.0
      %2179 = vmatprep.subr.mxu0 0.0
      %2180 = vmatpush1.msra.mxu0 0.0
      %2181 = vmatprep.subr.mxu0 0.0
      %2182 = vmatpush1.msra.mxu0 0.0
      %2183 = vmatprep.subr.mxu0 0.0
      %2184 = vmatpush1.msra.mxu0 0.0
      %2185 = vmatprep.subr.mxu0 0.0
      %2186 = vmatpush1.msra.mxu0 0.0
      %2187 = vmatprep.subr.mxu0 0.0
      %2188 = vmatpush1.msra.mxu0 0.0
      %2189 = vmatprep.subr.mxu0 0.0
      %2190 = vmatpush1.msra.mxu0 0.0
      %2191 = vmatprep.subr.mxu0 0.0
      %2192 = vmatpush1.msra.mxu0 0.0
      %2193 = vmatprep.subr.mxu0 0.0
      %2194 = vmatpush1.msra.mxu0 0.0
      %2195 = vmatprep.subr.mxu0 0.0
      %2196 = vmatpush1.msra.mxu0 0.0
      %2197 = vmatprep.subr.mxu0 0.0
      %2198 = vmatpush1.msra.mxu0 0.0
      %2199 = vmatprep.subr.mxu0 0.0
      %2200 = vmatpush1.msra.mxu0 %v2167
      %2201 = vmatprep.subr.mxu0 0.0
      %2202 = vmatpush2.msra.mxu0 0.0
      %2203 = vmatprep.subr.mxu0 0.0
      %2204 = vmatpush2.msra.mxu0 0.0
      %2205 = vmatprep.subr.mxu0 0.0
      %2206 = vmatpush2.msra.mxu0 0.0
      %2207 = vmatprep.subr.mxu0 0.0
      %2208 = vmatpush2.msra.mxu0 0.0
      %2209 = vmatprep.subr.mxu0 0.0
      %2210 = vmatpush2.msra.mxu0 0.0
      %2211 = vmatprep.subr.mxu0 0.0
      %2212 = vmatpush2.msra.mxu0 0.0
      %2213 = vmatprep.subr.mxu0 0.0
      %2214 = vmatpush2.msra.mxu0 0.0
      %2215 = vmatprep.subr.mxu0 0.0
      %2216 = vmatpush2.msra.mxu0 0.0
      %2217 = vmatprep.subr.mxu0 0.0
      %2218 = vmatpush2.msra.mxu0 0.0
      %2219 = vmatprep.subr.mxu0 0.0
      %2220 = vmatpush2.msra.mxu0 0.0
      %2221 = vmatprep.subr.mxu0 0.0
      %2222 = vmatpush2.msra.mxu0 0.0
      %2223 = vmatprep.subr.mxu0 0.0
      %2224 = vmatpush2.msra.mxu0 0.0
      %2225 = vmatprep.subr.mxu0 0.0
      %2226 = vmatpush2.msra.mxu0 0.0
      %2227 = vmatprep.subr.mxu0 0.0
      %2228 = vmatpush2.msra.mxu0 0.0
      %2229 = vmatprep.subr.mxu0 0.0
      %2230 = vmatpush2.msra.mxu0 0.0
      %2231 = vmatprep.subr.mxu0 0.0
      %2232 = vmatpush2.msra.mxu0 0.0
      %2233 = vmatprep.mubr.f32.mxu0 0.0
      %2234 = vmatmul.mubr.f32.gmra.mxu0 %v2071
      %v2235 = vpop.f32.mrf.mxu0
      %v2236 = vadd.f32 %v1912, %v2235
      %v2237 = vpop.f32.mrf.mxu0
      %2238 = vmatprep.mubr.f32.mxu0 0.0
      %2239 = vmatmul.mubr.f32.gmra.mxu0 %v2074
      %v2240 = vpop.f32.mrf.mxu0
      %v2241 = vadd.f32 %v1917, %v2240
      %v2242 = vpop.f32.mrf.mxu0
      %2243 = vmatprep.mubr.f32.mxu0 0.0
      %2244 = vmatmul.mubr.f32.gmra.mxu0 %v2077
      %v2245 = vpop.f32.mrf.mxu0
      %v2246 = vadd.f32 %v1922, %v2245
      %v2247 = vpop.f32.mrf.mxu0
      %2248 = vmatprep.mubr.f32.mxu0 0.0
      %2249 = vmatmul.mubr.f32.gmra.mxu0 %v2080
      %v2250 = vpop.f32.mrf.mxu0
      %v2251 = vadd.f32 %v1927, %v2250
      %v2252 = vpop.f32.mrf.mxu0
      %2253 = vmatprep.mubr.f32.mxu0 0.0
      %2254 = vmatmul.mubr.f32.gmra.mxu0 %v2083
      %v2255 = vpop.f32.mrf.mxu0
      %v2256 = vadd.f32 %v1932, %v2255
      %v2257 = vpop.f32.mrf.mxu0
      %2258 = vmatprep.mubr.f32.mxu0 0.0
      %2259 = vmatmul.mubr.f32.gmra.mxu0 %v2086
      %v2260 = vpop.f32.mrf.mxu0
      %v2261 = vadd.f32 %v1937, %v2260
      %v2262 = vpop.f32.mrf.mxu0
      %2263 = vmatprep.mubr.f32.mxu0 0.0
      %2264 = vmatmul.mubr.f32.gmra.mxu0 %v2089
      %v2265 = vpop.f32.mrf.mxu0
      %v2266 = vadd.f32 %v1942, %v2265
      %v2267 = vpop.f32.mrf.mxu0
      %2268 = vmatprep.mubr.f32.mxu0 0.0
      %2269 = vmatmul.mubr.f32.gmra.mxu0 %v2092
      %v2270 = vpop.f32.mrf.mxu0
      %v2271 = vadd.f32 %v1947, %v2270
      %v2272 = vpop.f32.mrf.mxu0
      %2273 = vmatprep.mubr.f32.mxu0 0.0
      %2274 = vmatmul.mubr.f32.gmra.mxu0 %v2095
      %v2275 = vpop.f32.mrf.mxu0
      %v2276 = vadd.f32 %v1952, %v2275
      %v2277 = vpop.f32.mrf.mxu0
      %2278 = vmatprep.mubr.f32.mxu0 0.0
      %2279 = vmatmul.mubr.f32.gmra.mxu0 %v2098
      %v2280 = vpop.f32.mrf.mxu0
      %v2281 = vadd.f32 %v1957, %v2280
      %v2282 = vpop.f32.mrf.mxu0
      %2283 = vmatprep.mubr.f32.mxu0 0.0
      %2284 = vmatmul.mubr.f32.gmra.mxu0 %v2101
      %v2285 = vpop.f32.mrf.mxu0
      %v2286 = vadd.f32 %v1962, %v2285
      %v2287 = vpop.f32.mrf.mxu0
      %2288 = vmatprep.mubr.f32.mxu0 0.0
      %2289 = vmatmul.mubr.f32.gmra.mxu0 %v2104
      %v2290 = vpop.f32.mrf.mxu0
      %v2291 = vadd.f32 %v1967, %v2290
      %v2292 = vpop.f32.mrf.mxu0
      %2293 = vmatprep.mubr.f32.mxu0 0.0
      %2294 = vmatmul.mubr.f32.gmra.mxu0 %v2107
      %v2295 = vpop.f32.mrf.mxu0
      %v2296 = vadd.f32 %v1972, %v2295
      %v2297 = vpop.f32.mrf.mxu0
      %2298 = vmatprep.mubr.f32.mxu0 0.0
      %2299 = vmatmul.mubr.f32.gmra.mxu0 %v2110
      %v2300 = vpop.f32.mrf.mxu0
      %v2301 = vadd.f32 %v1977, %v2300
      %v2302 = vpop.f32.mrf.mxu0
      %2303 = vmatprep.mubr.f32.mxu0 0.0
      %2304 = vmatmul.mubr.f32.gmra.mxu0 %v2113
      %v2305 = vpop.f32.mrf.mxu0
      %v2306 = vadd.f32 %v1982, %v2305
      %v2307 = vpop.f32.mrf.mxu0
      %2308 = vmatprep.mubr.f32.mxu0 0.0
      %2309 = vmatmul.mubr.f32.gmra.mxu0 %v2116
      %v2310 = vpop.f32.mrf.mxu0
      %v2311 = vadd.f32 %v1987, %v2310
      %v2312 = vpop.f32.mrf.mxu0
      %2313 = vmatprep.mubr.f32.mxu0 0.0
      %2314 = vmatmul.mubr.f32.gmra.mxu0 %v2119
      %v2315 = vpop.f32.mrf.mxu0
      %v2316 = vadd.f32 %v1992, %v2315
      %v2317 = vpop.f32.mrf.mxu0
      %2318 = vmatprep.mubr.f32.mxu0 0.0
      %2319 = vmatmul.mubr.f32.gmra.mxu0 %v2122
      %v2320 = vpop.f32.mrf.mxu0
      %v2321 = vadd.f32 %v1997, %v2320
      %v2322 = vpop.f32.mrf.mxu0
      %2323 = vmatprep.mubr.f32.mxu0 0.0
      %2324 = vmatmul.mubr.f32.gmra.mxu0 %v2125
      %v2325 = vpop.f32.mrf.mxu0
      %v2326 = vadd.f32 %v2002, %v2325
      %v2327 = vpop.f32.mrf.mxu0
      %2328 = vmatprep.mubr.f32.mxu0 0.0
      %2329 = vmatmul.mubr.f32.gmra.mxu0 %v2128
      %v2330 = vpop.f32.mrf.mxu0
      %v2331 = vadd.f32 %v2007, %v2330
      %v2332 = vpop.f32.mrf.mxu0
      %2333 = vmatprep.mubr.f32.mxu0 0.0
      %2334 = vmatmul.mubr.f32.gmra.mxu0 %v2131
      %v2335 = vpop.f32.mrf.mxu0
      %v2336 = vadd.f32 %v2012, %v2335
      %v2337 = vpop.f32.mrf.mxu0
      %2338 = vmatprep.mubr.f32.mxu0 0.0
      %2339 = vmatmul.mubr.f32.gmra.mxu0 %v2134
      %v2340 = vpop.f32.mrf.mxu0
      %v2341 = vadd.f32 %v2017, %v2340
      %v2342 = vpop.f32.mrf.mxu0
      %2343 = vmatprep.mubr.f32.mxu0 0.0
      %2344 = vmatmul.mubr.f32.gmra.mxu0 %v2137
      %v2345 = vpop.f32.mrf.mxu0
      %v2346 = vadd.f32 %v2022, %v2345
      %v2347 = vpop.f32.mrf.mxu0
      %2348 = vmatprep.mubr.f32.mxu0 0.0
      %2349 = vmatmul.mubr.f32.gmra.mxu0 %v2140
      %v2350 = vpop.f32.mrf.mxu0
      %v2351 = vadd.f32 %v2027, %v2350
      %v2352 = vpop.f32.mrf.mxu0
      %2353 = vmatprep.mubr.f32.mxu0 0.0
      %2354 = vmatmul.mubr.f32.gmra.mxu0 %v2143
      %v2355 = vpop.f32.mrf.mxu0
      %v2356 = vadd.f32 %v2032, %v2355
      %v2357 = vpop.f32.mrf.mxu0
      %2358 = vmatprep.mubr.f32.mxu0 0.0
      %2359 = vmatmul.mubr.f32.gmra.mxu0 %v2146
      %v2360 = vpop.f32.mrf.mxu0
      %v2361 = vadd.f32 %v2037, %v2360
      %v2362 = vpop.f32.mrf.mxu0
      %2363 = vmatprep.mubr.f32.mxu0 0.0
      %2364 = vmatmul.mubr.f32.gmra.mxu0 %v2149
      %v2365 = vpop.f32.mrf.mxu0
      %v2366 = vadd.f32 %v2042, %v2365
      %v2367 = vpop.f32.mrf.mxu0
      %2368 = vmatprep.mubr.f32.mxu0 0.0
      %2369 = vmatmul.mubr.f32.gmra.mxu0 %v2152
      %v2370 = vpop.f32.mrf.mxu0
      %v2371 = vadd.f32 %v2047, %v2370
      %v2372 = vpop.f32.mrf.mxu0
      %2373 = vmatprep.mubr.f32.mxu0 0.0
      %2374 = vmatmul.mubr.f32.gmra.mxu0 %v2155
      %v2375 = vpop.f32.mrf.mxu0
      %v2376 = vadd.f32 %v2052, %v2375
      %v2377 = vpop.f32.mrf.mxu0
      %2378 = vmatprep.mubr.f32.mxu0 0.0
      %2379 = vmatmul.mubr.f32.gmra.mxu0 %v2158
      %v2380 = vpop.f32.mrf.mxu0
      %v2381 = vadd.f32 %v2057, %v2380
      %v2382 = vpop.f32.mrf.mxu0
      %2383 = vmatprep.mubr.f32.mxu0 0.0
      %2384 = vmatmul.mubr.f32.gmra.mxu0 %v2161
      %v2385 = vpop.f32.mrf.mxu0
      %v2386 = vadd.f32 %v2062, %v2385
      %v2387 = vpop.f32.mrf.mxu0
      %2388 = vmatprep.mubr.f32.mxu0 0.0
      %2389 = vmatmul.mubr.f32.gmra.mxu0 %v2164
      %v2390 = vpop.f32.mrf.mxu0
      %v2391 = vadd.f32 %v2067, %v2390
      %v2392 = vpop.f32.mrf.mxu0
      %2393 = vdwg.mxu0
      %2394 = vst.msk [vmem:[%s648 + $0x2] sm:$0xff] %vm592, %v1711
      %2395 = vst.msk [vmem:[%s648 + $0xa] sm:$0xff] %vm592, %v1712
      %2396 = vst.msk [vmem:[%s648 + $0x1a] sm:$0xff] %vm592, %v1713
      %2397 = vst.msk [vmem:[%s648 + $0x22] sm:$0xff] %vm592, %v1714
      %2398 = vst.msk [vmem:[%s648 + $0x32] sm:$0xff] %vm592, %v1715
      %2399 = vst.msk [vmem:[%s648 + $0x3a] sm:$0xff] %vm592, %v1716
      %2400 = vst.msk [vmem:[%s648 + $0x4a] sm:$0xff] %vm592, %v1717
      %2401 = vst.msk [vmem:[%s648 + $0x52] sm:$0xff] %vm592, %v1718
      %2402 = vst.msk [vmem:[%s648 + $0x62] sm:$0xff] %vm592, %v1719
      %2403 = vst.msk [vmem:[%s648 + $0x6a] sm:$0xff] %vm592, %v1720
      %2404 = vst.msk [vmem:[%s648 + $0x7a] sm:$0xff] %vm592, %v1721
      %2405 = vst.msk [vmem:[%s648 + $0x82] sm:$0xff] %vm592, %v1722
      %2406 = vst.msk [vmem:[%s648 + $0x92] sm:$0xff] %vm592, %v1723
      %2407 = vst.msk [vmem:[%s648 + $0x9a] sm:$0xff] %vm592, %v1724
      %2408 = vst.msk [vmem:[%s648 + $0xaa] sm:$0xff] %vm592, %v1725
      %2409 = vst.msk [vmem:[%s648 + $0xb2] sm:$0xff] %vm592, %v1726
      %2410 = vst.msk [vmem:[%s648 + $0xc2] sm:$0xff] %vm592, %v1727
      %2411 = vst.msk [vmem:[%s648 + $0xca] sm:$0xff] %vm592, %v1728
      %2412 = vst.msk [vmem:[%s648 + $0xda] sm:$0xff] %vm592, %v1729
      %2413 = vst.msk [vmem:[%s648 + $0xe2] sm:$0xff] %vm592, %v1730
      %2414 = vst.msk [vmem:[%s648 + $0xf2] sm:$0xff] %vm592, %v1731
      %2415 = vst.msk [vmem:[%s648 + $0xfa] sm:$0xff] %vm592, %v1732
      %2416 = vst.msk [vmem:[%s648 + $0x10a] sm:$0xff] %vm592, %v1733
      %2417 = vst.msk [vmem:[%s648 + $0x112] sm:$0xff] %vm592, %v1734
      %2418 = vst.msk [vmem:[%s648 + $0x122] sm:$0xff] %vm592, %v1735
      %2419 = vst.msk [vmem:[%s648 + $0x12a] sm:$0xff] %vm592, %v1736
      %2420 = vst.msk [vmem:[%s648 + $0x13a] sm:$0xff] %vm592, %v1737
      %2421 = vst.msk [vmem:[%s648 + $0x142] sm:$0xff] %vm592, %v1738
      %2422 = vst.msk [vmem:[%s648 + $0x152] sm:$0xff] %vm592, %v1739
      %2423 = vst.msk [vmem:[%s648 + $0x15a] sm:$0xff] %vm592, %v1740
      %2424 = vst.msk [vmem:[%s648 + $0x16a] sm:$0xff] %vm592, %v1741
      %2425 = vst.msk [vmem:[%s648 + $0x172] sm:$0xff] %vm592, %v1742
      %v2426 = vld [vmem:[#allocation2] sm:$0xff]
      %v2427 = vld [vmem:[#allocation2 + $0x8] sm:$0xff]
      %v2428 = vld [vmem:[#allocation2 + $0x10] sm:$0xf]
      %v2429 = vld [vmem:[#allocation2 + $0x18] sm:$0xff]
      %v2430 = vld [vmem:[#allocation2 + $0x20] sm:$0xff]
      %v2431 = vld [vmem:[#allocation2 + $0x28] sm:$0xf]
      %v2432 = vld [vmem:[#allocation2 + $0x30] sm:$0xff]
      %v2433 = vld [vmem:[#allocation2 + $0x38] sm:$0xff]
      %v2434 = vld [vmem:[#allocation2 + $0x40] sm:$0xf]
      %v2435 = vld [vmem:[#allocation2 + $0x48] sm:$0xff]
      %v2436 = vld [vmem:[#allocation2 + $0x50] sm:$0xff]
      %v2437 = vld [vmem:[#allocation2 + $0x58] sm:$0xf]
      %v2438 = vld [vmem:[#allocation2 + $0x60] sm:$0xff]
      %v2439 = vld [vmem:[#allocation2 + $0x68] sm:$0xff]
      %v2440 = vld [vmem:[#allocation2 + $0x70] sm:$0xf]
      %v2441 = vld [vmem:[#allocation2 + $0x78] sm:$0xff]
      %v2442 = vld [vmem:[#allocation2 + $0x80] sm:$0xff]
      %v2443 = vld [vmem:[#allocation2 + $0x88] sm:$0xf]
      %v2444 = vld [vmem:[#allocation2 + $0x90] sm:$0xff]
      %v2445 = vld [vmem:[#allocation2 + $0x98] sm:$0xff]
      %v2446 = vld [vmem:[#allocation2 + $0xa0] sm:$0xf]
      %v2447 = vld [vmem:[#allocation2 + $0xa8] sm:$0xff]
      %v2448 = vld [vmem:[#allocation2 + $0xb0] sm:$0xff]
      %v2449 = vld [vmem:[#allocation2 + $0xb8] sm:$0xf]
      %v2450 = vld [vmem:[#allocation2 + $0xc0] sm:$0xff]
      %v2451 = vld [vmem:[#allocation2 + $0xc8] sm:$0xff]
      %v2452 = vld [vmem:[#allocation2 + $0xd0] sm:$0xf]
      %v2453 = vld [vmem:[#allocation2 + $0xd8] sm:$0xff]
      %v2454 = vld [vmem:[#allocation2 + $0xe0] sm:$0xff]
      %v2455 = vld [vmem:[#allocation2 + $0xe8] sm:$0xf]
      %v2456 = vld [vmem:[#allocation2 + $0xf0] sm:$0xff]
      %v2457 = vld [vmem:[#allocation2 + $0xf8] sm:$0xff]
      %v2458 = vld [vmem:[#allocation2 + $0x100] sm:$0xf]
      %v2459 = vld [vmem:[#allocation2 + $0x108] sm:$0xff]
      %v2460 = vld [vmem:[#allocation2 + $0x110] sm:$0xff]
      %v2461 = vld [vmem:[#allocation2 + $0x118] sm:$0xf]
      %v2462 = vld [vmem:[#allocation2 + $0x120] sm:$0xff]
      %v2463 = vld [vmem:[#allocation2 + $0x128] sm:$0xff]
      %v2464 = vld [vmem:[#allocation2 + $0x130] sm:$0xf]
      %v2465 = vld [vmem:[#allocation2 + $0x138] sm:$0xff]
      %v2466 = vld [vmem:[#allocation2 + $0x140] sm:$0xff]
      %v2467 = vld [vmem:[#allocation2 + $0x148] sm:$0xf]
      %v2468 = vld [vmem:[#allocation2 + $0x150] sm:$0xff]
      %v2469 = vld [vmem:[#allocation2 + $0x158] sm:$0xff]
      %v2470 = vld [vmem:[#allocation2 + $0x160] sm:$0xf]
      %v2471 = vld [vmem:[#allocation2 + $0x168] sm:$0xff]
      %v2472 = vld [vmem:[#allocation2 + $0x170] sm:$0xff]
      %v2473 = vld [vmem:[#allocation2 + $0x178] sm:$0xf]
      %v2474 = vld [vmem:[%s729] sm:$0xff]
      %v2475 = vld [vmem:[%s729 + $0x8] sm:$0xff]
      %v2476 = vld [vmem:[%s729 + $0x10] sm:$0xf]
      %v2477 = vld [vmem:[%s729 + $0x18] sm:$0xff]
      %v2478 = vld [vmem:[%s729 + $0x20] sm:$0xff]
      %v2479 = vld [vmem:[%s729 + $0x28] sm:$0xf]
      %v2480 = vld [vmem:[%s729 + $0x30] sm:$0xff]
      %v2481 = vld [vmem:[%s729 + $0x38] sm:$0xff]
      %v2482 = vld [vmem:[%s729 + $0x40] sm:$0xf]
      %v2483 = vld [vmem:[%s729 + $0x48] sm:$0xff]
      %v2484 = vld [vmem:[%s729 + $0x50] sm:$0xff]
      %v2485 = vld [vmem:[%s729 + $0x58] sm:$0xf]
      %v2486 = vld [vmem:[%s729 + $0x60] sm:$0xff]
      %v2487 = vld [vmem:[%s729 + $0x68] sm:$0xff]
      %v2488 = vld [vmem:[%s729 + $0x70] sm:$0xf]
      %v2489 = vld [vmem:[%s729 + $0x78] sm:$0xff]
      %v2490 = vld [vmem:[%s729 + $0x80] sm:$0xff]
      %v2491 = vld [vmem:[%s729 + $0x88] sm:$0xf]
      %v2492 = vld [vmem:[%s729 + $0x90] sm:$0xff]
      %v2493 = vld [vmem:[%s729 + $0x98] sm:$0xff]
      %v2494 = vld [vmem:[%s729 + $0xa0] sm:$0xf]
      %v2495 = vld [vmem:[%s729 + $0xa8] sm:$0xff]
      %v2496 = vld [vmem:[%s729 + $0xb0] sm:$0xff]
      %v2497 = vld [vmem:[%s729 + $0xb8] sm:$0xf]
      %v2498 = vld [vmem:[%s729 + $0xc0] sm:$0xff]
      %v2499 = vld [vmem:[%s729 + $0xc8] sm:$0xff]
      %v2500 = vld [vmem:[%s729 + $0xd0] sm:$0xf]
      %v2501 = vld [vmem:[%s729 + $0xd8] sm:$0xff]
      %v2502 = vld [vmem:[%s729 + $0xe0] sm:$0xff]
      %v2503 = vld [vmem:[%s729 + $0xe8] sm:$0xf]
      %v2504 = vld [vmem:[%s729 + $0xf0] sm:$0xff]
      %v2505 = vld [vmem:[%s729 + $0xf8] sm:$0xff]
      %v2506 = vld [vmem:[%s729 + $0x100] sm:$0xf]
      %v2507 = vld [vmem:[%s729 + $0x108] sm:$0xff]
      %v2508 = vld [vmem:[%s729 + $0x110] sm:$0xff]
      %v2509 = vld [vmem:[%s729 + $0x118] sm:$0xf]
      %v2510 = vld [vmem:[%s729 + $0x120] sm:$0xff]
      %v2511 = vld [vmem:[%s729 + $0x128] sm:$0xff]
      %v2512 = vld [vmem:[%s729 + $0x130] sm:$0xf]
      %v2513 = vld [vmem:[%s729 + $0x138] sm:$0xff]
      %v2514 = vld [vmem:[%s729 + $0x140] sm:$0xff]
      %v2515 = vld [vmem:[%s729 + $0x148] sm:$0xf]
      %v2516 = vld [vmem:[%s729 + $0x150] sm:$0xff]
      %v2517 = vld [vmem:[%s729 + $0x158] sm:$0xff]
      %v2518 = vld [vmem:[%s729 + $0x160] sm:$0xf]
      %v2519 = vld [vmem:[%s729 + $0x168] sm:$0xff]
      %v2520 = vld [vmem:[%s729 + $0x170] sm:$0xff]
      %v2521 = vld [vmem:[%s729 + $0x178] sm:$0xf]
      %v2522 = vmax.f32 %v2426, %v2474
      %v2523 = vmax.f32 %v2427, %v2475
      %v2524 = vmax.f32 %v2428, %v2476
      %v2525 = vmax.f32 %v2429, %v2477
      %v2526 = vmax.f32 %v2430, %v2478
      %v2527 = vmax.f32 %v2431, %v2479
      %v2528 = vmax.f32 %v2432, %v2480
      %v2529 = vmax.f32 %v2433, %v2481
      %v2530 = vmax.f32 %v2434, %v2482
      %v2531 = vmax.f32 %v2435, %v2483
      %v2532 = vmax.f32 %v2436, %v2484
      %v2533 = vmax.f32 %v2437, %v2485
      %v2534 = vmax.f32 %v2438, %v2486
      %v2535 = vmax.f32 %v2439, %v2487
      %v2536 = vmax.f32 %v2440, %v2488
      %v2537 = vmax.f32 %v2441, %v2489
      %v2538 = vmax.f32 %v2442, %v2490
      %v2539 = vmax.f32 %v2443, %v2491
      %v2540 = vmax.f32 %v2444, %v2492
      %v2541 = vmax.f32 %v2445, %v2493
      %v2542 = vmax.f32 %v2446, %v2494
      %v2543 = vmax.f32 %v2447, %v2495
      %v2544 = vmax.f32 %v2448, %v2496
      %v2545 = vmax.f32 %v2449, %v2497
      %v2546 = vmax.f32 %v2450, %v2498
      %v2547 = vmax.f32 %v2451, %v2499
      %v2548 = vmax.f32 %v2452, %v2500
      %v2549 = vmax.f32 %v2453, %v2501
      %v2550 = vmax.f32 %v2454, %v2502
      %v2551 = vmax.f32 %v2455, %v2503
      %v2552 = vmax.f32 %v2456, %v2504
      %v2553 = vmax.f32 %v2457, %v2505
      %v2554 = vmax.f32 %v2458, %v2506
      %v2555 = vmax.f32 %v2459, %v2507
      %v2556 = vmax.f32 %v2460, %v2508
      %v2557 = vmax.f32 %v2461, %v2509
      %v2558 = vmax.f32 %v2462, %v2510
      %v2559 = vmax.f32 %v2463, %v2511
      %v2560 = vmax.f32 %v2464, %v2512
      %v2561 = vmax.f32 %v2465, %v2513
      %v2562 = vmax.f32 %v2466, %v2514
      %v2563 = vmax.f32 %v2467, %v2515
      %v2564 = vmax.f32 %v2468, %v2516
      %v2565 = vmax.f32 %v2469, %v2517
      %v2566 = vmax.f32 %v2470, %v2518
      %v2567 = vmax.f32 %v2471, %v2519
      %v2568 = vmax.f32 %v2472, %v2520
      %v2569 = vmax.f32 %v2473, %v2521
      %v2570 = vld [vmem:[%s648] sm:$0xff]
      %v2571 = vld [vmem:[%s648 + $0x8] sm:$0xff]
      %v2572 = vld [vmem:[%s648 + $0x10] sm:$0xf]
      %v2573 = vld [vmem:[%s648 + $0x18] sm:$0xff]
      %v2574 = vld [vmem:[%s648 + $0x20] sm:$0xff]
      %v2575 = vld [vmem:[%s648 + $0x28] sm:$0xf]
      %v2576 = vld [vmem:[%s648 + $0x30] sm:$0xff]
      %v2577 = vld [vmem:[%s648 + $0x38] sm:$0xff]
      %v2578 = vld [vmem:[%s648 + $0x40] sm:$0xf]
      %v2579 = vld [vmem:[%s648 + $0x48] sm:$0xff]
      %v2580 = vld [vmem:[%s648 + $0x50] sm:$0xff]
      %v2581 = vld [vmem:[%s648 + $0x58] sm:$0xf]
      %v2582 = vld [vmem:[%s648 + $0x60] sm:$0xff]
      %v2583 = vld [vmem:[%s648 + $0x68] sm:$0xff]
      %v2584 = vld [vmem:[%s648 + $0x70] sm:$0xf]
      %v2585 = vld [vmem:[%s648 + $0x78] sm:$0xff]
      %v2586 = vld [vmem:[%s648 + $0x80] sm:$0xff]
      %v2587 = vld [vmem:[%s648 + $0x88] sm:$0xf]
      %v2588 = vld [vmem:[%s648 + $0x90] sm:$0xff]
      %v2589 = vld [vmem:[%s648 + $0x98] sm:$0xff]
      %v2590 = vld [vmem:[%s648 + $0xa0] sm:$0xf]
      %v2591 = vld [vmem:[%s648 + $0xa8] sm:$0xff]
      %v2592 = vld [vmem:[%s648 + $0xb0] sm:$0xff]
      %v2593 = vld [vmem:[%s648 + $0xb8] sm:$0xf]
      %v2594 = vld [vmem:[%s648 + $0xc0] sm:$0xff]
      %v2595 = vld [vmem:[%s648 + $0xc8] sm:$0xff]
      %v2596 = vld [vmem:[%s648 + $0xd0] sm:$0xf]
      %v2597 = vld [vmem:[%s648 + $0xd8] sm:$0xff]
      %v2598 = vld [vmem:[%s648 + $0xe0] sm:$0xff]
      %v2599 = vld [vmem:[%s648 + $0xe8] sm:$0xf]
      %v2600 = vld [vmem:[%s648 + $0xf0] sm:$0xff]
      %v2601 = vld [vmem:[%s648 + $0xf8] sm:$0xff]
      %v2602 = vld [vmem:[%s648 + $0x100] sm:$0xf]
      %v2603 = vld [vmem:[%s648 + $0x108] sm:$0xff]
      %v2604 = vld [vmem:[%s648 + $0x110] sm:$0xff]
      %v2605 = vld [vmem:[%s648 + $0x118] sm:$0xf]
      %v2606 = vld [vmem:[%s648 + $0x120] sm:$0xff]
      %v2607 = vld [vmem:[%s648 + $0x128] sm:$0xff]
      %v2608 = vld [vmem:[%s648 + $0x130] sm:$0xf]
      %v2609 = vld [vmem:[%s648 + $0x138] sm:$0xff]
      %v2610 = vld [vmem:[%s648 + $0x140] sm:$0xff]
      %v2611 = vld [vmem:[%s648 + $0x148] sm:$0xf]
      %v2612 = vld [vmem:[%s648 + $0x150] sm:$0xff]
      %v2613 = vld [vmem:[%s648 + $0x158] sm:$0xff]
      %v2614 = vld [vmem:[%s648 + $0x160] sm:$0xf]
      %v2615 = vld [vmem:[%s648 + $0x168] sm:$0xff]
      %v2616 = vld [vmem:[%s648 + $0x170] sm:$0xff]
      %v2617 = vld [vmem:[%s648 + $0x178] sm:$0xf]
      %v2618 = vmax.f32 %v2522, %v2570
      %v2619 = vmax.f32 %v2523, %v2571
      %v2620 = vmax.f32 %v2524, %v2572
      %v2621 = vmax.f32 %v2525, %v2573
      %v2622 = vmax.f32 %v2526, %v2574
      %v2623 = vmax.f32 %v2527, %v2575
      %v2624 = vmax.f32 %v2528, %v2576
      %v2625 = vmax.f32 %v2529, %v2577
      %v2626 = vmax.f32 %v2530, %v2578
      %v2627 = vmax.f32 %v2531, %v2579
      %v2628 = vmax.f32 %v2532, %v2580
      %v2629 = vmax.f32 %v2533, %v2581
      %v2630 = vmax.f32 %v2534, %v2582
      %v2631 = vmax.f32 %v2535, %v2583
      %v2632 = vmax.f32 %v2536, %v2584
      %v2633 = vmax.f32 %v2537, %v2585
      %v2634 = vmax.f32 %v2538, %v2586
      %v2635 = vmax.f32 %v2539, %v2587
      %v2636 = vmax.f32 %v2540, %v2588
      %v2637 = vmax.f32 %v2541, %v2589
      %v2638 = vmax.f32 %v2542, %v2590
      %v2639 = vmax.f32 %v2543, %v2591
      %v2640 = vmax.f32 %v2544, %v2592
      %v2641 = vmax.f32 %v2545, %v2593
      %v2642 = vmax.f32 %v2546, %v2594
      %v2643 = vmax.f32 %v2547, %v2595
      %v2644 = vmax.f32 %v2548, %v2596
      %v2645 = vmax.f32 %v2549, %v2597
      %v2646 = vmax.f32 %v2550, %v2598
      %v2647 = vmax.f32 %v2551, %v2599
      %v2648 = vmax.f32 %v2552, %v2600
      %v2649 = vmax.f32 %v2553, %v2601
      %v2650 = vmax.f32 %v2554, %v2602
      %v2651 = vmax.f32 %v2555, %v2603
      %v2652 = vmax.f32 %v2556, %v2604
      %v2653 = vmax.f32 %v2557, %v2605
      %v2654 = vmax.f32 %v2558, %v2606
      %v2655 = vmax.f32 %v2559, %v2607
      %v2656 = vmax.f32 %v2560, %v2608
      %v2657 = vmax.f32 %v2561, %v2609
      %v2658 = vmax.f32 %v2562, %v2610
      %v2659 = vmax.f32 %v2563, %v2611
      %v2660 = vmax.f32 %v2564, %v2612
      %v2661 = vmax.f32 %v2565, %v2613
      %v2662 = vmax.f32 %v2566, %v2614
      %v2663 = vmax.f32 %v2567, %v2615
      %v2664 = vmax.f32 %v2568, %v2616
      %v2665 = vmax.f32 %v2569, %v2617
      %v2666 = vld [vmem:[%s922] sm:$0xff]
      %v2667 = vld [vmem:[%s922 + $0x8] sm:$0xff]
      %v2668 = vld [vmem:[%s922 + $0x10] sm:$0xf]
      %v2669 = vld [vmem:[%s922 + $0x18] sm:$0xff]
      %v2670 = vld [vmem:[%s922 + $0x20] sm:$0xff]
      %v2671 = vld [vmem:[%s922 + $0x28] sm:$0xf]
      %v2672 = vld [vmem:[%s922 + $0x30] sm:$0xff]
      %v2673 = vld [vmem:[%s922 + $0x38] sm:$0xff]
      %v2674 = vld [vmem:[%s922 + $0x40] sm:$0xf]
      %v2675 = vld [vmem:[%s922 + $0x48] sm:$0xff]
      %v2676 = vld [vmem:[%s922 + $0x50] sm:$0xff]
      %v2677 = vld [vmem:[%s922 + $0x58] sm:$0xf]
      %v2678 = vld [vmem:[%s922 + $0x60] sm:$0xff]
      %v2679 = vld [vmem:[%s922 + $0x68] sm:$0xff]
      %v2680 = vld [vmem:[%s922 + $0x70] sm:$0xf]
      %v2681 = vld [vmem:[%s922 + $0x78] sm:$0xff]
      %v2682 = vld [vmem:[%s922 + $0x80] sm:$0xff]
      %v2683 = vld [vmem:[%s922 + $0x88] sm:$0xf]
      %v2684 = vld [vmem:[%s922 + $0x90] sm:$0xff]
      %v2685 = vld [vmem:[%s922 + $0x98] sm:$0xff]
      %v2686 = vld [vmem:[%s922 + $0xa0] sm:$0xf]
      %v2687 = vld [vmem:[%s922 + $0xa8] sm:$0xff]
      %v2688 = vld [vmem:[%s922 + $0xb0] sm:$0xff]
      %v2689 = vld [vmem:[%s922 + $0xb8] sm:$0xf]
      %v2690 = vld [vmem:[%s922 + $0xc0] sm:$0xff]
      %v2691 = vld [vmem:[%s922 + $0xc8] sm:$0xff]
      %v2692 = vld [vmem:[%s922 + $0xd0] sm:$0xf]
      %v2693 = vld [vmem:[%s922 + $0xd8] sm:$0xff]
      %v2694 = vld [vmem:[%s922 + $0xe0] sm:$0xff]
      %v2695 = vld [vmem:[%s922 + $0xe8] sm:$0xf]
      %v2696 = vld [vmem:[%s922 + $0xf0] sm:$0xff]
      %v2697 = vld [vmem:[%s922 + $0xf8] sm:$0xff]
      %v2698 = vld [vmem:[%s922 + $0x100] sm:$0xf]
      %v2699 = vld [vmem:[%s922 + $0x108] sm:$0xff]
      %v2700 = vld [vmem:[%s922 + $0x110] sm:$0xff]
      %v2701 = vld [vmem:[%s922 + $0x118] sm:$0xf]
      %v2702 = vld [vmem:[%s922 + $0x120] sm:$0xff]
      %v2703 = vld [vmem:[%s922 + $0x128] sm:$0xff]
      %v2704 = vld [vmem:[%s922 + $0x130] sm:$0xf]
      %v2705 = vld [vmem:[%s922 + $0x138] sm:$0xff]
      %v2706 = vld [vmem:[%s922 + $0x140] sm:$0xff]
      %v2707 = vld [vmem:[%s922 + $0x148] sm:$0xf]
      %v2708 = vld [vmem:[%s922 + $0x150] sm:$0xff]
      %v2709 = vld [vmem:[%s922 + $0x158] sm:$0xff]
      %v2710 = vld [vmem:[%s922 + $0x160] sm:$0xf]
      %v2711 = vld [vmem:[%s922 + $0x168] sm:$0xff]
      %v2712 = vld [vmem:[%s922 + $0x170] sm:$0xff]
      %v2713 = vld [vmem:[%s922 + $0x178] sm:$0xf]
      %v2714 = vmax.f32 %v2618, %v2666
      %v2715 = vmax.f32 %v2619, %v2667
      %v2716 = vmax.f32 %v2620, %v2668
      %v2717 = vmax.f32 %v2621, %v2669
      %v2718 = vmax.f32 %v2622, %v2670
      %v2719 = vmax.f32 %v2623, %v2671
      %v2720 = vmax.f32 %v2624, %v2672
      %v2721 = vmax.f32 %v2625, %v2673
      %v2722 = vmax.f32 %v2626, %v2674
      %v2723 = vmax.f32 %v2627, %v2675
      %v2724 = vmax.f32 %v2628, %v2676
      %v2725 = vmax.f32 %v2629, %v2677
      %v2726 = vmax.f32 %v2630, %v2678
      %v2727 = vmax.f32 %v2631, %v2679
      %v2728 = vmax.f32 %v2632, %v2680
      %v2729 = vmax.f32 %v2633, %v2681
      %v2730 = vmax.f32 %v2634, %v2682
      %v2731 = vmax.f32 %v2635, %v2683
      %v2732 = vmax.f32 %v2636, %v2684
      %v2733 = vmax.f32 %v2637, %v2685
      %v2734 = vmax.f32 %v2638, %v2686
      %v2735 = vmax.f32 %v2639, %v2687
      %v2736 = vmax.f32 %v2640, %v2688
      %v2737 = vmax.f32 %v2641, %v2689
      %v2738 = vmax.f32 %v2642, %v2690
      %v2739 = vmax.f32 %v2643, %v2691
      %v2740 = vmax.f32 %v2644, %v2692
      %v2741 = vmax.f32 %v2645, %v2693
      %v2742 = vmax.f32 %v2646, %v2694
      %v2743 = vmax.f32 %v2647, %v2695
      %v2744 = vmax.f32 %v2648, %v2696
      %v2745 = vmax.f32 %v2649, %v2697
      %v2746 = vmax.f32 %v2650, %v2698
      %v2747 = vmax.f32 %v2651, %v2699
      %v2748 = vmax.f32 %v2652, %v2700
      %v2749 = vmax.f32 %v2653, %v2701
      %v2750 = vmax.f32 %v2654, %v2702
      %v2751 = vmax.f32 %v2655, %v2703
      %v2752 = vmax.f32 %v2656, %v2704
      %v2753 = vmax.f32 %v2657, %v2705
      %v2754 = vmax.f32 %v2658, %v2706
      %v2755 = vmax.f32 %v2659, %v2707
      %v2756 = vmax.f32 %v2660, %v2708
      %v2757 = vmax.f32 %v2661, %v2709
      %v2758 = vmax.f32 %v2662, %v2710
      %v2759 = vmax.f32 %v2663, %v2711
      %v2760 = vmax.f32 %v2664, %v2712
      %v2761 = vmax.f32 %v2665, %v2713
      %v2762 = vld [vmem:[%s1019] sm:$0xff]
      %v2763 = vld [vmem:[%s1019 + $0x8] sm:$0xff]
      %v2764 = vld [vmem:[%s1019 + $0x10] sm:$0xf]
      %v2765 = vld [vmem:[%s1019 + $0x18] sm:$0xff]
      %v2766 = vld [vmem:[%s1019 + $0x20] sm:$0xff]
      %v2767 = vld [vmem:[%s1019 + $0x28] sm:$0xf]
      %v2768 = vld [vmem:[%s1019 + $0x30] sm:$0xff]
      %v2769 = vld [vmem:[%s1019 + $0x38] sm:$0xff]
      %v2770 = vld [vmem:[%s1019 + $0x40] sm:$0xf]
      %v2771 = vld [vmem:[%s1019 + $0x48] sm:$0xff]
      %v2772 = vld [vmem:[%s1019 + $0x50] sm:$0xff]
      %v2773 = vld [vmem:[%s1019 + $0x58] sm:$0xf]
      %v2774 = vld [vmem:[%s1019 + $0x60] sm:$0xff]
      %v2775 = vld [vmem:[%s1019 + $0x68] sm:$0xff]
      %v2776 = vld [vmem:[%s1019 + $0x70] sm:$0xf]
      %v2777 = vld [vmem:[%s1019 + $0x78] sm:$0xff]
      %v2778 = vld [vmem:[%s1019 + $0x80] sm:$0xff]
      %v2779 = vld [vmem:[%s1019 + $0x88] sm:$0xf]
      %v2780 = vld [vmem:[%s1019 + $0x90] sm:$0xff]
      %v2781 = vld [vmem:[%s1019 + $0x98] sm:$0xff]
      %v2782 = vld [vmem:[%s1019 + $0xa0] sm:$0xf]
      %v2783 = vld [vmem:[%s1019 + $0xa8] sm:$0xff]
      %v2784 = vld [vmem:[%s1019 + $0xb0] sm:$0xff]
      %v2785 = vld [vmem:[%s1019 + $0xb8] sm:$0xf]
      %v2786 = vld [vmem:[%s1019 + $0xc0] sm:$0xff]
      %v2787 = vld [vmem:[%s1019 + $0xc8] sm:$0xff]
      %v2788 = vld [vmem:[%s1019 + $0xd0] sm:$0xf]
      %v2789 = vld [vmem:[%s1019 + $0xd8] sm:$0xff]
      %v2790 = vld [vmem:[%s1019 + $0xe0] sm:$0xff]
      %v2791 = vld [vmem:[%s1019 + $0xe8] sm:$0xf]
      %v2792 = vld [vmem:[%s1019 + $0xf0] sm:$0xff]
      %v2793 = vld [vmem:[%s1019 + $0xf8] sm:$0xff]
      %v2794 = vld [vmem:[%s1019 + $0x100] sm:$0xf]
      %v2795 = vld [vmem:[%s1019 + $0x108] sm:$0xff]
      %v2796 = vld [vmem:[%s1019 + $0x110] sm:$0xff]
      %v2797 = vld [vmem:[%s1019 + $0x118] sm:$0xf]
      %v2798 = vld [vmem:[%s1019 + $0x120] sm:$0xff]
      %v2799 = vld [vmem:[%s1019 + $0x128] sm:$0xff]
      %v2800 = vld [vmem:[%s1019 + $0x130] sm:$0xf]
      %v2801 = vld [vmem:[%s1019 + $0x138] sm:$0xff]
      %v2802 = vld [vmem:[%s1019 + $0x140] sm:$0xff]
      %v2803 = vld [vmem:[%s1019 + $0x148] sm:$0xf]
      %v2804 = vld [vmem:[%s1019 + $0x150] sm:$0xff]
      %v2805 = vld [vmem:[%s1019 + $0x158] sm:$0xff]
      %v2806 = vld [vmem:[%s1019 + $0x160] sm:$0xf]
      %v2807 = vld [vmem:[%s1019 + $0x168] sm:$0xff]
      %v2808 = vld [vmem:[%s1019 + $0x170] sm:$0xff]
      %v2809 = vld [vmem:[%s1019 + $0x178] sm:$0xf]
      %v2810 = vmax.f32 %v2714, %v2762
      %v2811 = vmax.f32 %v2715, %v2763
      %v2812 = vmax.f32 %v2716, %v2764
      %v2813 = vmax.f32 %v2717, %v2765
      %v2814 = vmax.f32 %v2718, %v2766
      %v2815 = vmax.f32 %v2719, %v2767
      %v2816 = vmax.f32 %v2720, %v2768
      %v2817 = vmax.f32 %v2721, %v2769
      %v2818 = vmax.f32 %v2722, %v2770
      %v2819 = vmax.f32 %v2723, %v2771
      %v2820 = vmax.f32 %v2724, %v2772
      %v2821 = vmax.f32 %v2725, %v2773
      %v2822 = vmax.f32 %v2726, %v2774
      %v2823 = vmax.f32 %v2727, %v2775
      %v2824 = vmax.f32 %v2728, %v2776
      %v2825 = vmax.f32 %v2729, %v2777
      %v2826 = vmax.f32 %v2730, %v2778
      %v2827 = vmax.f32 %v2731, %v2779
      %v2828 = vmax.f32 %v2732, %v2780
      %v2829 = vmax.f32 %v2733, %v2781
      %v2830 = vmax.f32 %v2734, %v2782
      %v2831 = vmax.f32 %v2735, %v2783
      %v2832 = vmax.f32 %v2736, %v2784
      %v2833 = vmax.f32 %v2737, %v2785
      %v2834 = vmax.f32 %v2738, %v2786
      %v2835 = vmax.f32 %v2739, %v2787
      %v2836 = vmax.f32 %v2740, %v2788
      %v2837 = vmax.f32 %v2741, %v2789
      %v2838 = vmax.f32 %v2742, %v2790
      %v2839 = vmax.f32 %v2743, %v2791
      %v2840 = vmax.f32 %v2744, %v2792
      %v2841 = vmax.f32 %v2745, %v2793
      %v2842 = vmax.f32 %v2746, %v2794
      %v2843 = vmax.f32 %v2747, %v2795
      %v2844 = vmax.f32 %v2748, %v2796
      %v2845 = vmax.f32 %v2749, %v2797
      %v2846 = vmax.f32 %v2750, %v2798
      %v2847 = vmax.f32 %v2751, %v2799
      %v2848 = vmax.f32 %v2752, %v2800
      %v2849 = vmax.f32 %v2753, %v2801
      %v2850 = vmax.f32 %v2754, %v2802
      %v2851 = vmax.f32 %v2755, %v2803
      %v2852 = vmax.f32 %v2756, %v2804
      %v2853 = vmax.f32 %v2757, %v2805
      %v2854 = vmax.f32 %v2758, %v2806
      %v2855 = vmax.f32 %v2759, %v2807
      %v2856 = vmax.f32 %v2760, %v2808
      %v2857 = vmax.f32 %v2761, %v2809
      %v2906 = vrot.slane %v2810, 1
      %v2907 = vrot.slane %v2811, 1
      %v2908 = vsel %vm1164, %v2906, %v2907
      %v2909 = vrot.slane %v2812, 1
      %v2910 = vsel %vm1164, %v2907, %v2909
      %v2911 = vrot.slane %v2813, 1
      %v2912 = vrot.slane %v2814, 1
      %v2913 = vsel %vm1164, %v2911, %v2912
      %v2914 = vrot.slane %v2815, 1
      %v2915 = vsel %vm1164, %v2912, %v2914
      %v2916 = vrot.slane %v2816, 1
      %v2917 = vrot.slane %v2817, 1
      %v2918 = vsel %vm1164, %v2916, %v2917
      %v2919 = vrot.slane %v2818, 1
      %v2920 = vsel %vm1164, %v2917, %v2919
      %v2921 = vrot.slane %v2819, 1
      %v2922 = vrot.slane %v2820, 1
      %v2923 = vsel %vm1164, %v2921, %v2922
      %v2924 = vrot.slane %v2821, 1
      %v2925 = vsel %vm1164, %v2922, %v2924
      %v2926 = vrot.slane %v2822, 1
      %v2927 = vrot.slane %v2823, 1
      %v2928 = vsel %vm1164, %v2926, %v2927
      %v2929 = vrot.slane %v2824, 1
      %v2930 = vsel %vm1164, %v2927, %v2929
      %v2931 = vrot.slane %v2825, 1
      %v2932 = vrot.slane %v2826, 1
      %v2933 = vsel %vm1164, %v2931, %v2932
      %v2934 = vrot.slane %v2827, 1
      %v2935 = vsel %vm1164, %v2932, %v2934
      %v2936 = vrot.slane %v2828, 1
      %v2937 = vrot.slane %v2829, 1
      %v2938 = vsel %vm1164, %v2936, %v2937
      %v2939 = vrot.slane %v2830, 1
      %v2940 = vsel %vm1164, %v2937, %v2939
      %v2941 = vrot.slane %v2831, 1
      %v2942 = vrot.slane %v2832, 1
      %v2943 = vsel %vm1164, %v2941, %v2942
      %v2944 = vrot.slane %v2833, 1
      %v2945 = vsel %vm1164, %v2942, %v2944
      %v2946 = vrot.slane %v2834, 1
      %v2947 = vrot.slane %v2835, 1
      %v2948 = vsel %vm1164, %v2946, %v2947
      %v2949 = vrot.slane %v2836, 1
      %v2950 = vsel %vm1164, %v2947, %v2949
      %v2951 = vrot.slane %v2837, 1
      %v2952 = vrot.slane %v2838, 1
      %v2953 = vsel %vm1164, %v2951, %v2952
      %v2954 = vrot.slane %v2839, 1
      %v2955 = vsel %vm1164, %v2952, %v2954
      %v2956 = vrot.slane %v2840, 1
      %v2957 = vrot.slane %v2841, 1
      %v2958 = vsel %vm1164, %v2956, %v2957
      %v2959 = vrot.slane %v2842, 1
      %v2960 = vsel %vm1164, %v2957, %v2959
      %v2961 = vrot.slane %v2843, 1
      %v2962 = vrot.slane %v2844, 1
      %v2963 = vsel %vm1164, %v2961, %v2962
      %v2964 = vrot.slane %v2845, 1
      %v2965 = vsel %vm1164, %v2962, %v2964
      %v2966 = vrot.slane %v2846, 1
      %v2967 = vrot.slane %v2847, 1
      %v2968 = vsel %vm1164, %v2966, %v2967
      %v2969 = vrot.slane %v2848, 1
      %v2970 = vsel %vm1164, %v2967, %v2969
      %v2971 = vrot.slane %v2849, 1
      %v2972 = vrot.slane %v2850, 1
      %v2973 = vsel %vm1164, %v2971, %v2972
      %v2974 = vrot.slane %v2851, 1
      %v2975 = vsel %vm1164, %v2972, %v2974
      %v2976 = vrot.slane %v2852, 1
      %v2977 = vrot.slane %v2853, 1
      %v2978 = vsel %vm1164, %v2976, %v2977
      %v2979 = vrot.slane %v2854, 1
      %v2980 = vsel %vm1164, %v2977, %v2979
      %v2981 = vrot.slane %v2855, 1
      %v2982 = vrot.slane %v2856, 1
      %v2983 = vsel %vm1164, %v2981, %v2982
      %v2984 = vrot.slane %v2857, 1
      %v2985 = vsel %vm1164, %v2982, %v2984
      %v3018 = vmax.f32 %v2810, %v2908
      %v3019 = vmax.f32 %v2811, %v2910
      %v3020 = vmax.f32 %v2813, %v2913
      %v3021 = vmax.f32 %v2814, %v2915
      %v3022 = vmax.f32 %v2816, %v2918
      %v3023 = vmax.f32 %v2817, %v2920
      %v3024 = vmax.f32 %v2819, %v2923
      %v3025 = vmax.f32 %v2820, %v2925
      %v3026 = vmax.f32 %v2822, %v2928
      %v3027 = vmax.f32 %v2823, %v2930
      %v3028 = vmax.f32 %v2825, %v2933
      %v3029 = vmax.f32 %v2826, %v2935
      %v3030 = vmax.f32 %v2828, %v2938
      %v3031 = vmax.f32 %v2829, %v2940
      %v3032 = vmax.f32 %v2831, %v2943
      %v3033 = vmax.f32 %v2832, %v2945
      %v3034 = vmax.f32 %v2834, %v2948
      %v3035 = vmax.f32 %v2835, %v2950
      %v3036 = vmax.f32 %v2837, %v2953
      %v3037 = vmax.f32 %v2838, %v2955
      %v3038 = vmax.f32 %v2840, %v2958
      %v3039 = vmax.f32 %v2841, %v2960
      %v3040 = vmax.f32 %v2843, %v2963
      %v3041 = vmax.f32 %v2844, %v2965
      %v3042 = vmax.f32 %v2846, %v2968
      %v3043 = vmax.f32 %v2847, %v2970
      %v3044 = vmax.f32 %v2849, %v2973
      %v3045 = vmax.f32 %v2850, %v2975
      %v3046 = vmax.f32 %v2852, %v2978
      %v3047 = vmax.f32 %v2853, %v2980
      %v3048 = vmax.f32 %v2855, %v2983
      %v3049 = vmax.f32 %v2856, %v2985
      %v3050 = vrot.slane %v2810, 2
      %v3051 = vrot.slane %v2811, 2
      %v3052 = vsel %vm1309, %v3050, %v3051
      %v3053 = vrot.slane %v2812, 2
      %v3054 = vsel %vm1309, %v3051, %v3053
      %v3055 = vrot.slane %v2813, 2
      %v3056 = vrot.slane %v2814, 2
      %v3057 = vsel %vm1309, %v3055, %v3056
      %v3058 = vrot.slane %v2815, 2
      %v3059 = vsel %vm1309, %v3056, %v3058
      %v3060 = vrot.slane %v2816, 2
      %v3061 = vrot.slane %v2817, 2
      %v3062 = vsel %vm1309, %v3060, %v3061
      %v3063 = vrot.slane %v2818, 2
      %v3064 = vsel %vm1309, %v3061, %v3063
      %v3065 = vrot.slane %v2819, 2
      %v3066 = vrot.slane %v2820, 2
      %v3067 = vsel %vm1309, %v3065, %v3066
      %v3068 = vrot.slane %v2821, 2
      %v3069 = vsel %vm1309, %v3066, %v3068
      %v3070 = vrot.slane %v2822, 2
      %v3071 = vrot.slane %v2823, 2
      %v3072 = vsel %vm1309, %v3070, %v3071
      %v3073 = vrot.slane %v2824, 2
      %v3074 = vsel %vm1309, %v3071, %v3073
      %v3075 = vrot.slane %v2825, 2
      %v3076 = vrot.slane %v2826, 2
      %v3077 = vsel %vm1309, %v3075, %v3076
      %v3078 = vrot.slane %v2827, 2
      %v3079 = vsel %vm1309, %v3076, %v3078
      %v3080 = vrot.slane %v2828, 2
      %v3081 = vrot.slane %v2829, 2
      %v3082 = vsel %vm1309, %v3080, %v3081
      %v3083 = vrot.slane %v2830, 2
      %v3084 = vsel %vm1309, %v3081, %v3083
      %v3085 = vrot.slane %v2831, 2
      %v3086 = vrot.slane %v2832, 2
      %v3087 = vsel %vm1309, %v3085, %v3086
      %v3088 = vrot.slane %v2833, 2
      %v3089 = vsel %vm1309, %v3086, %v3088
      %v3090 = vrot.slane %v2834, 2
      %v3091 = vrot.slane %v2835, 2
      %v3092 = vsel %vm1309, %v3090, %v3091
      %v3093 = vrot.slane %v2836, 2
      %v3094 = vsel %vm1309, %v3091, %v3093
      %v3095 = vrot.slane %v2837, 2
      %v3096 = vrot.slane %v2838, 2
      %v3097 = vsel %vm1309, %v3095, %v3096
      %v3098 = vrot.slane %v2839, 2
      %v3099 = vsel %vm1309, %v3096, %v3098
      %v3100 = vrot.slane %v2840, 2
      %v3101 = vrot.slane %v2841, 2
      %v3102 = vsel %vm1309, %v3100, %v3101
      %v3103 = vrot.slane %v2842, 2
      %v3104 = vsel %vm1309, %v3101, %v3103
      %v3105 = vrot.slane %v2843, 2
      %v3106 = vrot.slane %v2844, 2
      %v3107 = vsel %vm1309, %v3105, %v3106
      %v3108 = vrot.slane %v2845, 2
      %v3109 = vsel %vm1309, %v3106, %v3108
      %v3110 = vrot.slane %v2846, 2
      %v3111 = vrot.slane %v2847, 2
      %v3112 = vsel %vm1309, %v3110, %v3111
      %v3113 = vrot.slane %v2848, 2
      %v3114 = vsel %vm1309, %v3111, %v3113
      %v3115 = vrot.slane %v2849, 2
      %v3116 = vrot.slane %v2850, 2
      %v3117 = vsel %vm1309, %v3115, %v3116
      %v3118 = vrot.slane %v2851, 2
      %v3119 = vsel %vm1309, %v3116, %v3118
      %v3120 = vrot.slane %v2852, 2
      %v3121 = vrot.slane %v2853, 2
      %v3122 = vsel %vm1309, %v3120, %v3121
      %v3123 = vrot.slane %v2854, 2
      %v3124 = vsel %vm1309, %v3121, %v3123
      %v3125 = vrot.slane %v2855, 2
      %v3126 = vrot.slane %v2856, 2
      %v3127 = vsel %vm1309, %v3125, %v3126
      %v3128 = vrot.slane %v2857, 2
      %v3129 = vsel %vm1309, %v3126, %v3128
      %v3162 = vmax.f32 %v3018, %v3052
      %v3163 = vmax.f32 %v3019, %v3054
      %v3164 = vmax.f32 %v3020, %v3057
      %v3165 = vmax.f32 %v3021, %v3059
      %v3166 = vmax.f32 %v3022, %v3062
      %v3167 = vmax.f32 %v3023, %v3064
      %v3168 = vmax.f32 %v3024, %v3067
      %v3169 = vmax.f32 %v3025, %v3069
      %v3170 = vmax.f32 %v3026, %v3072
      %v3171 = vmax.f32 %v3027, %v3074
      %v3172 = vmax.f32 %v3028, %v3077
      %v3173 = vmax.f32 %v3029, %v3079
      %v3174 = vmax.f32 %v3030, %v3082
      %v3175 = vmax.f32 %v3031, %v3084
      %v3176 = vmax.f32 %v3032, %v3087
      %v3177 = vmax.f32 %v3033, %v3089
      %v3178 = vmax.f32 %v3034, %v3092
      %v3179 = vmax.f32 %v3035, %v3094
      %v3180 = vmax.f32 %v3036, %v3097
      %v3181 = vmax.f32 %v3037, %v3099
      %v3182 = vmax.f32 %v3038, %v3102
      %v3183 = vmax.f32 %v3039, %v3104
      %v3184 = vmax.f32 %v3040, %v3107
      %v3185 = vmax.f32 %v3041, %v3109
      %v3186 = vmax.f32 %v3042, %v3112
      %v3187 = vmax.f32 %v3043, %v3114
      %v3188 = vmax.f32 %v3044, %v3117
      %v3189 = vmax.f32 %v3045, %v3119
      %v3190 = vmax.f32 %v3046, %v3122
      %v3191 = vmax.f32 %v3047, %v3124
      %v3192 = vmax.f32 %v3048, %v3127
      %v3193 = vmax.f32 %v3049, %v3129
      %v3194 = vrot.slane %v2810, 3
      %v3195 = vrot.slane %v2811, 3
      %v3196 = vsel %vm1454, %v3194, %v3195
      %v3197 = vrot.slane %v2812, 3
      %v3198 = vsel %vm1454, %v3195, %v3197
      %v3199 = vrot.slane %v2813, 3
      %v3200 = vrot.slane %v2814, 3
      %v3201 = vsel %vm1454, %v3199, %v3200
      %v3202 = vrot.slane %v2815, 3
      %v3203 = vsel %vm1454, %v3200, %v3202
      %v3204 = vrot.slane %v2816, 3
      %v3205 = vrot.slane %v2817, 3
      %v3206 = vsel %vm1454, %v3204, %v3205
      %v3207 = vrot.slane %v2818, 3
      %v3208 = vsel %vm1454, %v3205, %v3207
      %v3209 = vrot.slane %v2819, 3
      %v3210 = vrot.slane %v2820, 3
      %v3211 = vsel %vm1454, %v3209, %v3210
      %v3212 = vrot.slane %v2821, 3
      %v3213 = vsel %vm1454, %v3210, %v3212
      %v3214 = vrot.slane %v2822, 3
      %v3215 = vrot.slane %v2823, 3
      %v3216 = vsel %vm1454, %v3214, %v3215
      %v3217 = vrot.slane %v2824, 3
      %v3218 = vsel %vm1454, %v3215, %v3217
      %v3219 = vrot.slane %v2825, 3
      %v3220 = vrot.slane %v2826, 3
      %v3221 = vsel %vm1454, %v3219, %v3220
      %v3222 = vrot.slane %v2827, 3
      %v3223 = vsel %vm1454, %v3220, %v3222
      %v3224 = vrot.slane %v2828, 3
      %v3225 = vrot.slane %v2829, 3
      %v3226 = vsel %vm1454, %v3224, %v3225
      %v3227 = vrot.slane %v2830, 3
      %v3228 = vsel %vm1454, %v3225, %v3227
      %v3229 = vrot.slane %v2831, 3
      %v3230 = vrot.slane %v2832, 3
      %v3231 = vsel %vm1454, %v3229, %v3230
      %v3232 = vrot.slane %v2833, 3
      %v3233 = vsel %vm1454, %v3230, %v3232
      %v3234 = vrot.slane %v2834, 3
      %v3235 = vrot.slane %v2835, 3
      %v3236 = vsel %vm1454, %v3234, %v3235
      %v3237 = vrot.slane %v2836, 3
      %v3238 = vsel %vm1454, %v3235, %v3237
      %v3239 = vrot.slane %v2837, 3
      %v3240 = vrot.slane %v2838, 3
      %v3241 = vsel %vm1454, %v3239, %v3240
      %v3242 = vrot.slane %v2839, 3
      %v3243 = vsel %vm1454, %v3240, %v3242
      %v3244 = vrot.slane %v2840, 3
      %v3245 = vrot.slane %v2841, 3
      %v3246 = vsel %vm1454, %v3244, %v3245
      %v3247 = vrot.slane %v2842, 3
      %v3248 = vsel %vm1454, %v3245, %v3247
      %v3249 = vrot.slane %v2843, 3
      %v3250 = vrot.slane %v2844, 3
      %v3251 = vsel %vm1454, %v3249, %v3250
      %v3252 = vrot.slane %v2845, 3
      %v3253 = vsel %vm1454, %v3250, %v3252
      %v3254 = vrot.slane %v2846, 3
      %v3255 = vrot.slane %v2847, 3
      %v3256 = vsel %vm1454, %v3254, %v3255
      %v3257 = vrot.slane %v2848, 3
      %v3258 = vsel %vm1454, %v3255, %v3257
      %v3259 = vrot.slane %v2849, 3
      %v3260 = vrot.slane %v2850, 3
      %v3261 = vsel %vm1454, %v3259, %v3260
      %v3262 = vrot.slane %v2851, 3
      %v3263 = vsel %vm1454, %v3260, %v3262
      %v3264 = vrot.slane %v2852, 3
      %v3265 = vrot.slane %v2853, 3
      %v3266 = vsel %vm1454, %v3264, %v3265
      %v3267 = vrot.slane %v2854, 3
      %v3268 = vsel %vm1454, %v3265, %v3267
      %v3269 = vrot.slane %v2855, 3
      %v3270 = vrot.slane %v2856, 3
      %v3271 = vsel %vm1454, %v3269, %v3270
      %v3272 = vrot.slane %v2857, 3
      %v3273 = vsel %vm1454, %v3270, %v3272
      %v3306 = vmax.f32 %v3162, %v3196
      %v3307 = vmax.f32 %v3163, %v3198
      %v3308 = vmax.f32 %v3164, %v3201
      %v3309 = vmax.f32 %v3165, %v3203
      %v3310 = vmax.f32 %v3166, %v3206
      %v3311 = vmax.f32 %v3167, %v3208
      %v3312 = vmax.f32 %v3168, %v3211
      %v3313 = vmax.f32 %v3169, %v3213
      %v3314 = vmax.f32 %v3170, %v3216
      %v3315 = vmax.f32 %v3171, %v3218
      %v3316 = vmax.f32 %v3172, %v3221
      %v3317 = vmax.f32 %v3173, %v3223
      %v3318 = vmax.f32 %v3174, %v3226
      %v3319 = vmax.f32 %v3175, %v3228
      %v3320 = vmax.f32 %v3176, %v3231
      %v3321 = vmax.f32 %v3177, %v3233
      %v3322 = vmax.f32 %v3178, %v3236
      %v3323 = vmax.f32 %v3179, %v3238
      %v3324 = vmax.f32 %v3180, %v3241
      %v3325 = vmax.f32 %v3181, %v3243
      %v3326 = vmax.f32 %v3182, %v3246
      %v3327 = vmax.f32 %v3183, %v3248
      %v3328 = vmax.f32 %v3184, %v3251
      %v3329 = vmax.f32 %v3185, %v3253
      %v3330 = vmax.f32 %v3186, %v3256
      %v3331 = vmax.f32 %v3187, %v3258
      %v3332 = vmax.f32 %v3188, %v3261
      %v3333 = vmax.f32 %v3189, %v3263
      %v3334 = vmax.f32 %v3190, %v3266
      %v3335 = vmax.f32 %v3191, %v3268
      %v3336 = vmax.f32 %v3192, %v3271
      %v3337 = vmax.f32 %v3193, %v3273
      %v3338 = vrot.slane %v2810, 4
      %v3339 = vrot.slane %v2811, 4
      %v3340 = vsel %vm362, %v3338, %v3339
      %v3341 = vrot.slane %v2812, 4
      %v3342 = vsel %vm362, %v3339, %v3341
      %v3343 = vrot.slane %v2813, 4
      %v3344 = vrot.slane %v2814, 4
      %v3345 = vsel %vm362, %v3343, %v3344
      %v3346 = vrot.slane %v2815, 4
      %v3347 = vsel %vm362, %v3344, %v3346
      %v3348 = vrot.slane %v2816, 4
      %v3349 = vrot.slane %v2817, 4
      %v3350 = vsel %vm362, %v3348, %v3349
      %v3351 = vrot.slane %v2818, 4
      %v3352 = vsel %vm362, %v3349, %v3351
      %v3353 = vrot.slane %v2819, 4
      %v3354 = vrot.slane %v2820, 4
      %v3355 = vsel %vm362, %v3353, %v3354
      %v3356 = vrot.slane %v2821, 4
      %v3357 = vsel %vm362, %v3354, %v3356
      %v3358 = vrot.slane %v2822, 4
      %v3359 = vrot.slane %v2823, 4
      %v3360 = vsel %vm362, %v3358, %v3359
      %v3361 = vrot.slane %v2824, 4
      %v3362 = vsel %vm362, %v3359, %v3361
      %v3363 = vrot.slane %v2825, 4
      %v3364 = vrot.slane %v2826, 4
      %v3365 = vsel %vm362, %v3363, %v3364
      %v3366 = vrot.slane %v2827, 4
      %v3367 = vsel %vm362, %v3364, %v3366
      %v3368 = vrot.slane %v2828, 4
      %v3369 = vrot.slane %v2829, 4
      %v3370 = vsel %vm362, %v3368, %v3369
      %v3371 = vrot.slane %v2830, 4
      %v3372 = vsel %vm362, %v3369, %v3371
      %v3373 = vrot.slane %v2831, 4
      %v3374 = vrot.slane %v2832, 4
      %v3375 = vsel %vm362, %v3373, %v3374
      %v3376 = vrot.slane %v2833, 4
      %v3377 = vsel %vm362, %v3374, %v3376
      %v3378 = vrot.slane %v2834, 4
      %v3379 = vrot.slane %v2835, 4
      %v3380 = vsel %vm362, %v3378, %v3379
      %v3381 = vrot.slane %v2836, 4
      %v3382 = vsel %vm362, %v3379, %v3381
      %v3383 = vrot.slane %v2837, 4
      %v3384 = vrot.slane %v2838, 4
      %v3385 = vsel %vm362, %v3383, %v3384
      %v3386 = vrot.slane %v2839, 4
      %v3387 = vsel %vm362, %v3384, %v3386
      %v3388 = vrot.slane %v2840, 4
      %v3389 = vrot.slane %v2841, 4
      %v3390 = vsel %vm362, %v3388, %v3389
      %v3391 = vrot.slane %v2842, 4
      %v3392 = vsel %vm362, %v3389, %v3391
      %v3393 = vrot.slane %v2843, 4
      %v3394 = vrot.slane %v2844, 4
      %v3395 = vsel %vm362, %v3393, %v3394
      %v3396 = vrot.slane %v2845, 4
      %v3397 = vsel %vm362, %v3394, %v3396
      %v3398 = vrot.slane %v2846, 4
      %v3399 = vrot.slane %v2847, 4
      %v3400 = vsel %vm362, %v3398, %v3399
      %v3401 = vrot.slane %v2848, 4
      %v3402 = vsel %vm362, %v3399, %v3401
      %v3403 = vrot.slane %v2849, 4
      %v3404 = vrot.slane %v2850, 4
      %v3405 = vsel %vm362, %v3403, %v3404
      %v3406 = vrot.slane %v2851, 4
      %v3407 = vsel %vm362, %v3404, %v3406
      %v3408 = vrot.slane %v2852, 4
      %v3409 = vrot.slane %v2853, 4
      %v3410 = vsel %vm362, %v3408, %v3409
      %v3411 = vrot.slane %v2854, 4
      %v3412 = vsel %vm362, %v3409, %v3411
      %v3413 = vrot.slane %v2855, 4
      %v3414 = vrot.slane %v2856, 4
      %v3415 = vsel %vm362, %v3413, %v3414
      %v3416 = vrot.slane %v2857, 4
      %v3417 = vsel %vm362, %v3414, %v3416
      %v3450 = vmax.f32 %v3306, %v3340
      %v3451 = vmax.f32 %v3307, %v3342
      %v3452 = vmax.f32 %v3308, %v3345
      %v3453 = vmax.f32 %v3309, %v3347
      %v3454 = vmax.f32 %v3310, %v3350
      %v3455 = vmax.f32 %v3311, %v3352
      %v3456 = vmax.f32 %v3312, %v3355
      %v3457 = vmax.f32 %v3313, %v3357
      %v3458 = vmax.f32 %v3314, %v3360
      %v3459 = vmax.f32 %v3315, %v3362
      %v3460 = vmax.f32 %v3316, %v3365
      %v3461 = vmax.f32 %v3317, %v3367
      %v3462 = vmax.f32 %v3318, %v3370
      %v3463 = vmax.f32 %v3319, %v3372
      %v3464 = vmax.f32 %v3320, %v3375
      %v3465 = vmax.f32 %v3321, %v3377
      %v3466 = vmax.f32 %v3322, %v3380
      %v3467 = vmax.f32 %v3323, %v3382
      %v3468 = vmax.f32 %v3324, %v3385
      %v3469 = vmax.f32 %v3325, %v3387
      %v3470 = vmax.f32 %v3326, %v3390
      %v3471 = vmax.f32 %v3327, %v3392
      %v3472 = vmax.f32 %v3328, %v3395
      %v3473 = vmax.f32 %v3329, %v3397
      %v3474 = vmax.f32 %v3330, %v3400
      %v3475 = vmax.f32 %v3331, %v3402
      %v3476 = vmax.f32 %v3332, %v3405
      %v3477 = vmax.f32 %v3333, %v3407
      %v3478 = vmax.f32 %v3334, %v3410
      %v3479 = vmax.f32 %v3335, %v3412
      %v3480 = vmax.f32 %v3336, %v3415
      %v3481 = vmax.f32 %v3337, %v3417
      %s3482 = scalar_lea.vmem %s3, 4
      %v3483 = vld [vmem:[%s3482] sm:$0x3]
      %v3485 = vsel %vm592, %v3450, 0
      %v3488 = vsel %vm592, %v3451, 0
      %v3491 = vsel %vm592, %v3452, 0
      %v3494 = vsel %vm592, %v3453, 0
      %v3497 = vsel %vm592, %v3454, 0
      %v3500 = vsel %vm592, %v3455, 0
      %v3503 = vsel %vm592, %v3456, 0
      %v3506 = vsel %vm592, %v3457, 0
      %v3509 = vsel %vm592, %v3458, 0
      %v3512 = vsel %vm592, %v3459, 0
      %v3515 = vsel %vm592, %v3460, 0
      %v3518 = vsel %vm592, %v3461, 0
      %v3521 = vsel %vm592, %v3462, 0
      %v3524 = vsel %vm592, %v3463, 0
      %v3527 = vsel %vm592, %v3464, 0
      %v3530 = vsel %vm592, %v3465, 0
      %v3533 = vsel %vm592, %v3466, 0
      %v3536 = vsel %vm592, %v3467, 0
      %v3539 = vsel %vm592, %v3468, 0
      %v3542 = vsel %vm592, %v3469, 0
      %v3545 = vsel %vm592, %v3470, 0
      %v3548 = vsel %vm592, %v3471, 0
      %v3551 = vsel %vm592, %v3472, 0
      %v3554 = vsel %vm592, %v3473, 0
      %v3557 = vsel %vm592, %v3474, 0
      %v3560 = vsel %vm592, %v3475, 0
      %v3563 = vsel %vm592, %v3476, 0
      %v3566 = vsel %vm592, %v3477, 0
      %v3569 = vsel %vm592, %v3478, 0
      %v3572 = vsel %vm592, %v3479, 0
      %v3575 = vsel %vm592, %v3480, 0
      %v3578 = vsel %vm592, %v3481, 0
      %v3581 = vsel %vm1841, %v3483, 0
      %3583 = vmatprep.subr.mxu0 0.0
      %3584 = vmatpush1.msra.mxu0 0.0
      %3585 = vmatprep.subr.mxu0 0.0
      %3586 = vmatpush1.msra.mxu0 0.0
      %3587 = vmatprep.subr.mxu0 0.0
      %3588 = vmatpush1.msra.mxu0 0.0
      %3589 = vmatprep.subr.mxu0 0.0
      %3590 = vmatpush1.msra.mxu0 0.0
      %3591 = vmatprep.subr.mxu0 0.0
      %3592 = vmatpush1.msra.mxu0 0.0
      %3593 = vmatprep.subr.mxu0 0.0
      %3594 = vmatpush1.msra.mxu0 0.0
      %3595 = vmatprep.subr.mxu0 0.0
      %3596 = vmatpush1.msra.mxu0 0.0
      %3597 = vmatprep.subr.mxu0 0.0
      %3598 = vmatpush1.msra.mxu0 0.0
      %3599 = vmatprep.subr.mxu0 0.0
      %3600 = vmatpush1.msra.mxu0 0.0
      %3601 = vmatprep.subr.mxu0 0.0
      %3602 = vmatpush1.msra.mxu0 0.0
      %3603 = vmatprep.subr.mxu0 0.0
      %3604 = vmatpush1.msra.mxu0 0.0
      %3605 = vmatprep.subr.mxu0 0.0
      %3606 = vmatpush1.msra.mxu0 0.0
      %3607 = vmatprep.subr.mxu0 0.0
      %3608 = vmatpush1.msra.mxu0 0.0
      %3609 = vmatprep.subr.mxu0 0.0
      %3610 = vmatpush1.msra.mxu0 0.0
      %3611 = vmatprep.subr.mxu0 0.0
      %3612 = vmatpush1.msra.mxu0 0.0
      %3613 = vmatprep.subr.mxu0 0.0
      %3614 = vmatpush1.msra.mxu0 %v3581
      %3615 = vmatprep.subr.mxu0 0.0
      %3616 = vmatpush2.msra.mxu0 0.0
      %3617 = vmatprep.subr.mxu0 0.0
      %3618 = vmatpush2.msra.mxu0 0.0
      %3619 = vmatprep.subr.mxu0 0.0
      %3620 = vmatpush2.msra.mxu0 0.0
      %3621 = vmatprep.subr.mxu0 0.0
      %3622 = vmatpush2.msra.mxu0 0.0
      %3623 = vmatprep.subr.mxu0 0.0
      %3624 = vmatpush2.msra.mxu0 0.0
      %3625 = vmatprep.subr.mxu0 0.0
      %3626 = vmatpush2.msra.mxu0 0.0
      %3627 = vmatprep.subr.mxu0 0.0
      %3628 = vmatpush2.msra.mxu0 0.0
      %3629 = vmatprep.subr.mxu0 0.0
      %3630 = vmatpush2.msra.mxu0 0.0
      %3631 = vmatprep.subr.mxu0 0.0
      %3632 = vmatpush2.msra.mxu0 0.0
      %3633 = vmatprep.subr.mxu0 0.0
      %3634 = vmatpush2.msra.mxu0 0.0
      %3635 = vmatprep.subr.mxu0 0.0
      %3636 = vmatpush2.msra.mxu0 0.0
      %3637 = vmatprep.subr.mxu0 0.0
      %3638 = vmatpush2.msra.mxu0 0.0
      %3639 = vmatprep.subr.mxu0 0.0
      %3640 = vmatpush2.msra.mxu0 0.0
      %3641 = vmatprep.subr.mxu0 0.0
      %3642 = vmatpush2.msra.mxu0 0.0
      %3643 = vmatprep.subr.mxu0 0.0
      %3644 = vmatpush2.msra.mxu0 0.0
      %3645 = vmatprep.subr.mxu0 0.0
      %3646 = vmatpush2.msra.mxu0 0.0
      %3647 = vmatprep.mubr.f32.mxu0 0.0
      %3648 = vmatmul.mubr.f32.gmra.mxu0 %v3485
      %v3649 = vpop.f32.mrf.mxu0
      %v3650 = vadd.f32 0.0, %v3649
      %v3651 = vpop.f32.mrf.mxu0
      %3652 = vmatprep.mubr.f32.mxu0 0.0
      %3653 = vmatmul.mubr.f32.gmra.mxu0 %v3488
      %v3654 = vpop.f32.mrf.mxu0
      %v3655 = vadd.f32 0.0, %v3654
      %v3656 = vpop.f32.mrf.mxu0
      %3657 = vmatprep.mubr.f32.mxu0 0.0
      %3658 = vmatmul.mubr.f32.gmra.mxu0 %v3491
      %v3659 = vpop.f32.mrf.mxu0
      %v3660 = vadd.f32 0.0, %v3659
      %v3661 = vpop.f32.mrf.mxu0
      %3662 = vmatprep.mubr.f32.mxu0 0.0
      %3663 = vmatmul.mubr.f32.gmra.mxu0 %v3494
      %v3664 = vpop.f32.mrf.mxu0
      %v3665 = vadd.f32 0.0, %v3664
      %v3666 = vpop.f32.mrf.mxu0
      %3667 = vmatprep.mubr.f32.mxu0 0.0
      %3668 = vmatmul.mubr.f32.gmra.mxu0 %v3497
      %v3669 = vpop.f32.mrf.mxu0
      %v3670 = vadd.f32 0.0, %v3669
      %v3671 = vpop.f32.mrf.mxu0
      %3672 = vmatprep.mubr.f32.mxu0 0.0
      %3673 = vmatmul.mubr.f32.gmra.mxu0 %v3500
      %v3674 = vpop.f32.mrf.mxu0
      %v3675 = vadd.f32 0.0, %v3674
      %v3676 = vpop.f32.mrf.mxu0
      %3677 = vmatprep.mubr.f32.mxu0 0.0
      %3678 = vmatmul.mubr.f32.gmra.mxu0 %v3503
      %v3679 = vpop.f32.mrf.mxu0
      %v3680 = vadd.f32 0.0, %v3679
      %v3681 = vpop.f32.mrf.mxu0
      %3682 = vmatprep.mubr.f32.mxu0 0.0
      %3683 = vmatmul.mubr.f32.gmra.mxu0 %v3506
      %v3684 = vpop.f32.mrf.mxu0
      %v3685 = vadd.f32 0.0, %v3684
      %v3686 = vpop.f32.mrf.mxu0
      %3687 = vmatprep.mubr.f32.mxu0 0.0
      %3688 = vmatmul.mubr.f32.gmra.mxu0 %v3509
      %v3689 = vpop.f32.mrf.mxu0
      %v3690 = vadd.f32 0.0, %v3689
      %v3691 = vpop.f32.mrf.mxu0
      %3692 = vmatprep.mubr.f32.mxu0 0.0
      %3693 = vmatmul.mubr.f32.gmra.mxu0 %v3512
      %v3694 = vpop.f32.mrf.mxu0
      %v3695 = vadd.f32 0.0, %v3694
      %v3696 = vpop.f32.mrf.mxu0
      %3697 = vmatprep.mubr.f32.mxu0 0.0
      %3698 = vmatmul.mubr.f32.gmra.mxu0 %v3515
      %v3699 = vpop.f32.mrf.mxu0
      %v3700 = vadd.f32 0.0, %v3699
      %v3701 = vpop.f32.mrf.mxu0
      %3702 = vmatprep.mubr.f32.mxu0 0.0
      %3703 = vmatmul.mubr.f32.gmra.mxu0 %v3518
      %v3704 = vpop.f32.mrf.mxu0
      %v3705 = vadd.f32 0.0, %v3704
      %v3706 = vpop.f32.mrf.mxu0
      %3707 = vmatprep.mubr.f32.mxu0 0.0
      %3708 = vmatmul.mubr.f32.gmra.mxu0 %v3521
      %v3709 = vpop.f32.mrf.mxu0
      %v3710 = vadd.f32 0.0, %v3709
      %v3711 = vpop.f32.mrf.mxu0
      %3712 = vmatprep.mubr.f32.mxu0 0.0
      %3713 = vmatmul.mubr.f32.gmra.mxu0 %v3524
      %v3714 = vpop.f32.mrf.mxu0
      %v3715 = vadd.f32 0.0, %v3714
      %v3716 = vpop.f32.mrf.mxu0
      %3717 = vmatprep.mubr.f32.mxu0 0.0
      %3718 = vmatmul.mubr.f32.gmra.mxu0 %v3527
      %v3719 = vpop.f32.mrf.mxu0
      %v3720 = vadd.f32 0.0, %v3719
      %v3721 = vpop.f32.mrf.mxu0
      %3722 = vmatprep.mubr.f32.mxu0 0.0
      %3723 = vmatmul.mubr.f32.gmra.mxu0 %v3530
      %v3724 = vpop.f32.mrf.mxu0
      %v3725 = vadd.f32 0.0, %v3724
      %v3726 = vpop.f32.mrf.mxu0
      %3727 = vmatprep.mubr.f32.mxu0 0.0
      %3728 = vmatmul.mubr.f32.gmra.mxu0 %v3533
      %v3729 = vpop.f32.mrf.mxu0
      %v3730 = vadd.f32 0.0, %v3729
      %v3731 = vpop.f32.mrf.mxu0
      %3732 = vmatprep.mubr.f32.mxu0 0.0
      %3733 = vmatmul.mubr.f32.gmra.mxu0 %v3536
      %v3734 = vpop.f32.mrf.mxu0
      %v3735 = vadd.f32 0.0, %v3734
      %v3736 = vpop.f32.mrf.mxu0
      %3737 = vmatprep.mubr.f32.mxu0 0.0
      %3738 = vmatmul.mubr.f32.gmra.mxu0 %v3539
      %v3739 = vpop.f32.mrf.mxu0
      %v3740 = vadd.f32 0.0, %v3739
      %v3741 = vpop.f32.mrf.mxu0
      %3742 = vmatprep.mubr.f32.mxu0 0.0
      %3743 = vmatmul.mubr.f32.gmra.mxu0 %v3542
      %v3744 = vpop.f32.mrf.mxu0
      %v3745 = vadd.f32 0.0, %v3744
      %v3746 = vpop.f32.mrf.mxu0
      %3747 = vmatprep.mubr.f32.mxu0 0.0
      %3748 = vmatmul.mubr.f32.gmra.mxu0 %v3545
      %v3749 = vpop.f32.mrf.mxu0
      %v3750 = vadd.f32 0.0, %v3749
      %v3751 = vpop.f32.mrf.mxu0
      %3752 = vmatprep.mubr.f32.mxu0 0.0
      %3753 = vmatmul.mubr.f32.gmra.mxu0 %v3548
      %v3754 = vpop.f32.mrf.mxu0
      %v3755 = vadd.f32 0.0, %v3754
      %v3756 = vpop.f32.mrf.mxu0
      %3757 = vmatprep.mubr.f32.mxu0 0.0
      %3758 = vmatmul.mubr.f32.gmra.mxu0 %v3551
      %v3759 = vpop.f32.mrf.mxu0
      %v3760 = vadd.f32 0.0, %v3759
      %v3761 = vpop.f32.mrf.mxu0
      %3762 = vmatprep.mubr.f32.mxu0 0.0
      %3763 = vmatmul.mubr.f32.gmra.mxu0 %v3554
      %v3764 = vpop.f32.mrf.mxu0
      %v3765 = vadd.f32 0.0, %v3764
      %v3766 = vpop.f32.mrf.mxu0
      %3767 = vmatprep.mubr.f32.mxu0 0.0
      %3768 = vmatmul.mubr.f32.gmra.mxu0 %v3557
      %v3769 = vpop.f32.mrf.mxu0
      %v3770 = vadd.f32 0.0, %v3769
      %v3771 = vpop.f32.mrf.mxu0
      %3772 = vmatprep.mubr.f32.mxu0 0.0
      %3773 = vmatmul.mubr.f32.gmra.mxu0 %v3560
      %v3774 = vpop.f32.mrf.mxu0
      %v3775 = vadd.f32 0.0, %v3774
      %v3776 = vpop.f32.mrf.mxu0
      %3777 = vmatprep.mubr.f32.mxu0 0.0
      %3778 = vmatmul.mubr.f32.gmra.mxu0 %v3563
      %v3779 = vpop.f32.mrf.mxu0
      %v3780 = vadd.f32 0.0, %v3779
      %v3781 = vpop.f32.mrf.mxu0
      %3782 = vmatprep.mubr.f32.mxu0 0.0
      %3783 = vmatmul.mubr.f32.gmra.mxu0 %v3566
      %v3784 = vpop.f32.mrf.mxu0
      %v3785 = vadd.f32 0.0, %v3784
      %v3786 = vpop.f32.mrf.mxu0
      %3787 = vmatprep.mubr.f32.mxu0 0.0
      %3788 = vmatmul.mubr.f32.gmra.mxu0 %v3569
      %v3789 = vpop.f32.mrf.mxu0
      %v3790 = vadd.f32 0.0, %v3789
      %v3791 = vpop.f32.mrf.mxu0
      %3792 = vmatprep.mubr.f32.mxu0 0.0
      %3793 = vmatmul.mubr.f32.gmra.mxu0 %v3572
      %v3794 = vpop.f32.mrf.mxu0
      %v3795 = vadd.f32 0.0, %v3794
      %v3796 = vpop.f32.mrf.mxu0
      %3797 = vmatprep.mubr.f32.mxu0 0.0
      %3798 = vmatmul.mubr.f32.gmra.mxu0 %v3575
      %v3799 = vpop.f32.mrf.mxu0
      %v3800 = vadd.f32 0.0, %v3799
      %v3801 = vpop.f32.mrf.mxu0
      %3802 = vmatprep.mubr.f32.mxu0 0.0
      %3803 = vmatmul.mubr.f32.gmra.mxu0 %v3578
      %v3804 = vpop.f32.mrf.mxu0
      %v3805 = vadd.f32 0.0, %v3804
      %v3806 = vpop.f32.mrf.mxu0
      %3807 = vdwg.mxu0
      %v3808 = vadd.f32 %v2236, %v3650
      %v3809 = vadd.f32 %v2241, %v3655
      %v3810 = vadd.f32 %v2246, %v3660
      %v3811 = vadd.f32 %v2251, %v3665
      %v3812 = vadd.f32 %v2256, %v3670
      %v3813 = vadd.f32 %v2261, %v3675
      %v3814 = vadd.f32 %v2266, %v3680
      %v3815 = vadd.f32 %v2271, %v3685
      %v3816 = vadd.f32 %v2276, %v3690
      %v3817 = vadd.f32 %v2281, %v3695
      %v3818 = vadd.f32 %v2286, %v3700
      %v3819 = vadd.f32 %v2291, %v3705
      %v3820 = vadd.f32 %v2296, %v3710
      %v3821 = vadd.f32 %v2301, %v3715
      %v3822 = vadd.f32 %v2306, %v3720
      %v3823 = vadd.f32 %v2311, %v3725
      %v3824 = vadd.f32 %v2316, %v3730
      %v3825 = vadd.f32 %v2321, %v3735
      %v3826 = vadd.f32 %v2326, %v3740
      %v3827 = vadd.f32 %v2331, %v3745
      %v3828 = vadd.f32 %v2336, %v3750
      %v3829 = vadd.f32 %v2341, %v3755
      %v3830 = vadd.f32 %v2346, %v3760
      %v3831 = vadd.f32 %v2351, %v3765
      %v3832 = vadd.f32 %v2356, %v3770
      %v3833 = vadd.f32 %v2361, %v3775
      %v3834 = vadd.f32 %v2366, %v3780
      %v3835 = vadd.f32 %v2371, %v3785
      %v3836 = vadd.f32 %v2376, %v3790
      %v3837 = vadd.f32 %v2381, %v3795
      %v3838 = vadd.f32 %v2386, %v3800
      %v3839 = vadd.f32 %v2391, %v3805
      %3840 = vst.msk [vmem:[%s648 + $0x2] sm:$0xff] %vm592, %v3450
      %3841 = vst.msk [vmem:[%s648 + $0xa] sm:$0xff] %vm592, %v3451
      %3842 = vst.msk [vmem:[%s648 + $0x1a] sm:$0xff] %vm592, %v3452
      %3843 = vst.msk [vmem:[%s648 + $0x22] sm:$0xff] %vm592, %v3453
      %3844 = vst.msk [vmem:[%s648 + $0x32] sm:$0xff] %vm592, %v3454
      %3845 = vst.msk [vmem:[%s648 + $0x3a] sm:$0xff] %vm592, %v3455
      %3846 = vst.msk [vmem:[%s648 + $0x4a] sm:$0xff] %vm592, %v3456
      %3847 = vst.msk [vmem:[%s648 + $0x52] sm:$0xff] %vm592, %v3457
      %3848 = vst.msk [vmem:[%s648 + $0x62] sm:$0xff] %vm592, %v3458
      %3849 = vst.msk [vmem:[%s648 + $0x6a] sm:$0xff] %vm592, %v3459
      %3850 = vst.msk [vmem:[%s648 + $0x7a] sm:$0xff] %vm592, %v3460
      %3851 = vst.msk [vmem:[%s648 + $0x82] sm:$0xff] %vm592, %v3461
      %3852 = vst.msk [vmem:[%s648 + $0x92] sm:$0xff] %vm592, %v3462
      %3853 = vst.msk [vmem:[%s648 + $0x9a] sm:$0xff] %vm592, %v3463
      %3854 = vst.msk [vmem:[%s648 + $0xaa] sm:$0xff] %vm592, %v3464
      %3855 = vst.msk [vmem:[%s648 + $0xb2] sm:$0xff] %vm592, %v3465
      %3856 = vst.msk [vmem:[%s648 + $0xc2] sm:$0xff] %vm592, %v3466
      %3857 = vst.msk [vmem:[%s648 + $0xca] sm:$0xff] %vm592, %v3467
      %3858 = vst.msk [vmem:[%s648 + $0xda] sm:$0xff] %vm592, %v3468
      %3859 = vst.msk [vmem:[%s648 + $0xe2] sm:$0xff] %vm592, %v3469
      %3860 = vst.msk [vmem:[%s648 + $0xf2] sm:$0xff] %vm592, %v3470
      %3861 = vst.msk [vmem:[%s648 + $0xfa] sm:$0xff] %vm592, %v3471
      %3862 = vst.msk [vmem:[%s648 + $0x10a] sm:$0xff] %vm592, %v3472
      %3863 = vst.msk [vmem:[%s648 + $0x112] sm:$0xff] %vm592, %v3473
      %3864 = vst.msk [vmem:[%s648 + $0x122] sm:$0xff] %vm592, %v3474
      %3865 = vst.msk [vmem:[%s648 + $0x12a] sm:$0xff] %vm592, %v3475
      %3866 = vst.msk [vmem:[%s648 + $0x13a] sm:$0xff] %vm592, %v3476
      %3867 = vst.msk [vmem:[%s648 + $0x142] sm:$0xff] %vm592, %v3477
      %3868 = vst.msk [vmem:[%s648 + $0x152] sm:$0xff] %vm592, %v3478
      %3869 = vst.msk [vmem:[%s648 + $0x15a] sm:$0xff] %vm592, %v3479
      %3870 = vst.msk [vmem:[%s648 + $0x16a] sm:$0xff] %vm592, %v3480
      %3871 = vst.msk [vmem:[%s648 + $0x172] sm:$0xff] %vm592, %v3481
      %v3872 = vld [vmem:[#allocation2] sm:$0xff]
      %v3873 = vld [vmem:[#allocation2 + $0x8] sm:$0xff]
      %v3874 = vld [vmem:[#allocation2 + $0x10] sm:$0xf]
      %v3875 = vld [vmem:[#allocation2 + $0x18] sm:$0xff]
      %v3876 = vld [vmem:[#allocation2 + $0x20] sm:$0xff]
      %v3877 = vld [vmem:[#allocation2 + $0x28] sm:$0xf]
      %v3878 = vld [vmem:[#allocation2 + $0x30] sm:$0xff]
      %v3879 = vld [vmem:[#allocation2 + $0x38] sm:$0xff]
      %v3880 = vld [vmem:[#allocation2 + $0x40] sm:$0xf]
      %v3881 = vld [vmem:[#allocation2 + $0x48] sm:$0xff]
      %v3882 = vld [vmem:[#allocation2 + $0x50] sm:$0xff]
      %v3883 = vld [vmem:[#allocation2 + $0x58] sm:$0xf]
      %v3884 = vld [vmem:[#allocation2 + $0x60] sm:$0xff]
      %v3885 = vld [vmem:[#allocation2 + $0x68] sm:$0xff]
      %v3886 = vld [vmem:[#allocation2 + $0x70] sm:$0xf]
      %v3887 = vld [vmem:[#allocation2 + $0x78] sm:$0xff]
      %v3888 = vld [vmem:[#allocation2 + $0x80] sm:$0xff]
      %v3889 = vld [vmem:[#allocation2 + $0x88] sm:$0xf]
      %v3890 = vld [vmem:[#allocation2 + $0x90] sm:$0xff]
      %v3891 = vld [vmem:[#allocation2 + $0x98] sm:$0xff]
      %v3892 = vld [vmem:[#allocation2 + $0xa0] sm:$0xf]
      %v3893 = vld [vmem:[#allocation2 + $0xa8] sm:$0xff]
      %v3894 = vld [vmem:[#allocation2 + $0xb0] sm:$0xff]
      %v3895 = vld [vmem:[#allocation2 + $0xb8] sm:$0xf]
      %v3896 = vld [vmem:[#allocation2 + $0xc0] sm:$0xff]
      %v3897 = vld [vmem:[#allocation2 + $0xc8] sm:$0xff]
      %v3898 = vld [vmem:[#allocation2 + $0xd0] sm:$0xf]
      %v3899 = vld [vmem:[#allocation2 + $0xd8] sm:$0xff]
      %v3900 = vld [vmem:[#allocation2 + $0xe0] sm:$0xff]
      %v3901 = vld [vmem:[#allocation2 + $0xe8] sm:$0xf]
      %v3902 = vld [vmem:[#allocation2 + $0xf0] sm:$0xff]
      %v3903 = vld [vmem:[#allocation2 + $0xf8] sm:$0xff]
      %v3904 = vld [vmem:[#allocation2 + $0x100] sm:$0xf]
      %v3905 = vld [vmem:[#allocation2 + $0x108] sm:$0xff]
      %v3906 = vld [vmem:[#allocation2 + $0x110] sm:$0xff]
      %v3907 = vld [vmem:[#allocation2 + $0x118] sm:$0xf]
      %v3908 = vld [vmem:[#allocation2 + $0x120] sm:$0xff]
      %v3909 = vld [vmem:[#allocation2 + $0x128] sm:$0xff]
      %v3910 = vld [vmem:[#allocation2 + $0x130] sm:$0xf]
      %v3911 = vld [vmem:[#allocation2 + $0x138] sm:$0xff]
      %v3912 = vld [vmem:[#allocation2 + $0x140] sm:$0xff]
      %v3913 = vld [vmem:[#allocation2 + $0x148] sm:$0xf]
      %v3914 = vld [vmem:[#allocation2 + $0x150] sm:$0xff]
      %v3915 = vld [vmem:[#allocation2 + $0x158] sm:$0xff]
      %v3916 = vld [vmem:[#allocation2 + $0x160] sm:$0xf]
      %v3917 = vld [vmem:[#allocation2 + $0x168] sm:$0xff]
      %v3918 = vld [vmem:[#allocation2 + $0x170] sm:$0xff]
      %v3919 = vld [vmem:[#allocation2 + $0x178] sm:$0xf]
      %v3920 = vld [vmem:[%s729] sm:$0xff]
      %v3921 = vld [vmem:[%s729 + $0x8] sm:$0xff]
      %v3922 = vld [vmem:[%s729 + $0x10] sm:$0xf]
      %v3923 = vld [vmem:[%s729 + $0x18] sm:$0xff]
      %v3924 = vld [vmem:[%s729 + $0x20] sm:$0xff]
      %v3925 = vld [vmem:[%s729 + $0x28] sm:$0xf]
      %v3926 = vld [vmem:[%s729 + $0x30] sm:$0xff]
      %v3927 = vld [vmem:[%s729 + $0x38] sm:$0xff]
      %v3928 = vld [vmem:[%s729 + $0x40] sm:$0xf]
      %v3929 = vld [vmem:[%s729 + $0x48] sm:$0xff]
      %v3930 = vld [vmem:[%s729 + $0x50] sm:$0xff]
      %v3931 = vld [vmem:[%s729 + $0x58] sm:$0xf]
      %v3932 = vld [vmem:[%s729 + $0x60] sm:$0xff]
      %v3933 = vld [vmem:[%s729 + $0x68] sm:$0xff]
      %v3934 = vld [vmem:[%s729 + $0x70] sm:$0xf]
      %v3935 = vld [vmem:[%s729 + $0x78] sm:$0xff]
      %v3936 = vld [vmem:[%s729 + $0x80] sm:$0xff]
      %v3937 = vld [vmem:[%s729 + $0x88] sm:$0xf]
      %v3938 = vld [vmem:[%s729 + $0x90] sm:$0xff]
      %v3939 = vld [vmem:[%s729 + $0x98] sm:$0xff]
      %v3940 = vld [vmem:[%s729 + $0xa0] sm:$0xf]
      %v3941 = vld [vmem:[%s729 + $0xa8] sm:$0xff]
      %v3942 = vld [vmem:[%s729 + $0xb0] sm:$0xff]
      %v3943 = vld [vmem:[%s729 + $0xb8] sm:$0xf]
      %v3944 = vld [vmem:[%s729 + $0xc0] sm:$0xff]
      %v3945 = vld [vmem:[%s729 + $0xc8] sm:$0xff]
      %v3946 = vld [vmem:[%s729 + $0xd0] sm:$0xf]
      %v3947 = vld [vmem:[%s729 + $0xd8] sm:$0xff]
      %v3948 = vld [vmem:[%s729 + $0xe0] sm:$0xff]
      %v3949 = vld [vmem:[%s729 + $0xe8] sm:$0xf]
      %v3950 = vld [vmem:[%s729 + $0xf0] sm:$0xff]
      %v3951 = vld [vmem:[%s729 + $0xf8] sm:$0xff]
      %v3952 = vld [vmem:[%s729 + $0x100] sm:$0xf]
      %v3953 = vld [vmem:[%s729 + $0x108] sm:$0xff]
      %v3954 = vld [vmem:[%s729 + $0x110] sm:$0xff]
      %v3955 = vld [vmem:[%s729 + $0x118] sm:$0xf]
      %v3956 = vld [vmem:[%s729 + $0x120] sm:$0xff]
      %v3957 = vld [vmem:[%s729 + $0x128] sm:$0xff]
      %v3958 = vld [vmem:[%s729 + $0x130] sm:$0xf]
      %v3959 = vld [vmem:[%s729 + $0x138] sm:$0xff]
      %v3960 = vld [vmem:[%s729 + $0x140] sm:$0xff]
      %v3961 = vld [vmem:[%s729 + $0x148] sm:$0xf]
      %v3962 = vld [vmem:[%s729 + $0x150] sm:$0xff]
      %v3963 = vld [vmem:[%s729 + $0x158] sm:$0xff]
      %v3964 = vld [vmem:[%s729 + $0x160] sm:$0xf]
      %v3965 = vld [vmem:[%s729 + $0x168] sm:$0xff]
      %v3966 = vld [vmem:[%s729 + $0x170] sm:$0xff]
      %v3967 = vld [vmem:[%s729 + $0x178] sm:$0xf]
      %v3968 = vmax.f32 %v3872, %v3920
      %v3969 = vmax.f32 %v3873, %v3921
      %v3970 = vmax.f32 %v3874, %v3922
      %v3971 = vmax.f32 %v3875, %v3923
      %v3972 = vmax.f32 %v3876, %v3924
      %v3973 = vmax.f32 %v3877, %v3925
      %v3974 = vmax.f32 %v3878, %v3926
      %v3975 = vmax.f32 %v3879, %v3927
      %v3976 = vmax.f32 %v3880, %v3928
      %v3977 = vmax.f32 %v3881, %v3929
      %v3978 = vmax.f32 %v3882, %v3930
      %v3979 = vmax.f32 %v3883, %v3931
      %v3980 = vmax.f32 %v3884, %v3932
      %v3981 = vmax.f32 %v3885, %v3933
      %v3982 = vmax.f32 %v3886, %v3934
      %v3983 = vmax.f32 %v3887, %v3935
      %v3984 = vmax.f32 %v3888, %v3936
      %v3985 = vmax.f32 %v3889, %v3937
      %v3986 = vmax.f32 %v3890, %v3938
      %v3987 = vmax.f32 %v3891, %v3939
      %v3988 = vmax.f32 %v3892, %v3940
      %v3989 = vmax.f32 %v3893, %v3941
      %v3990 = vmax.f32 %v3894, %v3942
      %v3991 = vmax.f32 %v3895, %v3943
      %v3992 = vmax.f32 %v3896, %v3944
      %v3993 = vmax.f32 %v3897, %v3945
      %v3994 = vmax.f32 %v3898, %v3946
      %v3995 = vmax.f32 %v3899, %v3947
      %v3996 = vmax.f32 %v3900, %v3948
      %v3997 = vmax.f32 %v3901, %v3949
      %v3998 = vmax.f32 %v3902, %v3950
      %v3999 = vmax.f32 %v3903, %v3951
      %v4000 = vmax.f32 %v3904, %v3952
      %v4001 = vmax.f32 %v3905, %v3953
      %v4002 = vmax.f32 %v3906, %v3954
      %v4003 = vmax.f32 %v3907, %v3955
      %v4004 = vmax.f32 %v3908, %v3956
      %v4005 = vmax.f32 %v3909, %v3957
      %v4006 = vmax.f32 %v3910, %v3958
      %v4007 = vmax.f32 %v3911, %v3959
      %v4008 = vmax.f32 %v3912, %v3960
      %v4009 = vmax.f32 %v3913, %v3961
      %v4010 = vmax.f32 %v3914, %v3962
      %v4011 = vmax.f32 %v3915, %v3963
      %v4012 = vmax.f32 %v3916, %v3964
      %v4013 = vmax.f32 %v3917, %v3965
      %v4014 = vmax.f32 %v3918, %v3966
      %v4015 = vmax.f32 %v3919, %v3967
      %v4016 = vld [vmem:[%s648] sm:$0xff]
      %v4017 = vld [vmem:[%s648 + $0x8] sm:$0xff]
      %v4018 = vld [vmem:[%s648 + $0x10] sm:$0xf]
      %v4019 = vld [vmem:[%s648 + $0x18] sm:$0xff]
      %v4020 = vld [vmem:[%s648 + $0x20] sm:$0xff]
      %v4021 = vld [vmem:[%s648 + $0x28] sm:$0xf]
      %v4022 = vld [vmem:[%s648 + $0x30] sm:$0xff]
      %v4023 = vld [vmem:[%s648 + $0x38] sm:$0xff]
      %v4024 = vld [vmem:[%s648 + $0x40] sm:$0xf]
      %v4025 = vld [vmem:[%s648 + $0x48] sm:$0xff]
      %v4026 = vld [vmem:[%s648 + $0x50] sm:$0xff]
      %v4027 = vld [vmem:[%s648 + $0x58] sm:$0xf]
      %v4028 = vld [vmem:[%s648 + $0x60] sm:$0xff]
      %v4029 = vld [vmem:[%s648 + $0x68] sm:$0xff]
      %v4030 = vld [vmem:[%s648 + $0x70] sm:$0xf]
      %v4031 = vld [vmem:[%s648 + $0x78] sm:$0xff]
      %v4032 = vld [vmem:[%s648 + $0x80] sm:$0xff]
      %v4033 = vld [vmem:[%s648 + $0x88] sm:$0xf]
      %v4034 = vld [vmem:[%s648 + $0x90] sm:$0xff]
      %v4035 = vld [vmem:[%s648 + $0x98] sm:$0xff]
      %v4036 = vld [vmem:[%s648 + $0xa0] sm:$0xf]
      %v4037 = vld [vmem:[%s648 + $0xa8] sm:$0xff]
      %v4038 = vld [vmem:[%s648 + $0xb0] sm:$0xff]
      %v4039 = vld [vmem:[%s648 + $0xb8] sm:$0xf]
      %v4040 = vld [vmem:[%s648 + $0xc0] sm:$0xff]
      %v4041 = vld [vmem:[%s648 + $0xc8] sm:$0xff]
      %v4042 = vld [vmem:[%s648 + $0xd0] sm:$0xf]
      %v4043 = vld [vmem:[%s648 + $0xd8] sm:$0xff]
      %v4044 = vld [vmem:[%s648 + $0xe0] sm:$0xff]
      %v4045 = vld [vmem:[%s648 + $0xe8] sm:$0xf]
      %v4046 = vld [vmem:[%s648 + $0xf0] sm:$0xff]
      %v4047 = vld [vmem:[%s648 + $0xf8] sm:$0xff]
      %v4048 = vld [vmem:[%s648 + $0x100] sm:$0xf]
      %v4049 = vld [vmem:[%s648 + $0x108] sm:$0xff]
      %v4050 = vld [vmem:[%s648 + $0x110] sm:$0xff]
      %v4051 = vld [vmem:[%s648 + $0x118] sm:$0xf]
      %v4052 = vld [vmem:[%s648 + $0x120] sm:$0xff]
      %v4053 = vld [vmem:[%s648 + $0x128] sm:$0xff]
      %v4054 = vld [vmem:[%s648 + $0x130] sm:$0xf]
      %v4055 = vld [vmem:[%s648 + $0x138] sm:$0xff]
      %v4056 = vld [vmem:[%s648 + $0x140] sm:$0xff]
      %v4057 = vld [vmem:[%s648 + $0x148] sm:$0xf]
      %v4058 = vld [vmem:[%s648 + $0x150] sm:$0xff]
      %v4059 = vld [vmem:[%s648 + $0x158] sm:$0xff]
      %v4060 = vld [vmem:[%s648 + $0x160] sm:$0xf]
      %v4061 = vld [vmem:[%s648 + $0x168] sm:$0xff]
      %v4062 = vld [vmem:[%s648 + $0x170] sm:$0xff]
      %v4063 = vld [vmem:[%s648 + $0x178] sm:$0xf]
      %v4064 = vmax.f32 %v3968, %v4016
      %v4065 = vmax.f32 %v3969, %v4017
      %v4066 = vmax.f32 %v3970, %v4018
      %v4067 = vmax.f32 %v3971, %v4019
      %v4068 = vmax.f32 %v3972, %v4020
      %v4069 = vmax.f32 %v3973, %v4021
      %v4070 = vmax.f32 %v3974, %v4022
      %v4071 = vmax.f32 %v3975, %v4023
      %v4072 = vmax.f32 %v3976, %v4024
      %v4073 = vmax.f32 %v3977, %v4025
      %v4074 = vmax.f32 %v3978, %v4026
      %v4075 = vmax.f32 %v3979, %v4027
      %v4076 = vmax.f32 %v3980, %v4028
      %v4077 = vmax.f32 %v3981, %v4029
      %v4078 = vmax.f32 %v3982, %v4030
      %v4079 = vmax.f32 %v3983, %v4031
      %v4080 = vmax.f32 %v3984, %v4032
      %v4081 = vmax.f32 %v3985, %v4033
      %v4082 = vmax.f32 %v3986, %v4034
      %v4083 = vmax.f32 %v3987, %v4035
      %v4084 = vmax.f32 %v3988, %v4036
      %v4085 = vmax.f32 %v3989, %v4037
      %v4086 = vmax.f32 %v3990, %v4038
      %v4087 = vmax.f32 %v3991, %v4039
      %v4088 = vmax.f32 %v3992, %v4040
      %v4089 = vmax.f32 %v3993, %v4041
      %v4090 = vmax.f32 %v3994, %v4042
      %v4091 = vmax.f32 %v3995, %v4043
      %v4092 = vmax.f32 %v3996, %v4044
      %v4093 = vmax.f32 %v3997, %v4045
      %v4094 = vmax.f32 %v3998, %v4046
      %v4095 = vmax.f32 %v3999, %v4047
      %v4096 = vmax.f32 %v4000, %v4048
      %v4097 = vmax.f32 %v4001, %v4049
      %v4098 = vmax.f32 %v4002, %v4050
      %v4099 = vmax.f32 %v4003, %v4051
      %v4100 = vmax.f32 %v4004, %v4052
      %v4101 = vmax.f32 %v4005, %v4053
      %v4102 = vmax.f32 %v4006, %v4054
      %v4103 = vmax.f32 %v4007, %v4055
      %v4104 = vmax.f32 %v4008, %v4056
      %v4105 = vmax.f32 %v4009, %v4057
      %v4106 = vmax.f32 %v4010, %v4058
      %v4107 = vmax.f32 %v4011, %v4059
      %v4108 = vmax.f32 %v4012, %v4060
      %v4109 = vmax.f32 %v4013, %v4061
      %v4110 = vmax.f32 %v4014, %v4062
      %v4111 = vmax.f32 %v4015, %v4063
      %v4112 = vld [vmem:[%s922] sm:$0xff]
      %v4113 = vld [vmem:[%s922 + $0x8] sm:$0xff]
      %v4114 = vld [vmem:[%s922 + $0x10] sm:$0xf]
      %v4115 = vld [vmem:[%s922 + $0x18] sm:$0xff]
      %v4116 = vld [vmem:[%s922 + $0x20] sm:$0xff]
      %v4117 = vld [vmem:[%s922 + $0x28] sm:$0xf]
      %v4118 = vld [vmem:[%s922 + $0x30] sm:$0xff]
      %v4119 = vld [vmem:[%s922 + $0x38] sm:$0xff]
      %v4120 = vld [vmem:[%s922 + $0x40] sm:$0xf]
      %v4121 = vld [vmem:[%s922 + $0x48] sm:$0xff]
      %v4122 = vld [vmem:[%s922 + $0x50] sm:$0xff]
      %v4123 = vld [vmem:[%s922 + $0x58] sm:$0xf]
      %v4124 = vld [vmem:[%s922 + $0x60] sm:$0xff]
      %v4125 = vld [vmem:[%s922 + $0x68] sm:$0xff]
      %v4126 = vld [vmem:[%s922 + $0x70] sm:$0xf]
      %v4127 = vld [vmem:[%s922 + $0x78] sm:$0xff]
      %v4128 = vld [vmem:[%s922 + $0x80] sm:$0xff]
      %v4129 = vld [vmem:[%s922 + $0x88] sm:$0xf]
      %v4130 = vld [vmem:[%s922 + $0x90] sm:$0xff]
      %v4131 = vld [vmem:[%s922 + $0x98] sm:$0xff]
      %v4132 = vld [vmem:[%s922 + $0xa0] sm:$0xf]
      %v4133 = vld [vmem:[%s922 + $0xa8] sm:$0xff]
      %v4134 = vld [vmem:[%s922 + $0xb0] sm:$0xff]
      %v4135 = vld [vmem:[%s922 + $0xb8] sm:$0xf]
      %v4136 = vld [vmem:[%s922 + $0xc0] sm:$0xff]
      %v4137 = vld [vmem:[%s922 + $0xc8] sm:$0xff]
      %v4138 = vld [vmem:[%s922 + $0xd0] sm:$0xf]
      %v4139 = vld [vmem:[%s922 + $0xd8] sm:$0xff]
      %v4140 = vld [vmem:[%s922 + $0xe0] sm:$0xff]
      %v4141 = vld [vmem:[%s922 + $0xe8] sm:$0xf]
      %v4142 = vld [vmem:[%s922 + $0xf0] sm:$0xff]
      %v4143 = vld [vmem:[%s922 + $0xf8] sm:$0xff]
      %v4144 = vld [vmem:[%s922 + $0x100] sm:$0xf]
      %v4145 = vld [vmem:[%s922 + $0x108] sm:$0xff]
      %v4146 = vld [vmem:[%s922 + $0x110] sm:$0xff]
      %v4147 = vld [vmem:[%s922 + $0x118] sm:$0xf]
      %v4148 = vld [vmem:[%s922 + $0x120] sm:$0xff]
      %v4149 = vld [vmem:[%s922 + $0x128] sm:$0xff]
      %v4150 = vld [vmem:[%s922 + $0x130] sm:$0xf]
      %v4151 = vld [vmem:[%s922 + $0x138] sm:$0xff]
      %v4152 = vld [vmem:[%s922 + $0x140] sm:$0xff]
      %v4153 = vld [vmem:[%s922 + $0x148] sm:$0xf]
      %v4154 = vld [vmem:[%s922 + $0x150] sm:$0xff]
      %v4155 = vld [vmem:[%s922 + $0x158] sm:$0xff]
      %v4156 = vld [vmem:[%s922 + $0x160] sm:$0xf]
      %v4157 = vld [vmem:[%s922 + $0x168] sm:$0xff]
      %v4158 = vld [vmem:[%s922 + $0x170] sm:$0xff]
      %v4159 = vld [vmem:[%s922 + $0x178] sm:$0xf]
      %v4160 = vmax.f32 %v4064, %v4112
      %v4161 = vmax.f32 %v4065, %v4113
      %v4162 = vmax.f32 %v4066, %v4114
      %v4163 = vmax.f32 %v4067, %v4115
      %v4164 = vmax.f32 %v4068, %v4116
      %v4165 = vmax.f32 %v4069, %v4117
      %v4166 = vmax.f32 %v4070, %v4118
      %v4167 = vmax.f32 %v4071, %v4119
      %v4168 = vmax.f32 %v4072, %v4120
      %v4169 = vmax.f32 %v4073, %v4121
      %v4170 = vmax.f32 %v4074, %v4122
      %v4171 = vmax.f32 %v4075, %v4123
      %v4172 = vmax.f32 %v4076, %v4124
      %v4173 = vmax.f32 %v4077, %v4125
      %v4174 = vmax.f32 %v4078, %v4126
      %v4175 = vmax.f32 %v4079, %v4127
      %v4176 = vmax.f32 %v4080, %v4128
      %v4177 = vmax.f32 %v4081, %v4129
      %v4178 = vmax.f32 %v4082, %v4130
      %v4179 = vmax.f32 %v4083, %v4131
      %v4180 = vmax.f32 %v4084, %v4132
      %v4181 = vmax.f32 %v4085, %v4133
      %v4182 = vmax.f32 %v4086, %v4134
      %v4183 = vmax.f32 %v4087, %v4135
      %v4184 = vmax.f32 %v4088, %v4136
      %v4185 = vmax.f32 %v4089, %v4137
      %v4186 = vmax.f32 %v4090, %v4138
      %v4187 = vmax.f32 %v4091, %v4139
      %v4188 = vmax.f32 %v4092, %v4140
      %v4189 = vmax.f32 %v4093, %v4141
      %v4190 = vmax.f32 %v4094, %v4142
      %v4191 = vmax.f32 %v4095, %v4143
      %v4192 = vmax.f32 %v4096, %v4144
      %v4193 = vmax.f32 %v4097, %v4145
      %v4194 = vmax.f32 %v4098, %v4146
      %v4195 = vmax.f32 %v4099, %v4147
      %v4196 = vmax.f32 %v4100, %v4148
      %v4197 = vmax.f32 %v4101, %v4149
      %v4198 = vmax.f32 %v4102, %v4150
      %v4199 = vmax.f32 %v4103, %v4151
      %v4200 = vmax.f32 %v4104, %v4152
      %v4201 = vmax.f32 %v4105, %v4153
      %v4202 = vmax.f32 %v4106, %v4154
      %v4203 = vmax.f32 %v4107, %v4155
      %v4204 = vmax.f32 %v4108, %v4156
      %v4205 = vmax.f32 %v4109, %v4157
      %v4206 = vmax.f32 %v4110, %v4158
      %v4207 = vmax.f32 %v4111, %v4159
      %v4208 = vld [vmem:[%s1019] sm:$0xff]
      %v4209 = vld [vmem:[%s1019 + $0x8] sm:$0xff]
      %v4210 = vld [vmem:[%s1019 + $0x10] sm:$0xf]
      %v4211 = vld [vmem:[%s1019 + $0x18] sm:$0xff]
      %v4212 = vld [vmem:[%s1019 + $0x20] sm:$0xff]
      %v4213 = vld [vmem:[%s1019 + $0x28] sm:$0xf]
      %v4214 = vld [vmem:[%s1019 + $0x30] sm:$0xff]
      %v4215 = vld [vmem:[%s1019 + $0x38] sm:$0xff]
      %v4216 = vld [vmem:[%s1019 + $0x40] sm:$0xf]
      %v4217 = vld [vmem:[%s1019 + $0x48] sm:$0xff]
      %v4218 = vld [vmem:[%s1019 + $0x50] sm:$0xff]
      %v4219 = vld [vmem:[%s1019 + $0x58] sm:$0xf]
      %v4220 = vld [vmem:[%s1019 + $0x60] sm:$0xff]
      %v4221 = vld [vmem:[%s1019 + $0x68] sm:$0xff]
      %v4222 = vld [vmem:[%s1019 + $0x70] sm:$0xf]
      %v4223 = vld [vmem:[%s1019 + $0x78] sm:$0xff]
      %v4224 = vld [vmem:[%s1019 + $0x80] sm:$0xff]
      %v4225 = vld [vmem:[%s1019 + $0x88] sm:$0xf]
      %v4226 = vld [vmem:[%s1019 + $0x90] sm:$0xff]
      %v4227 = vld [vmem:[%s1019 + $0x98] sm:$0xff]
      %v4228 = vld [vmem:[%s1019 + $0xa0] sm:$0xf]
      %v4229 = vld [vmem:[%s1019 + $0xa8] sm:$0xff]
      %v4230 = vld [vmem:[%s1019 + $0xb0] sm:$0xff]
      %v4231 = vld [vmem:[%s1019 + $0xb8] sm:$0xf]
      %v4232 = vld [vmem:[%s1019 + $0xc0] sm:$0xff]
      %v4233 = vld [vmem:[%s1019 + $0xc8] sm:$0xff]
      %v4234 = vld [vmem:[%s1019 + $0xd0] sm:$0xf]
      %v4235 = vld [vmem:[%s1019 + $0xd8] sm:$0xff]
      %v4236 = vld [vmem:[%s1019 + $0xe0] sm:$0xff]
      %v4237 = vld [vmem:[%s1019 + $0xe8] sm:$0xf]
      %v4238 = vld [vmem:[%s1019 + $0xf0] sm:$0xff]
      %v4239 = vld [vmem:[%s1019 + $0xf8] sm:$0xff]
      %v4240 = vld [vmem:[%s1019 + $0x100] sm:$0xf]
      %v4241 = vld [vmem:[%s1019 + $0x108] sm:$0xff]
      %v4242 = vld [vmem:[%s1019 + $0x110] sm:$0xff]
      %v4243 = vld [vmem:[%s1019 + $0x118] sm:$0xf]
      %v4244 = vld [vmem:[%s1019 + $0x120] sm:$0xff]
      %v4245 = vld [vmem:[%s1019 + $0x128] sm:$0xff]
      %v4246 = vld [vmem:[%s1019 + $0x130] sm:$0xf]
      %v4247 = vld [vmem:[%s1019 + $0x138] sm:$0xff]
      %v4248 = vld [vmem:[%s1019 + $0x140] sm:$0xff]
      %v4249 = vld [vmem:[%s1019 + $0x148] sm:$0xf]
      %v4250 = vld [vmem:[%s1019 + $0x150] sm:$0xff]
      %v4251 = vld [vmem:[%s1019 + $0x158] sm:$0xff]
      %v4252 = vld [vmem:[%s1019 + $0x160] sm:$0xf]
      %v4253 = vld [vmem:[%s1019 + $0x168] sm:$0xff]
      %v4254 = vld [vmem:[%s1019 + $0x170] sm:$0xff]
      %v4255 = vld [vmem:[%s1019 + $0x178] sm:$0xf]
      %v4256 = vmax.f32 %v4160, %v4208
      %v4257 = vmax.f32 %v4161, %v4209
      %v4258 = vmax.f32 %v4162, %v4210
      %v4259 = vmax.f32 %v4163, %v4211
      %v4260 = vmax.f32 %v4164, %v4212
      %v4261 = vmax.f32 %v4165, %v4213
      %v4262 = vmax.f32 %v4166, %v4214
      %v4263 = vmax.f32 %v4167, %v4215
      %v4264 = vmax.f32 %v4168, %v4216
      %v4265 = vmax.f32 %v4169, %v4217
      %v4266 = vmax.f32 %v4170, %v4218
      %v4267 = vmax.f32 %v4171, %v4219
      %v4268 = vmax.f32 %v4172, %v4220
      %v4269 = vmax.f32 %v4173, %v4221
      %v4270 = vmax.f32 %v4174, %v4222
      %v4271 = vmax.f32 %v4175, %v4223
      %v4272 = vmax.f32 %v4176, %v4224
      %v4273 = vmax.f32 %v4177, %v4225
      %v4274 = vmax.f32 %v4178, %v4226
      %v4275 = vmax.f32 %v4179, %v4227
      %v4276 = vmax.f32 %v4180, %v4228
      %v4277 = vmax.f32 %v4181, %v4229
      %v4278 = vmax.f32 %v4182, %v4230
      %v4279 = vmax.f32 %v4183, %v4231
      %v4280 = vmax.f32 %v4184, %v4232
      %v4281 = vmax.f32 %v4185, %v4233
      %v4282 = vmax.f32 %v4186, %v4234
      %v4283 = vmax.f32 %v4187, %v4235
      %v4284 = vmax.f32 %v4188, %v4236
      %v4285 = vmax.f32 %v4189, %v4237
      %v4286 = vmax.f32 %v4190, %v4238
      %v4287 = vmax.f32 %v4191, %v4239
      %v4288 = vmax.f32 %v4192, %v4240
      %v4289 = vmax.f32 %v4193, %v4241
      %v4290 = vmax.f32 %v4194, %v4242
      %v4291 = vmax.f32 %v4195, %v4243
      %v4292 = vmax.f32 %v4196, %v4244
      %v4293 = vmax.f32 %v4197, %v4245
      %v4294 = vmax.f32 %v4198, %v4246
      %v4295 = vmax.f32 %v4199, %v4247
      %v4296 = vmax.f32 %v4200, %v4248
      %v4297 = vmax.f32 %v4201, %v4249
      %v4298 = vmax.f32 %v4202, %v4250
      %v4299 = vmax.f32 %v4203, %v4251
      %v4300 = vmax.f32 %v4204, %v4252
      %v4301 = vmax.f32 %v4205, %v4253
      %v4302 = vmax.f32 %v4206, %v4254
      %v4303 = vmax.f32 %v4207, %v4255
      %v4352 = vrot.slane %v4256, 1
      %v4353 = vrot.slane %v4257, 1
      %v4354 = vsel %vm1164, %v4352, %v4353
      %v4355 = vrot.slane %v4258, 1
      %v4356 = vsel %vm1164, %v4353, %v4355
      %v4357 = vrot.slane %v4259, 1
      %v4358 = vrot.slane %v4260, 1
      %v4359 = vsel %vm1164, %v4357, %v4358
      %v4360 = vrot.slane %v4261, 1
      %v4361 = vsel %vm1164, %v4358, %v4360
      %v4362 = vrot.slane %v4262, 1
      %v4363 = vrot.slane %v4263, 1
      %v4364 = vsel %vm1164, %v4362, %v4363
      %v4365 = vrot.slane %v4264, 1
      %v4366 = vsel %vm1164, %v4363, %v4365
      %v4367 = vrot.slane %v4265, 1
      %v4368 = vrot.slane %v4266, 1
      %v4369 = vsel %vm1164, %v4367, %v4368
      %v4370 = vrot.slane %v4267, 1
      %v4371 = vsel %vm1164, %v4368, %v4370
      %v4372 = vrot.slane %v4268, 1
      %v4373 = vrot.slane %v4269, 1
      %v4374 = vsel %vm1164, %v4372, %v4373
      %v4375 = vrot.slane %v4270, 1
      %v4376 = vsel %vm1164, %v4373, %v4375
      %v4377 = vrot.slane %v4271, 1
      %v4378 = vrot.slane %v4272, 1
      %v4379 = vsel %vm1164, %v4377, %v4378
      %v4380 = vrot.slane %v4273, 1
      %v4381 = vsel %vm1164, %v4378, %v4380
      %v4382 = vrot.slane %v4274, 1
      %v4383 = vrot.slane %v4275, 1
      %v4384 = vsel %vm1164, %v4382, %v4383
      %v4385 = vrot.slane %v4276, 1
      %v4386 = vsel %vm1164, %v4383, %v4385
      %v4387 = vrot.slane %v4277, 1
      %v4388 = vrot.slane %v4278, 1
      %v4389 = vsel %vm1164, %v4387, %v4388
      %v4390 = vrot.slane %v4279, 1
      %v4391 = vsel %vm1164, %v4388, %v4390
      %v4392 = vrot.slane %v4280, 1
      %v4393 = vrot.slane %v4281, 1
      %v4394 = vsel %vm1164, %v4392, %v4393
      %v4395 = vrot.slane %v4282, 1
      %v4396 = vsel %vm1164, %v4393, %v4395
      %v4397 = vrot.slane %v4283, 1
      %v4398 = vrot.slane %v4284, 1
      %v4399 = vsel %vm1164, %v4397, %v4398
      %v4400 = vrot.slane %v4285, 1
      %v4401 = vsel %vm1164, %v4398, %v4400
      %v4402 = vrot.slane %v4286, 1
      %v4403 = vrot.slane %v4287, 1
      %v4404 = vsel %vm1164, %v4402, %v4403
      %v4405 = vrot.slane %v4288, 1
      %v4406 = vsel %vm1164, %v4403, %v4405
      %v4407 = vrot.slane %v4289, 1
      %v4408 = vrot.slane %v4290, 1
      %v4409 = vsel %vm1164, %v4407, %v4408
      %v4410 = vrot.slane %v4291, 1
      %v4411 = vsel %vm1164, %v4408, %v4410
      %v4412 = vrot.slane %v4292, 1
      %v4413 = vrot.slane %v4293, 1
      %v4414 = vsel %vm1164, %v4412, %v4413
      %v4415 = vrot.slane %v4294, 1
      %v4416 = vsel %vm1164, %v4413, %v4415
      %v4417 = vrot.slane %v4295, 1
      %v4418 = vrot.slane %v4296, 1
      %v4419 = vsel %vm1164, %v4417, %v4418
      %v4420 = vrot.slane %v4297, 1
      %v4421 = vsel %vm1164, %v4418, %v4420
      %v4422 = vrot.slane %v4298, 1
      %v4423 = vrot.slane %v4299, 1
      %v4424 = vsel %vm1164, %v4422, %v4423
      %v4425 = vrot.slane %v4300, 1
      %v4426 = vsel %vm1164, %v4423, %v4425
      %v4427 = vrot.slane %v4301, 1
      %v4428 = vrot.slane %v4302, 1
      %v4429 = vsel %vm1164, %v4427, %v4428
      %v4430 = vrot.slane %v4303, 1
      %v4431 = vsel %vm1164, %v4428, %v4430
      %v4464 = vmax.f32 %v4256, %v4354
      %v4465 = vmax.f32 %v4257, %v4356
      %v4466 = vmax.f32 %v4259, %v4359
      %v4467 = vmax.f32 %v4260, %v4361
      %v4468 = vmax.f32 %v4262, %v4364
      %v4469 = vmax.f32 %v4263, %v4366
      %v4470 = vmax.f32 %v4265, %v4369
      %v4471 = vmax.f32 %v4266, %v4371
      %v4472 = vmax.f32 %v4268, %v4374
      %v4473 = vmax.f32 %v4269, %v4376
      %v4474 = vmax.f32 %v4271, %v4379
      %v4475 = vmax.f32 %v4272, %v4381
      %v4476 = vmax.f32 %v4274, %v4384
      %v4477 = vmax.f32 %v4275, %v4386
      %v4478 = vmax.f32 %v4277, %v4389
      %v4479 = vmax.f32 %v4278, %v4391
      %v4480 = vmax.f32 %v4280, %v4394
      %v4481 = vmax.f32 %v4281, %v4396
      %v4482 = vmax.f32 %v4283, %v4399
      %v4483 = vmax.f32 %v4284, %v4401
      %v4484 = vmax.f32 %v4286, %v4404
      %v4485 = vmax.f32 %v4287, %v4406
      %v4486 = vmax.f32 %v4289, %v4409
      %v4487 = vmax.f32 %v4290, %v4411
      %v4488 = vmax.f32 %v4292, %v4414
      %v4489 = vmax.f32 %v4293, %v4416
      %v4490 = vmax.f32 %v4295, %v4419
      %v4491 = vmax.f32 %v4296, %v4421
      %v4492 = vmax.f32 %v4298, %v4424
      %v4493 = vmax.f32 %v4299, %v4426
      %v4494 = vmax.f32 %v4301, %v4429
      %v4495 = vmax.f32 %v4302, %v4431
      %v4496 = vrot.slane %v4256, 2
      %v4497 = vrot.slane %v4257, 2
      %v4498 = vsel %vm1309, %v4496, %v4497
      %v4499 = vrot.slane %v4258, 2
      %v4500 = vsel %vm1309, %v4497, %v4499
      %v4501 = vrot.slane %v4259, 2
      %v4502 = vrot.slane %v4260, 2
      %v4503 = vsel %vm1309, %v4501, %v4502
      %v4504 = vrot.slane %v4261, 2
      %v4505 = vsel %vm1309, %v4502, %v4504
      %v4506 = vrot.slane %v4262, 2
      %v4507 = vrot.slane %v4263, 2
      %v4508 = vsel %vm1309, %v4506, %v4507
      %v4509 = vrot.slane %v4264, 2
      %v4510 = vsel %vm1309, %v4507, %v4509
      %v4511 = vrot.slane %v4265, 2
      %v4512 = vrot.slane %v4266, 2
      %v4513 = vsel %vm1309, %v4511, %v4512
      %v4514 = vrot.slane %v4267, 2
      %v4515 = vsel %vm1309, %v4512, %v4514
      %v4516 = vrot.slane %v4268, 2
      %v4517 = vrot.slane %v4269, 2
      %v4518 = vsel %vm1309, %v4516, %v4517
      %v4519 = vrot.slane %v4270, 2
      %v4520 = vsel %vm1309, %v4517, %v4519
      %v4521 = vrot.slane %v4271, 2
      %v4522 = vrot.slane %v4272, 2
      %v4523 = vsel %vm1309, %v4521, %v4522
      %v4524 = vrot.slane %v4273, 2
      %v4525 = vsel %vm1309, %v4522, %v4524
      %v4526 = vrot.slane %v4274, 2
      %v4527 = vrot.slane %v4275, 2
      %v4528 = vsel %vm1309, %v4526, %v4527
      %v4529 = vrot.slane %v4276, 2
      %v4530 = vsel %vm1309, %v4527, %v4529
      %v4531 = vrot.slane %v4277, 2
      %v4532 = vrot.slane %v4278, 2
      %v4533 = vsel %vm1309, %v4531, %v4532
      %v4534 = vrot.slane %v4279, 2
      %v4535 = vsel %vm1309, %v4532, %v4534
      %v4536 = vrot.slane %v4280, 2
      %v4537 = vrot.slane %v4281, 2
      %v4538 = vsel %vm1309, %v4536, %v4537
      %v4539 = vrot.slane %v4282, 2
      %v4540 = vsel %vm1309, %v4537, %v4539
      %v4541 = vrot.slane %v4283, 2
      %v4542 = vrot.slane %v4284, 2
      %v4543 = vsel %vm1309, %v4541, %v4542
      %v4544 = vrot.slane %v4285, 2
      %v4545 = vsel %vm1309, %v4542, %v4544
      %v4546 = vrot.slane %v4286, 2
      %v4547 = vrot.slane %v4287, 2
      %v4548 = vsel %vm1309, %v4546, %v4547
      %v4549 = vrot.slane %v4288, 2
      %v4550 = vsel %vm1309, %v4547, %v4549
      %v4551 = vrot.slane %v4289, 2
      %v4552 = vrot.slane %v4290, 2
      %v4553 = vsel %vm1309, %v4551, %v4552
      %v4554 = vrot.slane %v4291, 2
      %v4555 = vsel %vm1309, %v4552, %v4554
      %v4556 = vrot.slane %v4292, 2
      %v4557 = vrot.slane %v4293, 2
      %v4558 = vsel %vm1309, %v4556, %v4557
      %v4559 = vrot.slane %v4294, 2
      %v4560 = vsel %vm1309, %v4557, %v4559
      %v4561 = vrot.slane %v4295, 2
      %v4562 = vrot.slane %v4296, 2
      %v4563 = vsel %vm1309, %v4561, %v4562
      %v4564 = vrot.slane %v4297, 2
      %v4565 = vsel %vm1309, %v4562, %v4564
      %v4566 = vrot.slane %v4298, 2
      %v4567 = vrot.slane %v4299, 2
      %v4568 = vsel %vm1309, %v4566, %v4567
      %v4569 = vrot.slane %v4300, 2
      %v4570 = vsel %vm1309, %v4567, %v4569
      %v4571 = vrot.slane %v4301, 2
      %v4572 = vrot.slane %v4302, 2
      %v4573 = vsel %vm1309, %v4571, %v4572
      %v4574 = vrot.slane %v4303, 2
      %v4575 = vsel %vm1309, %v4572, %v4574
      %v4608 = vmax.f32 %v4464, %v4498
      %v4609 = vmax.f32 %v4465, %v4500
      %v4610 = vmax.f32 %v4466, %v4503
      %v4611 = vmax.f32 %v4467, %v4505
      %v4612 = vmax.f32 %v4468, %v4508
      %v4613 = vmax.f32 %v4469, %v4510
      %v4614 = vmax.f32 %v4470, %v4513
      %v4615 = vmax.f32 %v4471, %v4515
      %v4616 = vmax.f32 %v4472, %v4518
      %v4617 = vmax.f32 %v4473, %v4520
      %v4618 = vmax.f32 %v4474, %v4523
      %v4619 = vmax.f32 %v4475, %v4525
      %v4620 = vmax.f32 %v4476, %v4528
      %v4621 = vmax.f32 %v4477, %v4530
      %v4622 = vmax.f32 %v4478, %v4533
      %v4623 = vmax.f32 %v4479, %v4535
      %v4624 = vmax.f32 %v4480, %v4538
      %v4625 = vmax.f32 %v4481, %v4540
      %v4626 = vmax.f32 %v4482, %v4543
      %v4627 = vmax.f32 %v4483, %v4545
      %v4628 = vmax.f32 %v4484, %v4548
      %v4629 = vmax.f32 %v4485, %v4550
      %v4630 = vmax.f32 %v4486, %v4553
      %v4631 = vmax.f32 %v4487, %v4555
      %v4632 = vmax.f32 %v4488, %v4558
      %v4633 = vmax.f32 %v4489, %v4560
      %v4634 = vmax.f32 %v4490, %v4563
      %v4635 = vmax.f32 %v4491, %v4565
      %v4636 = vmax.f32 %v4492, %v4568
      %v4637 = vmax.f32 %v4493, %v4570
      %v4638 = vmax.f32 %v4494, %v4573
      %v4639 = vmax.f32 %v4495, %v4575
      %v4640 = vrot.slane %v4256, 3
      %v4641 = vrot.slane %v4257, 3
      %v4642 = vsel %vm1454, %v4640, %v4641
      %v4643 = vrot.slane %v4258, 3
      %v4644 = vsel %vm1454, %v4641, %v4643
      %v4645 = vrot.slane %v4259, 3
      %v4646 = vrot.slane %v4260, 3
      %v4647 = vsel %vm1454, %v4645, %v4646
      %v4648 = vrot.slane %v4261, 3
      %v4649 = vsel %vm1454, %v4646, %v4648
      %v4650 = vrot.slane %v4262, 3
      %v4651 = vrot.slane %v4263, 3
      %v4652 = vsel %vm1454, %v4650, %v4651
      %v4653 = vrot.slane %v4264, 3
      %v4654 = vsel %vm1454, %v4651, %v4653
      %v4655 = vrot.slane %v4265, 3
      %v4656 = vrot.slane %v4266, 3
      %v4657 = vsel %vm1454, %v4655, %v4656
      %v4658 = vrot.slane %v4267, 3
      %v4659 = vsel %vm1454, %v4656, %v4658
      %v4660 = vrot.slane %v4268, 3
      %v4661 = vrot.slane %v4269, 3
      %v4662 = vsel %vm1454, %v4660, %v4661
      %v4663 = vrot.slane %v4270, 3
      %v4664 = vsel %vm1454, %v4661, %v4663
      %v4665 = vrot.slane %v4271, 3
      %v4666 = vrot.slane %v4272, 3
      %v4667 = vsel %vm1454, %v4665, %v4666
      %v4668 = vrot.slane %v4273, 3
      %v4669 = vsel %vm1454, %v4666, %v4668
      %v4670 = vrot.slane %v4274, 3
      %v4671 = vrot.slane %v4275, 3
      %v4672 = vsel %vm1454, %v4670, %v4671
      %v4673 = vrot.slane %v4276, 3
      %v4674 = vsel %vm1454, %v4671, %v4673
      %v4675 = vrot.slane %v4277, 3
      %v4676 = vrot.slane %v4278, 3
      %v4677 = vsel %vm1454, %v4675, %v4676
      %v4678 = vrot.slane %v4279, 3
      %v4679 = vsel %vm1454, %v4676, %v4678
      %v4680 = vrot.slane %v4280, 3
      %v4681 = vrot.slane %v4281, 3
      %v4682 = vsel %vm1454, %v4680, %v4681
      %v4683 = vrot.slane %v4282, 3
      %v4684 = vsel %vm1454, %v4681, %v4683
      %v4685 = vrot.slane %v4283, 3
      %v4686 = vrot.slane %v4284, 3
      %v4687 = vsel %vm1454, %v4685, %v4686
      %v4688 = vrot.slane %v4285, 3
      %v4689 = vsel %vm1454, %v4686, %v4688
      %v4690 = vrot.slane %v4286, 3
      %v4691 = vrot.slane %v4287, 3
      %v4692 = vsel %vm1454, %v4690, %v4691
      %v4693 = vrot.slane %v4288, 3
      %v4694 = vsel %vm1454, %v4691, %v4693
      %v4695 = vrot.slane %v4289, 3
      %v4696 = vrot.slane %v4290, 3
      %v4697 = vsel %vm1454, %v4695, %v4696
      %v4698 = vrot.slane %v4291, 3
      %v4699 = vsel %vm1454, %v4696, %v4698
      %v4700 = vrot.slane %v4292, 3
      %v4701 = vrot.slane %v4293, 3
      %v4702 = vsel %vm1454, %v4700, %v4701
      %v4703 = vrot.slane %v4294, 3
      %v4704 = vsel %vm1454, %v4701, %v4703
      %v4705 = vrot.slane %v4295, 3
      %v4706 = vrot.slane %v4296, 3
      %v4707 = vsel %vm1454, %v4705, %v4706
      %v4708 = vrot.slane %v4297, 3
      %v4709 = vsel %vm1454, %v4706, %v4708
      %v4710 = vrot.slane %v4298, 3
      %v4711 = vrot.slane %v4299, 3
      %v4712 = vsel %vm1454, %v4710, %v4711
      %v4713 = vrot.slane %v4300, 3
      %v4714 = vsel %vm1454, %v4711, %v4713
      %v4715 = vrot.slane %v4301, 3
      %v4716 = vrot.slane %v4302, 3
      %v4717 = vsel %vm1454, %v4715, %v4716
      %v4718 = vrot.slane %v4303, 3
      %v4719 = vsel %vm1454, %v4716, %v4718
      %v4752 = vmax.f32 %v4608, %v4642
      %v4753 = vmax.f32 %v4609, %v4644
      %v4754 = vmax.f32 %v4610, %v4647
      %v4755 = vmax.f32 %v4611, %v4649
      %v4756 = vmax.f32 %v4612, %v4652
      %v4757 = vmax.f32 %v4613, %v4654
      %v4758 = vmax.f32 %v4614, %v4657
      %v4759 = vmax.f32 %v4615, %v4659
      %v4760 = vmax.f32 %v4616, %v4662
      %v4761 = vmax.f32 %v4617, %v4664
      %v4762 = vmax.f32 %v4618, %v4667
      %v4763 = vmax.f32 %v4619, %v4669
      %v4764 = vmax.f32 %v4620, %v4672
      %v4765 = vmax.f32 %v4621, %v4674
      %v4766 = vmax.f32 %v4622, %v4677
      %v4767 = vmax.f32 %v4623, %v4679
      %v4768 = vmax.f32 %v4624, %v4682
      %v4769 = vmax.f32 %v4625, %v4684
      %v4770 = vmax.f32 %v4626, %v4687
      %v4771 = vmax.f32 %v4627, %v4689
      %v4772 = vmax.f32 %v4628, %v4692
      %v4773 = vmax.f32 %v4629, %v4694
      %v4774 = vmax.f32 %v4630, %v4697
      %v4775 = vmax.f32 %v4631, %v4699
      %v4776 = vmax.f32 %v4632, %v4702
      %v4777 = vmax.f32 %v4633, %v4704
      %v4778 = vmax.f32 %v4634, %v4707
      %v4779 = vmax.f32 %v4635, %v4709
      %v4780 = vmax.f32 %v4636, %v4712
      %v4781 = vmax.f32 %v4637, %v4714
      %v4782 = vmax.f32 %v4638, %v4717
      %v4783 = vmax.f32 %v4639, %v4719
      %v4784 = vrot.slane %v4256, 4
      %v4785 = vrot.slane %v4257, 4
      %v4786 = vsel %vm362, %v4784, %v4785
      %v4787 = vrot.slane %v4258, 4
      %v4788 = vsel %vm362, %v4785, %v4787
      %v4789 = vrot.slane %v4259, 4
      %v4790 = vrot.slane %v4260, 4
      %v4791 = vsel %vm362, %v4789, %v4790
      %v4792 = vrot.slane %v4261, 4
      %v4793 = vsel %vm362, %v4790, %v4792
      %v4794 = vrot.slane %v4262, 4
      %v4795 = vrot.slane %v4263, 4
      %v4796 = vsel %vm362, %v4794, %v4795
      %v4797 = vrot.slane %v4264, 4
      %v4798 = vsel %vm362, %v4795, %v4797
      %v4799 = vrot.slane %v4265, 4
      %v4800 = vrot.slane %v4266, 4
      %v4801 = vsel %vm362, %v4799, %v4800
      %v4802 = vrot.slane %v4267, 4
      %v4803 = vsel %vm362, %v4800, %v4802
      %v4804 = vrot.slane %v4268, 4
      %v4805 = vrot.slane %v4269, 4
      %v4806 = vsel %vm362, %v4804, %v4805
      %v4807 = vrot.slane %v4270, 4
      %v4808 = vsel %vm362, %v4805, %v4807
      %v4809 = vrot.slane %v4271, 4
      %v4810 = vrot.slane %v4272, 4
      %v4811 = vsel %vm362, %v4809, %v4810
      %v4812 = vrot.slane %v4273, 4
      %v4813 = vsel %vm362, %v4810, %v4812
      %v4814 = vrot.slane %v4274, 4
      %v4815 = vrot.slane %v4275, 4
      %v4816 = vsel %vm362, %v4814, %v4815
      %v4817 = vrot.slane %v4276, 4
      %v4818 = vsel %vm362, %v4815, %v4817
      %v4819 = vrot.slane %v4277, 4
      %v4820 = vrot.slane %v4278, 4
      %v4821 = vsel %vm362, %v4819, %v4820
      %v4822 = vrot.slane %v4279, 4
      %v4823 = vsel %vm362, %v4820, %v4822
      %v4824 = vrot.slane %v4280, 4
      %v4825 = vrot.slane %v4281, 4
      %v4826 = vsel %vm362, %v4824, %v4825
      %v4827 = vrot.slane %v4282, 4
      %v4828 = vsel %vm362, %v4825, %v4827
      %v4829 = vrot.slane %v4283, 4
      %v4830 = vrot.slane %v4284, 4
      %v4831 = vsel %vm362, %v4829, %v4830
      %v4832 = vrot.slane %v4285, 4
      %v4833 = vsel %vm362, %v4830, %v4832
      %v4834 = vrot.slane %v4286, 4
      %v4835 = vrot.slane %v4287, 4
      %v4836 = vsel %vm362, %v4834, %v4835
      %v4837 = vrot.slane %v4288, 4
      %v4838 = vsel %vm362, %v4835, %v4837
      %v4839 = vrot.slane %v4289, 4
      %v4840 = vrot.slane %v4290, 4
      %v4841 = vsel %vm362, %v4839, %v4840
      %v4842 = vrot.slane %v4291, 4
      %v4843 = vsel %vm362, %v4840, %v4842
      %v4844 = vrot.slane %v4292, 4
      %v4845 = vrot.slane %v4293, 4
      %v4846 = vsel %vm362, %v4844, %v4845
      %v4847 = vrot.slane %v4294, 4
      %v4848 = vsel %vm362, %v4845, %v4847
      %v4849 = vrot.slane %v4295, 4
      %v4850 = vrot.slane %v4296, 4
      %v4851 = vsel %vm362, %v4849, %v4850
      %v4852 = vrot.slane %v4297, 4
      %v4853 = vsel %vm362, %v4850, %v4852
      %v4854 = vrot.slane %v4298, 4
      %v4855 = vrot.slane %v4299, 4
      %v4856 = vsel %vm362, %v4854, %v4855
      %v4857 = vrot.slane %v4300, 4
      %v4858 = vsel %vm362, %v4855, %v4857
      %v4859 = vrot.slane %v4301, 4
      %v4860 = vrot.slane %v4302, 4
      %v4861 = vsel %vm362, %v4859, %v4860
      %v4862 = vrot.slane %v4303, 4
      %v4863 = vsel %vm362, %v4860, %v4862
      %v4896 = vmax.f32 %v4752, %v4786
      %v4897 = vmax.f32 %v4753, %v4788
      %v4898 = vmax.f32 %v4754, %v4791
      %v4899 = vmax.f32 %v4755, %v4793
      %v4900 = vmax.f32 %v4756, %v4796
      %v4901 = vmax.f32 %v4757, %v4798
      %v4902 = vmax.f32 %v4758, %v4801
      %v4903 = vmax.f32 %v4759, %v4803
      %v4904 = vmax.f32 %v4760, %v4806
      %v4905 = vmax.f32 %v4761, %v4808
      %v4906 = vmax.f32 %v4762, %v4811
      %v4907 = vmax.f32 %v4763, %v4813
      %v4908 = vmax.f32 %v4764, %v4816
      %v4909 = vmax.f32 %v4765, %v4818
      %v4910 = vmax.f32 %v4766, %v4821
      %v4911 = vmax.f32 %v4767, %v4823
      %v4912 = vmax.f32 %v4768, %v4826
      %v4913 = vmax.f32 %v4769, %v4828
      %v4914 = vmax.f32 %v4770, %v4831
      %v4915 = vmax.f32 %v4771, %v4833
      %v4916 = vmax.f32 %v4772, %v4836
      %v4917 = vmax.f32 %v4773, %v4838
      %v4918 = vmax.f32 %v4774, %v4841
      %v4919 = vmax.f32 %v4775, %v4843
      %v4920 = vmax.f32 %v4776, %v4846
      %v4921 = vmax.f32 %v4777, %v4848
      %v4922 = vmax.f32 %v4778, %v4851
      %v4923 = vmax.f32 %v4779, %v4853
      %v4924 = vmax.f32 %v4780, %v4856
      %v4925 = vmax.f32 %v4781, %v4858
      %v4926 = vmax.f32 %v4782, %v4861
      %v4927 = vmax.f32 %v4783, %v4863
      %s4928 = scalar_lea.vmem %s3, 6
      %v4929 = vld [vmem:[%s4928] sm:$0x3]
      %v4931 = vsel %vm592, %v4896, 0
      %v4934 = vsel %vm592, %v4897, 0
      %v4937 = vsel %vm592, %v4898, 0
      %v4940 = vsel %vm592, %v4899, 0
      %v4943 = vsel %vm592, %v4900, 0
      %v4946 = vsel %vm592, %v4901, 0
      %v4949 = vsel %vm592, %v4902, 0
      %v4952 = vsel %vm592, %v4903, 0
      %v4955 = vsel %vm592, %v4904, 0
      %v4958 = vsel %vm592, %v4905, 0
      %v4961 = vsel %vm592, %v4906, 0
      %v4964 = vsel %vm592, %v4907, 0
      %v4967 = vsel %vm592, %v4908, 0
      %v4970 = vsel %vm592, %v4909, 0
      %v4973 = vsel %vm592, %v4910, 0
      %v4976 = vsel %vm592, %v4911, 0
      %v4979 = vsel %vm592, %v4912, 0
      %v4982 = vsel %vm592, %v4913, 0
      %v4985 = vsel %vm592, %v4914, 0
      %v4988 = vsel %vm592, %v4915, 0
      %v4991 = vsel %vm592, %v4916, 0
      %v4994 = vsel %vm592, %v4917, 0
      %v4997 = vsel %vm592, %v4918, 0
      %v5000 = vsel %vm592, %v4919, 0
      %v5003 = vsel %vm592, %v4920, 0
      %v5006 = vsel %vm592, %v4921, 0
      %v5009 = vsel %vm592, %v4922, 0
      %v5012 = vsel %vm592, %v4923, 0
      %v5015 = vsel %vm592, %v4924, 0
      %v5018 = vsel %vm592, %v4925, 0
      %v5021 = vsel %vm592, %v4926, 0
      %v5024 = vsel %vm592, %v4927, 0
      %v5027 = vsel %vm1841, %v4929, 0
      %5029 = vmatprep.subr.mxu0 0.0
      %5030 = vmatpush1.msra.mxu0 0.0
      %5031 = vmatprep.subr.mxu0 0.0
      %5032 = vmatpush1.msra.mxu0 0.0
      %5033 = vmatprep.subr.mxu0 0.0
      %5034 = vmatpush1.msra.mxu0 0.0
      %5035 = vmatprep.subr.mxu0 0.0
      %5036 = vmatpush1.msra.mxu0 0.0
      %5037 = vmatprep.subr.mxu0 0.0
      %5038 = vmatpush1.msra.mxu0 0.0
      %5039 = vmatprep.subr.mxu0 0.0
      %5040 = vmatpush1.msra.mxu0 0.0
      %5041 = vmatprep.subr.mxu0 0.0
      %5042 = vmatpush1.msra.mxu0 0.0
      %5043 = vmatprep.subr.mxu0 0.0
      %5044 = vmatpush1.msra.mxu0 0.0
      %5045 = vmatprep.subr.mxu0 0.0
      %5046 = vmatpush1.msra.mxu0 0.0
      %5047 = vmatprep.subr.mxu0 0.0
      %5048 = vmatpush1.msra.mxu0 0.0
      %5049 = vmatprep.subr.mxu0 0.0
      %5050 = vmatpush1.msra.mxu0 0.0
      %5051 = vmatprep.subr.mxu0 0.0
      %5052 = vmatpush1.msra.mxu0 0.0
      %5053 = vmatprep.subr.mxu0 0.0
      %5054 = vmatpush1.msra.mxu0 0.0
      %5055 = vmatprep.subr.mxu0 0.0
      %5056 = vmatpush1.msra.mxu0 0.0
      %5057 = vmatprep.subr.mxu0 0.0
      %5058 = vmatpush1.msra.mxu0 0.0
      %5059 = vmatprep.subr.mxu0 0.0
      %5060 = vmatpush1.msra.mxu0 %v5027
      %5061 = vmatprep.subr.mxu0 0.0
      %5062 = vmatpush2.msra.mxu0 0.0
      %5063 = vmatprep.subr.mxu0 0.0
      %5064 = vmatpush2.msra.mxu0 0.0
      %5065 = vmatprep.subr.mxu0 0.0
      %5066 = vmatpush2.msra.mxu0 0.0
      %5067 = vmatprep.subr.mxu0 0.0
      %5068 = vmatpush2.msra.mxu0 0.0
      %5069 = vmatprep.subr.mxu0 0.0
      %5070 = vmatpush2.msra.mxu0 0.0
      %5071 = vmatprep.subr.mxu0 0.0
      %5072 = vmatpush2.msra.mxu0 0.0
      %5073 = vmatprep.subr.mxu0 0.0
      %5074 = vmatpush2.msra.mxu0 0.0
      %5075 = vmatprep.subr.mxu0 0.0
      %5076 = vmatpush2.msra.mxu0 0.0
      %5077 = vmatprep.subr.mxu0 0.0
      %5078 = vmatpush2.msra.mxu0 0.0
      %5079 = vmatprep.subr.mxu0 0.0
      %5080 = vmatpush2.msra.mxu0 0.0
      %5081 = vmatprep.subr.mxu0 0.0
      %5082 = vmatpush2.msra.mxu0 0.0
      %5083 = vmatprep.subr.mxu0 0.0
      %5084 = vmatpush2.msra.mxu0 0.0
      %5085 = vmatprep.subr.mxu0 0.0
      %5086 = vmatpush2.msra.mxu0 0.0
      %5087 = vmatprep.subr.mxu0 0.0
      %5088 = vmatpush2.msra.mxu0 0.0
      %5089 = vmatprep.subr.mxu0 0.0
      %5090 = vmatpush2.msra.mxu0 0.0
      %5091 = vmatprep.subr.mxu0 0.0
      %5092 = vmatpush2.msra.mxu0 0.0
      %5093 = vmatprep.mubr.f32.mxu0 0.0
      %5094 = vmatmul.mubr.f32.gmra.mxu0 %v4931
      %v5095 = vpop.f32.mrf.mxu0
      %v5096 = vadd.f32 0.0, %v5095
      %v5097 = vpop.f32.mrf.mxu0
      %5098 = vmatprep.mubr.f32.mxu0 0.0
      %5099 = vmatmul.mubr.f32.gmra.mxu0 %v4934
      %v5100 = vpop.f32.mrf.mxu0
      %v5101 = vadd.f32 0.0, %v5100
      %v5102 = vpop.f32.mrf.mxu0
      %5103 = vmatprep.mubr.f32.mxu0 0.0
      %5104 = vmatmul.mubr.f32.gmra.mxu0 %v4937
      %v5105 = vpop.f32.mrf.mxu0
      %v5106 = vadd.f32 0.0, %v5105
      %v5107 = vpop.f32.mrf.mxu0
      %5108 = vmatprep.mubr.f32.mxu0 0.0
      %5109 = vmatmul.mubr.f32.gmra.mxu0 %v4940
      %v5110 = vpop.f32.mrf.mxu0
      %v5111 = vadd.f32 0.0, %v5110
      %v5112 = vpop.f32.mrf.mxu0
      %5113 = vmatprep.mubr.f32.mxu0 0.0
      %5114 = vmatmul.mubr.f32.gmra.mxu0 %v4943
      %v5115 = vpop.f32.mrf.mxu0
      %v5116 = vadd.f32 0.0, %v5115
      %v5117 = vpop.f32.mrf.mxu0
      %5118 = vmatprep.mubr.f32.mxu0 0.0
      %5119 = vmatmul.mubr.f32.gmra.mxu0 %v4946
      %v5120 = vpop.f32.mrf.mxu0
      %v5121 = vadd.f32 0.0, %v5120
      %v5122 = vpop.f32.mrf.mxu0
      %5123 = vmatprep.mubr.f32.mxu0 0.0
      %5124 = vmatmul.mubr.f32.gmra.mxu0 %v4949
      %v5125 = vpop.f32.mrf.mxu0
      %v5126 = vadd.f32 0.0, %v5125
      %v5127 = vpop.f32.mrf.mxu0
      %5128 = vmatprep.mubr.f32.mxu0 0.0
      %5129 = vmatmul.mubr.f32.gmra.mxu0 %v4952
      %v5130 = vpop.f32.mrf.mxu0
      %v5131 = vadd.f32 0.0, %v5130
      %v5132 = vpop.f32.mrf.mxu0
      %5133 = vmatprep.mubr.f32.mxu0 0.0
      %5134 = vmatmul.mubr.f32.gmra.mxu0 %v4955
      %v5135 = vpop.f32.mrf.mxu0
      %v5136 = vadd.f32 0.0, %v5135
      %v5137 = vpop.f32.mrf.mxu0
      %5138 = vmatprep.mubr.f32.mxu0 0.0
      %5139 = vmatmul.mubr.f32.gmra.mxu0 %v4958
      %v5140 = vpop.f32.mrf.mxu0
      %v5141 = vadd.f32 0.0, %v5140
      %v5142 = vpop.f32.mrf.mxu0
      %5143 = vmatprep.mubr.f32.mxu0 0.0
      %5144 = vmatmul.mubr.f32.gmra.mxu0 %v4961
      %v5145 = vpop.f32.mrf.mxu0
      %v5146 = vadd.f32 0.0, %v5145
      %v5147 = vpop.f32.mrf.mxu0
      %5148 = vmatprep.mubr.f32.mxu0 0.0
      %5149 = vmatmul.mubr.f32.gmra.mxu0 %v4964
      %v5150 = vpop.f32.mrf.mxu0
      %v5151 = vadd.f32 0.0, %v5150
      %v5152 = vpop.f32.mrf.mxu0
      %5153 = vmatprep.mubr.f32.mxu0 0.0
      %5154 = vmatmul.mubr.f32.gmra.mxu0 %v4967
      %v5155 = vpop.f32.mrf.mxu0
      %v5156 = vadd.f32 0.0, %v5155
      %v5157 = vpop.f32.mrf.mxu0
      %5158 = vmatprep.mubr.f32.mxu0 0.0
      %5159 = vmatmul.mubr.f32.gmra.mxu0 %v4970
      %v5160 = vpop.f32.mrf.mxu0
      %v5161 = vadd.f32 0.0, %v5160
      %v5162 = vpop.f32.mrf.mxu0
      %5163 = vmatprep.mubr.f32.mxu0 0.0
      %5164 = vmatmul.mubr.f32.gmra.mxu0 %v4973
      %v5165 = vpop.f32.mrf.mxu0
      %v5166 = vadd.f32 0.0, %v5165
      %v5167 = vpop.f32.mrf.mxu0
      %5168 = vmatprep.mubr.f32.mxu0 0.0
      %5169 = vmatmul.mubr.f32.gmra.mxu0 %v4976
      %v5170 = vpop.f32.mrf.mxu0
      %v5171 = vadd.f32 0.0, %v5170
      %v5172 = vpop.f32.mrf.mxu0
      %5173 = vmatprep.mubr.f32.mxu0 0.0
      %5174 = vmatmul.mubr.f32.gmra.mxu0 %v4979
      %v5175 = vpop.f32.mrf.mxu0
      %v5176 = vadd.f32 0.0, %v5175
      %v5177 = vpop.f32.mrf.mxu0
      %5178 = vmatprep.mubr.f32.mxu0 0.0
      %5179 = vmatmul.mubr.f32.gmra.mxu0 %v4982
      %v5180 = vpop.f32.mrf.mxu0
      %v5181 = vadd.f32 0.0, %v5180
      %v5182 = vpop.f32.mrf.mxu0
      %5183 = vmatprep.mubr.f32.mxu0 0.0
      %5184 = vmatmul.mubr.f32.gmra.mxu0 %v4985
      %v5185 = vpop.f32.mrf.mxu0
      %v5186 = vadd.f32 0.0, %v5185
      %v5187 = vpop.f32.mrf.mxu0
      %5188 = vmatprep.mubr.f32.mxu0 0.0
      %5189 = vmatmul.mubr.f32.gmra.mxu0 %v4988
      %v5190 = vpop.f32.mrf.mxu0
      %v5191 = vadd.f32 0.0, %v5190
      %v5192 = vpop.f32.mrf.mxu0
      %5193 = vmatprep.mubr.f32.mxu0 0.0
      %5194 = vmatmul.mubr.f32.gmra.mxu0 %v4991
      %v5195 = vpop.f32.mrf.mxu0
      %v5196 = vadd.f32 0.0, %v5195
      %v5197 = vpop.f32.mrf.mxu0
      %5198 = vmatprep.mubr.f32.mxu0 0.0
      %5199 = vmatmul.mubr.f32.gmra.mxu0 %v4994
      %v5200 = vpop.f32.mrf.mxu0
      %v5201 = vadd.f32 0.0, %v5200
      %v5202 = vpop.f32.mrf.mxu0
      %5203 = vmatprep.mubr.f32.mxu0 0.0
      %5204 = vmatmul.mubr.f32.gmra.mxu0 %v4997
      %v5205 = vpop.f32.mrf.mxu0
      %v5206 = vadd.f32 0.0, %v5205
      %v5207 = vpop.f32.mrf.mxu0
      %5208 = vmatprep.mubr.f32.mxu0 0.0
      %5209 = vmatmul.mubr.f32.gmra.mxu0 %v5000
      %v5210 = vpop.f32.mrf.mxu0
      %v5211 = vadd.f32 0.0, %v5210
      %v5212 = vpop.f32.mrf.mxu0
      %5213 = vmatprep.mubr.f32.mxu0 0.0
      %5214 = vmatmul.mubr.f32.gmra.mxu0 %v5003
      %v5215 = vpop.f32.mrf.mxu0
      %v5216 = vadd.f32 0.0, %v5215
      %v5217 = vpop.f32.mrf.mxu0
      %5218 = vmatprep.mubr.f32.mxu0 0.0
      %5219 = vmatmul.mubr.f32.gmra.mxu0 %v5006
      %v5220 = vpop.f32.mrf.mxu0
      %v5221 = vadd.f32 0.0, %v5220
      %v5222 = vpop.f32.mrf.mxu0
      %5223 = vmatprep.mubr.f32.mxu0 0.0
      %5224 = vmatmul.mubr.f32.gmra.mxu0 %v5009
      %v5225 = vpop.f32.mrf.mxu0
      %v5226 = vadd.f32 0.0, %v5225
      %v5227 = vpop.f32.mrf.mxu0
      %5228 = vmatprep.mubr.f32.mxu0 0.0
      %5229 = vmatmul.mubr.f32.gmra.mxu0 %v5012
      %v5230 = vpop.f32.mrf.mxu0
      %v5231 = vadd.f32 0.0, %v5230
      %v5232 = vpop.f32.mrf.mxu0
      %5233 = vmatprep.mubr.f32.mxu0 0.0
      %5234 = vmatmul.mubr.f32.gmra.mxu0 %v5015
      %v5235 = vpop.f32.mrf.mxu0
      %v5236 = vadd.f32 0.0, %v5235
      %v5237 = vpop.f32.mrf.mxu0
      %5238 = vmatprep.mubr.f32.mxu0 0.0
      %5239 = vmatmul.mubr.f32.gmra.mxu0 %v5018
      %v5240 = vpop.f32.mrf.mxu0
      %v5241 = vadd.f32 0.0, %v5240
      %v5242 = vpop.f32.mrf.mxu0
      %5243 = vmatprep.mubr.f32.mxu0 0.0
      %5244 = vmatmul.mubr.f32.gmra.mxu0 %v5021
      %v5245 = vpop.f32.mrf.mxu0
      %v5246 = vadd.f32 0.0, %v5245
      %v5247 = vpop.f32.mrf.mxu0
      %5248 = vmatprep.mubr.f32.mxu0 0.0
      %5249 = vmatmul.mubr.f32.gmra.mxu0 %v5024
      %v5250 = vpop.f32.mrf.mxu0
      %v5251 = vadd.f32 0.0, %v5250
      %v5252 = vpop.f32.mrf.mxu0
      %5253 = vdwg.mxu0
      %v5254 = vadd.f32 %v3808, %v5096
      %v5255 = vadd.f32 %v3809, %v5101
      %v5256 = vadd.f32 %v3810, %v5106
      %v5257 = vadd.f32 %v3811, %v5111
      %v5258 = vadd.f32 %v3812, %v5116
      %v5259 = vadd.f32 %v3813, %v5121
      %v5260 = vadd.f32 %v3814, %v5126
      %v5261 = vadd.f32 %v3815, %v5131
      %v5262 = vadd.f32 %v3816, %v5136
      %v5263 = vadd.f32 %v3817, %v5141
      %v5264 = vadd.f32 %v3818, %v5146
      %v5265 = vadd.f32 %v3819, %v5151
      %v5266 = vadd.f32 %v3820, %v5156
      %v5267 = vadd.f32 %v3821, %v5161
      %v5268 = vadd.f32 %v3822, %v5166
      %v5269 = vadd.f32 %v3823, %v5171
      %v5270 = vadd.f32 %v3824, %v5176
      %v5271 = vadd.f32 %v3825, %v5181
      %v5272 = vadd.f32 %v3826, %v5186
      %v5273 = vadd.f32 %v3827, %v5191
      %v5274 = vadd.f32 %v3828, %v5196
      %v5275 = vadd.f32 %v3829, %v5201
      %v5276 = vadd.f32 %v3830, %v5206
      %v5277 = vadd.f32 %v3831, %v5211
      %v5278 = vadd.f32 %v3832, %v5216
      %v5279 = vadd.f32 %v3833, %v5221
      %v5280 = vadd.f32 %v3834, %v5226
      %v5281 = vadd.f32 %v3835, %v5231
      %v5282 = vadd.f32 %v3836, %v5236
      %v5283 = vadd.f32 %v3837, %v5241
      %v5284 = vadd.f32 %v3838, %v5246
      %v5285 = vadd.f32 %v3839, %v5251
      %v5286 = vld [vmem:[%s4] sm:$0x1]
      %v5288 = vlaneseq
      %v5289 = vshrl.u32 %v5288, 7
      %v5290 = vsub.s32 0, %v5289
      %v5291 = vrot.slane %v5286, %v5290
      %v5293 = vadd.f32 %v5254, %v5291
      %v5294 = vadd.f32 %v5255, %v5291
      %v5295 = vadd.f32 %v5256, %v5291
      %v5296 = vadd.f32 %v5257, %v5291
      %v5297 = vadd.f32 %v5258, %v5291
      %v5298 = vadd.f32 %v5259, %v5291
      %v5299 = vadd.f32 %v5260, %v5291
      %v5300 = vadd.f32 %v5261, %v5291
      %v5301 = vadd.f32 %v5262, %v5291
      %v5302 = vadd.f32 %v5263, %v5291
      %v5303 = vadd.f32 %v5264, %v5291
      %v5304 = vadd.f32 %v5265, %v5291
      %v5305 = vadd.f32 %v5266, %v5291
      %v5306 = vadd.f32 %v5267, %v5291
      %v5307 = vadd.f32 %v5268, %v5291
      %v5308 = vadd.f32 %v5269, %v5291
      %v5309 = vadd.f32 %v5270, %v5291
      %v5310 = vadd.f32 %v5271, %v5291
      %v5311 = vadd.f32 %v5272, %v5291
      %v5312 = vadd.f32 %v5273, %v5291
      %v5313 = vadd.f32 %v5274, %v5291
      %v5314 = vadd.f32 %v5275, %v5291
      %v5315 = vadd.f32 %v5276, %v5291
      %v5316 = vadd.f32 %v5277, %v5291
      %v5317 = vadd.f32 %v5278, %v5291
      %v5318 = vadd.f32 %v5279, %v5291
      %v5319 = vadd.f32 %v5280, %v5291
      %v5320 = vadd.f32 %v5281, %v5291
      %v5321 = vadd.f32 %v5282, %v5291
      %v5322 = vadd.f32 %v5283, %v5291
      %v5323 = vadd.f32 %v5284, %v5291
      %v5324 = vadd.f32 %v5285, %v5291
      %vm5325 = vcmask 64512
      %5326 = vst.msk [vmem:[%s224] sm:$0xff] %vm5325, %v5293
      %5327 = vst.msk [vmem:[%s224 + $0x8] sm:$0xff] %vm5325, %v5294
      %5328 = vst.msk [vmem:[%s224 + $0x10] sm:$0xff] %vm5325, %v5295
      %5329 = vst.msk [vmem:[%s224 + $0x18] sm:$0xff] %vm5325, %v5296
      %5330 = vst.msk [vmem:[%s224 + $0x20] sm:$0xff] %vm5325, %v5297
      %5331 = vst.msk [vmem:[%s224 + $0x28] sm:$0xff] %vm5325, %v5298
      %5332 = vst.msk [vmem:[%s224 + $0x30] sm:$0xff] %vm5325, %v5299
      %5333 = vst.msk [vmem:[%s224 + $0x38] sm:$0xff] %vm5325, %v5300
      %5334 = vst.msk [vmem:[%s224 + $0x40] sm:$0xff] %vm5325, %v5301
      %5335 = vst.msk [vmem:[%s224 + $0x48] sm:$0xff] %vm5325, %v5302
      %5336 = vst.msk [vmem:[%s224 + $0x50] sm:$0xff] %vm5325, %v5303
      %5337 = vst.msk [vmem:[%s224 + $0x58] sm:$0xff] %vm5325, %v5304
      %5338 = vst.msk [vmem:[%s224 + $0x60] sm:$0xff] %vm5325, %v5305
      %5339 = vst.msk [vmem:[%s224 + $0x68] sm:$0xff] %vm5325, %v5306
      %5340 = vst.msk [vmem:[%s224 + $0x70] sm:$0xff] %vm5325, %v5307
      %5341 = vst.msk [vmem:[%s224 + $0x78] sm:$0xff] %vm5325, %v5308
      %5342 = vst.msk [vmem:[%s224 + $0x80] sm:$0xff] %vm5325, %v5309
      %5343 = vst.msk [vmem:[%s224 + $0x88] sm:$0xff] %vm5325, %v5310
      %5344 = vst.msk [vmem:[%s224 + $0x90] sm:$0xff] %vm5325, %v5311
      %5345 = vst.msk [vmem:[%s224 + $0x98] sm:$0xff] %vm5325, %v5312
      %5346 = vst.msk [vmem:[%s224 + $0xa0] sm:$0xff] %vm5325, %v5313
      %5347 = vst.msk [vmem:[%s224 + $0xa8] sm:$0xff] %vm5325, %v5314
      %5348 = vst.msk [vmem:[%s224 + $0xb0] sm:$0xff] %vm5325, %v5315
      %5349 = vst.msk [vmem:[%s224 + $0xb8] sm:$0xff] %vm5325, %v5316
      %5350 = vst.msk [vmem:[%s224 + $0xc0] sm:$0xff] %vm5325, %v5317
      %5351 = vst.msk [vmem:[%s224 + $0xc8] sm:$0xff] %vm5325, %v5318
      %5352 = vst.msk [vmem:[%s224 + $0xd0] sm:$0xff] %vm5325, %v5319
      %5353 = vst.msk [vmem:[%s224 + $0xd8] sm:$0xff] %vm5325, %v5320
      %5354 = vst.msk [vmem:[%s224 + $0xe0] sm:$0xff] %vm5325, %v5321
      %5355 = vst.msk [vmem:[%s224 + $0xe8] sm:$0xff] %vm5325, %v5322
      %5356 = vst.msk [vmem:[%s224 + $0xf0] sm:$0xff] %vm5325, %v5323
      %5357 = vst.msk [vmem:[%s224 + $0xf8] sm:$0xff] %vm5325, %v5324
      %p5358 = scmp.lt.s32.totalorder %s16, 1
      %s5359 = scalar_select %p5358, %s16, 1
      %s5360 = smul.addr %s5359, 32
      %s5361 = smul.addr %s5360, 8
      %s5362 = scalar_lea.vmem %s5, %s5361
      // Predicated region
      $region41: #{spp_forward.1} parent=39 // pred_check
        %p5363 = pneg %p144
      $region42: #{spp_forward.1} parent=39 // pred_check_branch
        %5365 = sbr.rel (%p5363) target = $region44
      $region43: #{spp_forward.1} parent=39 // pred_region
        _
      $region44: #{spp_forward.1} parent=39 // pred_fallthru
        _
    $region40: #{spp_forward.1} parent=5 // pred_fallthru
      _
    %p5366 = scmp.le.s32.totalorder 2, %s11
    // Predicated region
    $region45: #{spp_forward.1} parent=5 // pred_check
      %p5367 = pneg %p5366
    $region46: #{spp_forward.1} parent=5 // pred_check_branch
      %5369 = sbr.rel (%p5367) target = $region48
    $region47: #{spp_forward.1} parent=5 // pred_region
      %s5370 = ssub.s32 %s11, 2
      // Predicated region
      $region49: #{spp_forward.1} parent=47 // pred_check
        %p5371 = pneg %p150
      $region50: #{spp_forward.1} parent=47 // pred_check_branch
        %5373 = sbr.rel (%p5371) target = $region52
      $region51: #{spp_forward.1} parent=47 // pred_region
        %p5374 = scmp.lt.s32.totalorder %s17, 1
        %s5375 = scalar_select %p5374, %s17, 1
        %s5376 = smul.addr %s5375, 32
        %s5377 = smul.addr %s5376, 8
        %s5378 = scalar_lea.vmem %s5, %s5377
      $region52: #{spp_forward.1} parent=47 // pred_fallthru
        _
    $region48: #{spp_forward.1} parent=5 // pred_fallthru
      _
  $region6: #{spp_forward.1} parent=0 // loop_footer
    %s15 = sadd.s32 1, %s11
  $region7: #{spp_forward.1} parent=0 // loop_footer_branch
    %10 = sbr.rel target = $region3
  $region8: #{spp_forward.1} parent=0 // loop_exit
    _

</llo_original>
